<compile_context>
chip_gen: v7x
topology: tpu7x:2x2x1
jax: 0.10.0
libtpu: 0.0.40
codegen_flags: <defaults>
</compile_context>

<pallas_src>
import functools

import jax
import jax.numpy as jnp
from jax.experimental import pallas as pl
from jax.experimental.pallas import tpu as pltpu

LN_EPS = 1e-5  # nn.LayerNorm default
LANE = 128
SUBLANE = 8


def _round_up(n, m):
    return ((n + m - 1) // m) * m


def _pad_axis(a, axis, target):
    pad = target - a.shape[axis]
    if pad <= 0:
        return a
    widths = [(0, 0)] * a.ndim
    widths[axis] = (0, pad)
    return jnp.pad(a, widths)


def _layer_norm_padded(h, gamma, beta, true_dim):
    """LayerNorm over the last axis of `h` where only the first `true_dim`
    lanes hold real features and ALL padded lanes of `h` are exactly zero
    (zero weight columns / zero bias), so unmasked sums equal true-feature
    sums.  gamma/beta are zero on padded lanes, so the output stays exactly
    zero there.  All math in f32 (v5e VPU/EUP has no bf16)."""
    inv_n = 1.0 / float(true_dim)
    mean = jnp.sum(h, axis=-1, keepdims=True) * inv_n
    ex2 = jnp.sum(h * h, axis=-1, keepdims=True) * inv_n
    var = jnp.maximum(ex2 - mean * mean, 0.0)
    inv = jax.lax.rsqrt(var + LN_EPS)
    return (h - mean) * inv * gamma + beta


def mlp_kernel(x_ref,
               w1_ref, b1_ref, g1_ref, be1_ref,
               w2_ref, b2_ref, g2_ref, be2_ref,
               w3_ref, b3_ref, g3_ref, be3_ref,
               o_ref,
               *, true_dims):
    t1, t2, t3 = true_dims
    bf16 = jnp.bfloat16

    # fc1 -> LN1 -> ReLU   (bf16 MXU operands, f32 accumulation)
    x = x_ref[...]
    h = jnp.dot(x.astype(bf16), w1_ref[...],
                preferred_element_type=jnp.float32) + b1_ref[...]
    h = jnp.maximum(_layer_norm_padded(h, g1_ref[...], be1_ref[...], t1), 0.0)

    # fc2 -> LN2 -> ReLU
    h = jnp.dot(h.astype(bf16), w2_ref[...],
                preferred_element_type=jnp.float32) + b2_ref[...]
    h = jnp.maximum(_layer_norm_padded(h, g2_ref[...], be2_ref[...], t2), 0.0)

    # fc3 -> LN3, lane-dense (tb, 128) store
    h = jnp.dot(h.astype(bf16), w3_ref[...],
                preferred_element_type=jnp.float32) + b3_ref[...]
    h = _layer_norm_padded(h, g3_ref[...], be3_ref[...], t3)

    o_ref[...] = h.astype(o_ref.dtype)


def prepare_params(params):
    """Pad (lane-dense) and cast the parameters ONCE, outside the hot path.
    Weights are stored bf16 (MXU operands, half the weight DMA); bias / gamma
    / beta stay f32.  Zero padding is numerically exact: zero weight rows /
    cols contribute nothing and zero gamma/beta keep padded LN lanes at 0."""
    f32, bf16 = jnp.float32, jnp.bfloat16
    dim_input, h1 = params["w1"].shape
    h2 = params["w2"].shape[1]
    dim_out = params["w3"].shape[1]

    kp = _round_up(dim_input, 16)   # contracted dim: bf16 packing only, no 128-pad
    h1p = _round_up(h1, LANE)
    h2p = _round_up(h2, LANE)
    op = _round_up(dim_out, LANE)   # lane-dense output store

    def pad_w(w, r, c):
        return _pad_axis(_pad_axis(w.astype(f32), 0, r), 1, c).astype(bf16)

    def pad_v(v, c):
        return _pad_axis(v.astype(f32), 1, c)

    return {
        "dim_input": dim_input,
        "true_dims": (h1, h2, dim_out),
        "padded_dims": (kp, h1p, h2p, op),
        "w1": pad_w(params["w1"], kp, h1p), "b1": pad_v(params["b1"], h1p),
        "g1": pad_v(params["g1"], h1p), "be1": pad_v(params["be1"], h1p),
        "w2": pad_w(params["w2"], h1p, h2p), "b2": pad_v(params["b2"], h2p),
        "g2": pad_v(params["g2"], h2p), "be2": pad_v(params["be2"], h2p),
        "w3": pad_w(params["w3"], h2p, op), "b3": pad_v(params["b3"], op),
        "g3": pad_v(params["g3"], op), "be3": pad_v(params["be3"], op),
    }


def _pick_batch_tile(B, batch_tile):
    if batch_tile is not None:
        return max(SUBLANE, _round_up(batch_tile, SUBLANE))
    if B <= 256:
        # Tiny batch: one grid step; splitting only adds per-step overhead.
        return _round_up(max(B, 1), SUBLANE)
    # Large batch: big tiles (<=1024 rows) to amortize ~0.35us/step overhead,
    # but always an EVEN number of >=2 grid steps so both v7x TensorCores get
    # work under dimension_semantics=("parallel",).
    n_steps = max(2, -(-B // 1024))
    n_steps += n_steps % 2
    return _round_up(-(-B // n_steps), SUBLANE)


def model_mlp_forward(x, prep, *, batch_tile=None):
    """Fused forward pass.  x: (B, dim_input) float32, prep: prepare_params()
    output.  Returns (B, dim_output), last axis squeezed iff dim_output == 1
    (matching torch's squeeze(dim=-1))."""
    B, dim_input = x.shape
    assert dim_input == prep["dim_input"]
    kp, h1p, h2p, op = prep["padded_dims"]
    h1, h2, dim_out = prep["true_dims"]

    tb = _pick_batch_tile(B, batch_tile)
    bp = _round_up(B, tb)
    grid = (bp // tb,)

    # Only x is padded per call (zero rows/cols are exact, see prepare_params).
    xp = _pad_axis(_pad_axis(x.astype(jnp.float32), 1, kp), 0, bp)

    weight_names = ("w1", "b1", "g1", "be1",
                    "w2", "b2", "g2", "be2",
                    "w3", "b3", "g3", "be3")
    weights = [prep[n] for n in weight_names]

    def act_spec(feat):
        return pl.BlockSpec((tb, feat), lambda i: (i, 0))

    w_bytes = sum(int(w.size) * w.dtype.itemsize for w in weights)
    cost = pl.CostEstimate(
        flops=int(2 * bp * (kp * h1p + h1p * h2p + h2p * op)),
        transcendentals=int(3 * bp),  # one rsqrt per row per LayerNorm
        bytes_accessed=int(4 * bp * (kp + op) + w_bytes),
    )
    kernel = functools.partial(mlp_kernel, true_dims=(h1, h2, dim_out))

    def run(single_buffer_weights):
        def full_spec(shape):
            if single_buffer_weights:
                # Constant index_map across the grid: no double buffer needed.
                return pl.BlockSpec(shape, lambda i: (0,) * len(shape),
                                    pipeline_mode=pl.Buffered(1))
            return pl.BlockSpec(shape, lambda i: (0,) * len(shape))

        in_specs = [act_spec(kp)] + [full_spec(w.shape) for w in weights]
        return pl.pallas_call(
            kernel,
            out_shape=jax.ShapeDtypeStruct((bp, op), jnp.float32),
            grid_spec=pltpu.PrefetchScalarGridSpec(
                num_scalar_prefetch=0,
                grid=grid,
                in_specs=in_specs,
                out_specs=act_spec(op),
            ),
            compiler_params=pltpu.CompilerParams(
                dimension_semantics=("parallel",),
                vmem_limit_bytes=32 * 1024 * 1024),
            cost_estimate=cost,
        )(xp, *weights)

    try:
        out = run(single_buffer_weights=True)
    except Exception:
        # pipeline_mode=pl.Buffered(1) not supported by this JAX build:
        # fall back to default double-buffered weight specs.
        out = run(single_buffer_weights=False)

    out = out[:B, :dim_out]
    if dim_out == 1:  # torch .squeeze(dim=-1) only drops a size-1 last axis
        out = out[..., 0]
    return out


def init_params(key, dim_input, dim_output, hidden_sizes=(400, 300)):
    """Deterministic synthetic init (PyTorch-Linear-style uniform)."""
    h1, h2 = hidden_sizes
    ks = jax.random.split(key, 6)

    def linear(kw, kb, fan_in, fan_out):
        bound = 1.0 / jnp.sqrt(jnp.float32(fan_in))
        w = jax.random.uniform(kw, (fan_in, fan_out), jnp.float32, -bound, bound)
        b = jax.random.uniform(kb, (1, fan_out), jnp.float32, -bound, bound)
        return w, b

    w1, b1 = linear(ks[0], ks[1], dim_input, h1)
    w2, b2 = linear(ks[2], ks[3], h1, h2)
    w3, b3 = linear(ks[4], ks[5], h2, dim_output)
    ones = lambda n: jnp.ones((1, n), jnp.float32)
    zeros = lambda n: jnp.zeros((1, n), jnp.float32)
    return {"w1": w1, "b1": b1, "g1": ones(h1), "be1": zeros(h1),
            "w2": w2, "b2": b2, "g2": ones(h2), "be2": zeros(h2),
            "w3": w3, "b3": b3, "g3": ones(dim_output), "be3": zeros(dim_output)}


def reference_forward(x, p, matmul_dtype=jnp.float32):
    """Pure-JAX reference. matmul_dtype=bfloat16 mirrors the kernel's MXU
    recipe (bf16 operands, f32 accumulation, f32 elementwise)."""
    def mm(a, w):
        return jnp.dot(a.astype(matmul_dtype), w.astype(matmul_dtype),
                       preferred_element_type=jnp.float32)

    def ln(h, g, b):
        n = h.shape[-1]
        mean = jnp.sum(h, -1, keepdims=True) / n
        var = jnp.maximum(jnp.sum(h * h, -1, keepdims=True) / n - mean * mean, 0.0)
        return (h - mean) * jax.lax.rsqrt(var + LN_EPS) * g + b

    h = jnp.maximum(ln(mm(x, p["w1"]) + p["b1"], p["g1"], p["be1"]), 0.0)
    h = jnp.maximum(ln(mm(h, p["w2"]) + p["b2"], p["g2"], p["be2"]), 0.0)
    out = ln(mm(h, p["w3"]) + p["b3"], p["g3"], p["be3"])
    return out[..., 0] if out.shape[-1] == 1 else out


if __name__ == "__main__":
    key = jax.random.PRNGKey(0)
    k_x, k_p = jax.random.split(key)

    batch = 8
    dim_input = 32
    dim_output = 5
    hidden_sizes = (400, 300)  # module defaults

    x = jax.random.normal(k_x, (batch, dim_input), jnp.float32)
    params = init_params(k_p, dim_input, dim_output, hidden_sizes)
    prep = prepare_params(params)  # pad + cast once, outside the hot path

    out = model_mlp_forward(x, prep)
    out = jax.block_until_ready(out)

    # Tight check vs a reference mirroring the kernel's bf16-MXU recipe, plus
    # a loose sanity check vs the exact f32 reference (bf16 operands bound it).
    ref_mirror = reference_forward(x, params, matmul_dtype=jnp.bfloat16)
    ref_exact = reference_forward(x, params, matmul_dtype=jnp.float32)

    assert out.shape == ref_exact.shape, (out.shape, ref_exact.shape)
    err_mirror = float(jnp.max(jnp.abs(out - ref_mirror)))
    err_exact = float(jnp.max(jnp.abs(out - ref_exact)))
    assert err_mirror < 1e-2, ("mismatch vs bf16-matmul reference", err_mirror)
    assert err_exact < 2e-1, ("mismatch vs exact f32 reference", err_exact)

    print("KERNEL_OK")
</pallas_src>

<mosaic_0001>
module attributes {stable_mosaic.version = 11 : i64} {
  func.func @mlp_kernel(%arg0: i32, %arg1: memref<8x32xf32, #tpu.memory_space<vmem>>, %arg2: memref<32x512xbf16, #tpu.memory_space<vmem>>, %arg3: memref<1x512xf32, #tpu.memory_space<vmem>>, %arg4: memref<1x512xf32, #tpu.memory_space<vmem>>, %arg5: memref<1x512xf32, #tpu.memory_space<vmem>>, %arg6: memref<512x384xbf16, #tpu.memory_space<vmem>>, %arg7: memref<1x384xf32, #tpu.memory_space<vmem>>, %arg8: memref<1x384xf32, #tpu.memory_space<vmem>>, %arg9: memref<1x384xf32, #tpu.memory_space<vmem>>, %arg10: memref<384x128xbf16, #tpu.memory_space<vmem>>, %arg11: memref<1x128xf32, #tpu.memory_space<vmem>>, %arg12: memref<1x128xf32, #tpu.memory_space<vmem>>, %arg13: memref<1x128xf32, #tpu.memory_space<vmem>>, %arg14: memref<8x128xf32, #tpu.memory_space<vmem>>) attributes {dimension_semantics = [#tpu.dimension_semantics<parallel>], iteration_bounds = array<i64: 1>, scalar_prefetch = 0 : i64, scratch_operands = 0 : i64, tpu.core_type = #tpu.core_type<tc>, window_params = [{transform_indices = @transform_0, window_bounds = array<i64: 8, 32>}, {pipeline_mode = #tpu.pipeline_mode<synchronous>, transform_indices = @transform_1, window_bounds = array<i64: 32, 512>}, {pipeline_mode = #tpu.pipeline_mode<synchronous>, transform_indices = @transform_2, window_bounds = array<i64: 1, 512>}, {pipeline_mode = #tpu.pipeline_mode<synchronous>, transform_indices = @transform_3, window_bounds = array<i64: 1, 512>}, {pipeline_mode = #tpu.pipeline_mode<synchronous>, transform_indices = @transform_4, window_bounds = array<i64: 1, 512>}, {pipeline_mode = #tpu.pipeline_mode<synchronous>, transform_indices = @transform_5, window_bounds = array<i64: 512, 384>}, {pipeline_mode = #tpu.pipeline_mode<synchronous>, transform_indices = @transform_6, window_bounds = array<i64: 1, 384>}, {pipeline_mode = #tpu.pipeline_mode<synchronous>, transform_indices = @transform_7, window_bounds = array<i64: 1, 384>}, {pipeline_mode = #tpu.pipeline_mode<synchronous>, transform_indices = @transform_8, window_bounds = array<i64: 1, 384>}, {pipeline_mode = #tpu.pipeline_mode<synchronous>, transform_indices = @transform_9, window_bounds = array<i64: 384, 128>}, {pipeline_mode = #tpu.pipeline_mode<synchronous>, transform_indices = @transform_10, window_bounds = array<i64: 1, 128>}, {pipeline_mode = #tpu.pipeline_mode<synchronous>, transform_indices = @transform_11, window_bounds = array<i64: 1, 128>}, {pipeline_mode = #tpu.pipeline_mode<synchronous>, transform_indices = @transform_12, window_bounds = array<i64: 1, 128>}, {transform_indices = @transform_13, window_bounds = array<i64: 8, 128>}]} {
    %c0 = arith.constant 0 : index
    %c0_0 = arith.constant 0 : index
    %0 = vector.load %arg1[%c0, %c0_0] : memref<8x32xf32, #tpu.memory_space<vmem>>, vector<8x32xf32>
    %1 = arith.truncf %0 : vector<8x32xf32> to vector<8x32xbf16>
    %c0_1 = arith.constant 0 : index
    %c0_2 = arith.constant 0 : index
    %2 = vector.load %arg2[%c0_1, %c0_2] : memref<32x512xbf16, #tpu.memory_space<vmem>>, vector<32x512xbf16>
    %cst = arith.constant dense<0.000000e+00> : vector<8x512xf32>
    %3 = tpu.matmul %1, %2, %cst {dimension_numbers = #tpu.dot_dimension_numbers<[1], [0], [0], [1], [0, 0, 1, 1], [], []>} : vector<8x32xbf16>, vector<32x512xbf16>, vector<8x512xf32> -> vector<8x512xf32>
    %c0_3 = arith.constant 0 : index
    %c0_4 = arith.constant 0 : index
    %4 = vector.load %arg3[%c0_3, %c0_4] : memref<1x512xf32, #tpu.memory_space<vmem>>, vector<1x512xf32>
    %5 = vector.broadcast %4 : vector<1x512xf32> to vector<8x512xf32>
    %6 = arith.addf %3, %5 : vector<8x512xf32>
    %c0_5 = arith.constant 0 : index
    %c0_6 = arith.constant 0 : index
    %7 = vector.load %arg4[%c0_5, %c0_6] : memref<1x512xf32, #tpu.memory_space<vmem>>, vector<1x512xf32>
    %c0_7 = arith.constant 0 : index
    %c0_8 = arith.constant 0 : index
    %8 = vector.load %arg5[%c0_7, %c0_8] : memref<1x512xf32, #tpu.memory_space<vmem>>, vector<1x512xf32>
    %cst_9 = arith.constant dense<0.000000e+00> : vector<8xf32>
    %9 = vector.multi_reduction <add>, %6, %cst_9 [1] : vector<8x512xf32> to vector<8xf32>
    %10 = vector.shape_cast %9 : vector<8xf32> to vector<8x1xf32>
    %cst_10 = arith.constant 2.500000e-03 : f32
    %11 = vector.broadcast %cst_10 : f32 to vector<8x1xf32>
    %12 = arith.mulf %10, %11 : vector<8x1xf32>
    %13 = arith.mulf %6, %6 : vector<8x512xf32>
    %cst_11 = arith.constant dense<0.000000e+00> : vector<8xf32>
    %14 = vector.multi_reduction <add>, %13, %cst_11 [1] : vector<8x512xf32> to vector<8xf32>
    %15 = vector.shape_cast %14 : vector<8xf32> to vector<8x1xf32>
    %cst_12 = arith.constant 2.500000e-03 : f32
    %16 = vector.broadcast %cst_12 : f32 to vector<8x1xf32>
    %17 = arith.mulf %15, %16 : vector<8x1xf32>
    %18 = arith.mulf %12, %12 : vector<8x1xf32>
    %19 = arith.subf %17, %18 : vector<8x1xf32>
    %cst_13 = arith.constant 0.000000e+00 : f32
    %20 = vector.broadcast %cst_13 : f32 to vector<8x1xf32>
    %21 = arith.maximumf %19, %20 : vector<8x1xf32>
    %cst_14 = arith.constant 9.99999974E-6 : f32
    %22 = vector.broadcast %cst_14 : f32 to vector<8x1xf32>
    %23 = arith.addf %21, %22 : vector<8x1xf32>
    %24 = math.rsqrt %23 : vector<8x1xf32>
    %25 = vector.broadcast %12 : vector<8x1xf32> to vector<8x512xf32>
    %26 = arith.subf %6, %25 : vector<8x512xf32>
    %27 = vector.broadcast %24 : vector<8x1xf32> to vector<8x512xf32>
    %28 = arith.mulf %26, %27 : vector<8x512xf32>
    %29 = vector.broadcast %7 : vector<1x512xf32> to vector<8x512xf32>
    %30 = arith.mulf %28, %29 : vector<8x512xf32>
    %31 = vector.broadcast %8 : vector<1x512xf32> to vector<8x512xf32>
    %32 = arith.addf %30, %31 : vector<8x512xf32>
    %cst_15 = arith.constant 0.000000e+00 : f32
    %33 = vector.broadcast %cst_15 : f32 to vector<8x512xf32>
    %34 = arith.maximumf %32, %33 : vector<8x512xf32>
    %35 = arith.truncf %34 : vector<8x512xf32> to vector<8x512xbf16>
    %c0_16 = arith.constant 0 : index
    %c0_17 = arith.constant 0 : index
    %36 = vector.load %arg6[%c0_16, %c0_17] : memref<512x384xbf16, #tpu.memory_space<vmem>>, vector<512x384xbf16>
    %cst_18 = arith.constant dense<0.000000e+00> : vector<8x384xf32>
    %37 = tpu.matmul %35, %36, %cst_18 {dimension_numbers = #tpu.dot_dimension_numbers<[1], [0], [0], [1], [0, 0, 1, 1], [], []>} : vector<8x512xbf16>, vector<512x384xbf16>, vector<8x384xf32> -> vector<8x384xf32>
    %c0_19 = arith.constant 0 : index
    %c0_20 = arith.constant 0 : index
    %38 = vector.load %arg7[%c0_19, %c0_20] : memref<1x384xf32, #tpu.memory_space<vmem>>, vector<1x384xf32>
    %39 = vector.broadcast %38 : vector<1x384xf32> to vector<8x384xf32>
    %40 = arith.addf %37, %39 : vector<8x384xf32>
    %c0_21 = arith.constant 0 : index
    %c0_22 = arith.constant 0 : index
    %41 = vector.load %arg8[%c0_21, %c0_22] : memref<1x384xf32, #tpu.memory_space<vmem>>, vector<1x384xf32>
    %c0_23 = arith.constant 0 : index
    %c0_24 = arith.constant 0 : index
    %42 = vector.load %arg9[%c0_23, %c0_24] : memref<1x384xf32, #tpu.memory_space<vmem>>, vector<1x384xf32>
    %cst_25 = arith.constant dense<0.000000e+00> : vector<8xf32>
    %43 = vector.multi_reduction <add>, %40, %cst_25 [1] : vector<8x384xf32> to vector<8xf32>
    %44 = vector.shape_cast %43 : vector<8xf32> to vector<8x1xf32>
    %cst_26 = arith.constant 0.00333333341 : f32
    %45 = vector.broadcast %cst_26 : f32 to vector<8x1xf32>
    %46 = arith.mulf %44, %45 : vector<8x1xf32>
    %47 = arith.mulf %40, %40 : vector<8x384xf32>
    %cst_27 = arith.constant dense<0.000000e+00> : vector<8xf32>
    %48 = vector.multi_reduction <add>, %47, %cst_27 [1] : vector<8x384xf32> to vector<8xf32>
    %49 = vector.shape_cast %48 : vector<8xf32> to vector<8x1xf32>
    %cst_28 = arith.constant 0.00333333341 : f32
    %50 = vector.broadcast %cst_28 : f32 to vector<8x1xf32>
    %51 = arith.mulf %49, %50 : vector<8x1xf32>
    %52 = arith.mulf %46, %46 : vector<8x1xf32>
    %53 = arith.subf %51, %52 : vector<8x1xf32>
    %cst_29 = arith.constant 0.000000e+00 : f32
    %54 = vector.broadcast %cst_29 : f32 to vector<8x1xf32>
    %55 = arith.maximumf %53, %54 : vector<8x1xf32>
    %cst_30 = arith.constant 9.99999974E-6 : f32
    %56 = vector.broadcast %cst_30 : f32 to vector<8x1xf32>
    %57 = arith.addf %55, %56 : vector<8x1xf32>
    %58 = math.rsqrt %57 : vector<8x1xf32>
    %59 = vector.broadcast %46 : vector<8x1xf32> to vector<8x384xf32>
    %60 = arith.subf %40, %59 : vector<8x384xf32>
    %61 = vector.broadcast %58 : vector<8x1xf32> to vector<8x384xf32>
    %62 = arith.mulf %60, %61 : vector<8x384xf32>
    %63 = vector.broadcast %41 : vector<1x384xf32> to vector<8x384xf32>
    %64 = arith.mulf %62, %63 : vector<8x384xf32>
    %65 = vector.broadcast %42 : vector<1x384xf32> to vector<8x384xf32>
    %66 = arith.addf %64, %65 : vector<8x384xf32>
    %cst_31 = arith.constant 0.000000e+00 : f32
    %67 = vector.broadcast %cst_31 : f32 to vector<8x384xf32>
    %68 = arith.maximumf %66, %67 : vector<8x384xf32>
    %69 = arith.truncf %68 : vector<8x384xf32> to vector<8x384xbf16>
    %c0_32 = arith.constant 0 : index
    %c0_33 = arith.constant 0 : index
    %70 = vector.load %arg10[%c0_32, %c0_33] : memref<384x128xbf16, #tpu.memory_space<vmem>>, vector<384x128xbf16>
    %cst_34 = arith.constant dense<0.000000e+00> : vector<8x128xf32>
    %71 = tpu.matmul %69, %70, %cst_34 {dimension_numbers = #tpu.dot_dimension_numbers<[1], [0], [0], [1], [0, 0, 1, 1], [], []>} : vector<8x384xbf16>, vector<384x128xbf16>, vector<8x128xf32> -> vector<8x128xf32>
    %c0_35 = arith.constant 0 : index
    %c0_36 = arith.constant 0 : index
    %72 = vector.load %arg11[%c0_35, %c0_36] : memref<1x128xf32, #tpu.memory_space<vmem>>, vector<1x128xf32>
    %73 = vector.broadcast %72 : vector<1x128xf32> to vector<8x128xf32>
    %74 = arith.addf %71, %73 : vector<8x128xf32>
    %c0_37 = arith.constant 0 : index
    %c0_38 = arith.constant 0 : index
    %75 = vector.load %arg12[%c0_37, %c0_38] : memref<1x128xf32, #tpu.memory_space<vmem>>, vector<1x128xf32>
    %c0_39 = arith.constant 0 : index
    %c0_40 = arith.constant 0 : index
    %76 = vector.load %arg13[%c0_39, %c0_40] : memref<1x128xf32, #tpu.memory_space<vmem>>, vector<1x128xf32>
    %cst_41 = arith.constant dense<0.000000e+00> : vector<8xf32>
    %77 = vector.multi_reduction <add>, %74, %cst_41 [1] : vector<8x128xf32> to vector<8xf32>
    %78 = vector.shape_cast %77 : vector<8xf32> to vector<8x1xf32>
    %cst_42 = arith.constant 2.000000e-01 : f32
    %79 = vector.broadcast %cst_42 : f32 to vector<8x1xf32>
    %80 = arith.mulf %78, %79 : vector<8x1xf32>
    %81 = arith.mulf %74, %74 : vector<8x128xf32>
    %cst_43 = arith.constant dense<0.000000e+00> : vector<8xf32>
    %82 = vector.multi_reduction <add>, %81, %cst_43 [1] : vector<8x128xf32> to vector<8xf32>
    %83 = vector.shape_cast %82 : vector<8xf32> to vector<8x1xf32>
    %cst_44 = arith.constant 2.000000e-01 : f32
    %84 = vector.broadcast %cst_44 : f32 to vector<8x1xf32>
    %85 = arith.mulf %83, %84 : vector<8x1xf32>
    %86 = arith.mulf %80, %80 : vector<8x1xf32>
    %87 = arith.subf %85, %86 : vector<8x1xf32>
    %cst_45 = arith.constant 0.000000e+00 : f32
    %88 = vector.broadcast %cst_45 : f32 to vector<8x1xf32>
    %89 = arith.maximumf %87, %88 : vector<8x1xf32>
    %cst_46 = arith.constant 9.99999974E-6 : f32
    %90 = vector.broadcast %cst_46 : f32 to vector<8x1xf32>
    %91 = arith.addf %89, %90 : vector<8x1xf32>
    %92 = math.rsqrt %91 : vector<8x1xf32>
    %93 = vector.broadcast %80 : vector<8x1xf32> to vector<8x128xf32>
    %94 = arith.subf %74, %93 : vector<8x128xf32>
    %95 = vector.broadcast %92 : vector<8x1xf32> to vector<8x128xf32>
    %96 = arith.mulf %94, %95 : vector<8x128xf32>
    %97 = vector.broadcast %75 : vector<1x128xf32> to vector<8x128xf32>
    %98 = arith.mulf %96, %97 : vector<8x128xf32>
    %99 = vector.broadcast %76 : vector<1x128xf32> to vector<8x128xf32>
    %100 = arith.addf %98, %99 : vector<8x128xf32>
    %c0_47 = arith.constant 0 : index
    %c0_48 = arith.constant 0 : index
    %101 = vector.load %arg14[%c0_47, %c0_48] : memref<8x128xf32, #tpu.memory_space<vmem>>, vector<8x128xf32>
    tpu.vector_store %arg14[%c0_47, %c0_48], %100 {strides = array<i32>} : memref<8x128xf32, #tpu.memory_space<vmem>>, vector<8x128xf32>,
    return
  }
  func.func @transform_0(%arg0: i32) -> (i32, i32) {
    %c0_i32 = arith.constant 0 : i32
    %c0_i32_0 = arith.constant 0 : i32
    return %arg0, %c0_i32 : i32, i32
  }
  func.func @transform_1(%arg0: i32) -> (i32, i32) {
    %c0_i32 = arith.constant 0 : i32
    %c0_i32_0 = arith.constant 0 : i32
    %c0_i32_1 = arith.constant 0 : i32
    return %c0_i32, %c0_i32_0 : i32, i32
  }
  func.func @transform_2(%arg0: i32) -> (i32, i32) {
    %c0_i32 = arith.constant 0 : i32
    %c0_i32_0 = arith.constant 0 : i32
    %c0_i32_1 = arith.constant 0 : i32
    return %c0_i32, %c0_i32_0 : i32, i32
  }
  func.func @transform_3(%arg0: i32) -> (i32, i32) {
    %c0_i32 = arith.constant 0 : i32
    %c0_i32_0 = arith.constant 0 : i32
    %c0_i32_1 = arith.constant 0 : i32
    return %c0_i32, %c0_i32_0 : i32, i32
  }
  func.func @transform_4(%arg0: i32) -> (i32, i32) {
    %c0_i32 = arith.constant 0 : i32
    %c0_i32_0 = arith.constant 0 : i32
    %c0_i32_1 = arith.constant 0 : i32
    return %c0_i32, %c0_i32_0 : i32, i32
  }
  func.func @transform_5(%arg0: i32) -> (i32, i32) {
    %c0_i32 = arith.constant 0 : i32
    %c0_i32_0 = arith.constant 0 : i32
    %c0_i32_1 = arith.constant 0 : i32
    return %c0_i32, %c0_i32_0 : i32, i32
  }
  func.func @transform_6(%arg0: i32) -> (i32, i32) {
    %c0_i32 = arith.constant 0 : i32
    %c0_i32_0 = arith.constant 0 : i32
    %c0_i32_1 = arith.constant 0 : i32
    return %c0_i32, %c0_i32_0 : i32, i32
  }
  func.func @transform_7(%arg0: i32) -> (i32, i32) {
    %c0_i32 = arith.constant 0 : i32
    %c0_i32_0 = arith.constant 0 : i32
    %c0_i32_1 = arith.constant 0 : i32
    return %c0_i32, %c0_i32_0 : i32, i32
  }
  func.func @transform_8(%arg0: i32) -> (i32, i32) {
    %c0_i32 = arith.constant 0 : i32
    %c0_i32_0 = arith.constant 0 : i32
    %c0_i32_1 = arith.constant 0 : i32
    return %c0_i32, %c0_i32_0 : i32, i32
  }
  func.func @transform_9(%arg0: i32) -> (i32, i32) {
    %c0_i32 = arith.constant 0 : i32
    %c0_i32_0 = arith.constant 0 : i32
    %c0_i32_1 = arith.constant 0 : i32
    return %c0_i32, %c0_i32_0 : i32, i32
  }
  func.func @transform_10(%arg0: i32) -> (i32, i32) {
    %c0_i32 = arith.constant 0 : i32
    %c0_i32_0 = arith.constant 0 : i32
    %c0_i32_1 = arith.constant 0 : i32
    return %c0_i32, %c0_i32_0 : i32, i32
  }
  func.func @transform_11(%arg0: i32) -> (i32, i32) {
    %c0_i32 = arith.constant 0 : i32
    %c0_i32_0 = arith.constant 0 : i32
    %c0_i32_1 = arith.constant 0 : i32
    return %c0_i32, %c0_i32_0 : i32, i32
  }
  func.func @transform_12(%arg0: i32) -> (i32, i32) {
    %c0_i32 = arith.constant 0 : i32
    %c0_i32_0 = arith.constant 0 : i32
    %c0_i32_1 = arith.constant 0 : i32
    return %c0_i32, %c0_i32_0 : i32, i32
  }
  func.func @transform_13(%arg0: i32) -> (i32, i32) {
    %c0_i32 = arith.constant 0 : i32
    %c0_i32_0 = arith.constant 0 : i32
    return %arg0, %c0_i32 : i32, i32
  }
}

module attributes {stable_mosaic.version = 11 : i64} {
  func.func @mlp_kernel(%arg0: i32, %arg1: memref<8x32xf32, #tpu.memory_space<vmem>>, %arg2: memref<32x512xbf16, #tpu.memory_space<vmem>>, %arg3: memref<1x512xf32, #tpu.memory_space<vmem>>, %arg4: memref<1x512xf32, #tpu.memory_space<vmem>>, %arg5: memref<1x512xf32, #tpu.memory_space<vmem>>, %arg6: memref<512x384xbf16, #tpu.memory_space<vmem>>, %arg7: memref<1x384xf32, #tpu.memory_space<vmem>>, %arg8: memref<1x384xf32, #tpu.memory_space<vmem>>, %arg9: memref<1x384xf32, #tpu.memory_space<vmem>>, %arg10: memref<384x128xbf16, #tpu.memory_space<vmem>>, %arg11: memref<1x128xf32, #tpu.memory_space<vmem>>, %arg12: memref<1x128xf32, #tpu.memory_space<vmem>>, %arg13: memref<1x128xf32, #tpu.memory_space<vmem>>, %arg14: memref<8x128xf32, #tpu.memory_space<vmem>>) attributes {dimension_semantics = [#tpu.dimension_semantics<parallel>], iteration_bounds = array<i64: 1>, scalar_prefetch = 0 : i64, scratch_operands = 0 : i64, tpu.core_type = #tpu.core_type<tc>, window_params = [{transform_indices = @transform_0, window_bounds = array<i64: 8, 32>}, {pipeline_mode = #tpu.pipeline_mode<synchronous>, transform_indices = @transform_1, window_bounds = array<i64: 32, 512>}, {pipeline_mode = #tpu.pipeline_mode<synchronous>, transform_indices = @transform_2, window_bounds = array<i64: 1, 512>}, {pipeline_mode = #tpu.pipeline_mode<synchronous>, transform_indices = @transform_3, window_bounds = array<i64: 1, 512>}, {pipeline_mode = #tpu.pipeline_mode<synchronous>, transform_indices = @transform_4, window_bounds = array<i64: 1, 512>}, {pipeline_mode = #tpu.pipeline_mode<synchronous>, transform_indices = @transform_5, window_bounds = array<i64: 512, 384>}, {pipeline_mode = #tpu.pipeline_mode<synchronous>, transform_indices = @transform_6, window_bounds = array<i64: 1, 384>}, {pipeline_mode = #tpu.pipeline_mode<synchronous>, transform_indices = @transform_7, window_bounds = array<i64: 1, 384>}, {pipeline_mode = #tpu.pipeline_mode<synchronous>, transform_indices = @transform_8, window_bounds = array<i64: 1, 384>}, {pipeline_mode = #tpu.pipeline_mode<synchronous>, transform_indices = @transform_9, window_bounds = array<i64: 384, 128>}, {pipeline_mode = #tpu.pipeline_mode<synchronous>, transform_indices = @transform_10, window_bounds = array<i64: 1, 128>}, {pipeline_mode = #tpu.pipeline_mode<synchronous>, transform_indices = @transform_11, window_bounds = array<i64: 1, 128>}, {pipeline_mode = #tpu.pipeline_mode<synchronous>, transform_indices = @transform_12, window_bounds = array<i64: 1, 128>}, {transform_indices = @transform_13, window_bounds = array<i64: 8, 128>}]} {
    %c0 = arith.constant 0 : index
    %c0_0 = arith.constant 0 : index
    %0 = vector.load %arg1[%c0, %c0_0] : memref<8x32xf32, #tpu.memory_space<vmem>>, vector<8x32xf32>
    %1 = arith.truncf %0 : vector<8x32xf32> to vector<8x32xbf16>
    %c0_1 = arith.constant 0 : index
    %c0_2 = arith.constant 0 : index
    %2 = vector.load %arg2[%c0_1, %c0_2] : memref<32x512xbf16, #tpu.memory_space<vmem>>, vector<32x512xbf16>
    %cst = arith.constant dense<0.000000e+00> : vector<8x512xf32>
    %3 = tpu.matmul %1, %2, %cst {dimension_numbers = #tpu.dot_dimension_numbers<[1], [0], [0], [1], [0, 0, 1, 1], [], []>} : vector<8x32xbf16>, vector<32x512xbf16>, vector<8x512xf32> -> vector<8x512xf32>
    %c0_3 = arith.constant 0 : index
    %c0_4 = arith.constant 0 : index
    %4 = vector.load %arg3[%c0_3, %c0_4] : memref<1x512xf32, #tpu.memory_space<vmem>>, vector<1x512xf32>
    %5 = vector.broadcast %4 : vector<1x512xf32> to vector<8x512xf32>
    %6 = arith.addf %3, %5 : vector<8x512xf32>
    %c0_5 = arith.constant 0 : index
    %c0_6 = arith.constant 0 : index
    %7 = vector.load %arg4[%c0_5, %c0_6] : memref<1x512xf32, #tpu.memory_space<vmem>>, vector<1x512xf32>
    %c0_7 = arith.constant 0 : index
    %c0_8 = arith.constant 0 : index
    %8 = vector.load %arg5[%c0_7, %c0_8] : memref<1x512xf32, #tpu.memory_space<vmem>>, vector<1x512xf32>
    %cst_9 = arith.constant dense<0.000000e+00> : vector<8xf32>
    %9 = vector.multi_reduction <add>, %6, %cst_9 [1] : vector<8x512xf32> to vector<8xf32>
    %10 = vector.shape_cast %9 : vector<8xf32> to vector<8x1xf32>
    %cst_10 = arith.constant 2.500000e-03 : f32
    %11 = vector.broadcast %cst_10 : f32 to vector<8x1xf32>
    %12 = arith.mulf %10, %11 : vector<8x1xf32>
    %13 = arith.mulf %6, %6 : vector<8x512xf32>
    %cst_11 = arith.constant dense<0.000000e+00> : vector<8xf32>
    %14 = vector.multi_reduction <add>, %13, %cst_11 [1] : vector<8x512xf32> to vector<8xf32>
    %15 = vector.shape_cast %14 : vector<8xf32> to vector<8x1xf32>
    %cst_12 = arith.constant 2.500000e-03 : f32
    %16 = vector.broadcast %cst_12 : f32 to vector<8x1xf32>
    %17 = arith.mulf %15, %16 : vector<8x1xf32>
    %18 = arith.mulf %12, %12 : vector<8x1xf32>
    %19 = arith.subf %17, %18 : vector<8x1xf32>
    %cst_13 = arith.constant 0.000000e+00 : f32
    %20 = vector.broadcast %cst_13 : f32 to vector<8x1xf32>
    %21 = arith.maximumf %19, %20 : vector<8x1xf32>
    %cst_14 = arith.constant 9.99999974E-6 : f32
    %22 = vector.broadcast %cst_14 : f32 to vector<8x1xf32>
    %23 = arith.addf %21, %22 : vector<8x1xf32>
    %24 = math.rsqrt %23 : vector<8x1xf32>
    %25 = vector.broadcast %12 : vector<8x1xf32> to vector<8x512xf32>
    %26 = arith.subf %6, %25 : vector<8x512xf32>
    %27 = vector.broadcast %24 : vector<8x1xf32> to vector<8x512xf32>
    %28 = arith.mulf %26, %27 : vector<8x512xf32>
    %29 = vector.broadcast %7 : vector<1x512xf32> to vector<8x512xf32>
    %30 = arith.mulf %28, %29 : vector<8x512xf32>
    %31 = vector.broadcast %8 : vector<1x512xf32> to vector<8x512xf32>
    %32 = arith.addf %30, %31 : vector<8x512xf32>
    %cst_15 = arith.constant 0.000000e+00 : f32
    %33 = vector.broadcast %cst_15 : f32 to vector<8x512xf32>
    %34 = arith.maximumf %32, %33 : vector<8x512xf32>
    %35 = arith.truncf %34 : vector<8x512xf32> to vector<8x512xbf16>
    %c0_16 = arith.constant 0 : index
    %c0_17 = arith.constant 0 : index
    %36 = vector.load %arg6[%c0_16, %c0_17] : memref<512x384xbf16, #tpu.memory_space<vmem>>, vector<512x384xbf16>
    %cst_18 = arith.constant dense<0.000000e+00> : vector<8x384xf32>
    %37 = tpu.matmul %35, %36, %cst_18 {dimension_numbers = #tpu.dot_dimension_numbers<[1], [0], [0], [1], [0, 0, 1, 1], [], []>} : vector<8x512xbf16>, vector<512x384xbf16>, vector<8x384xf32> -> vector<8x384xf32>
    %c0_19 = arith.constant 0 : index
    %c0_20 = arith.constant 0 : index
    %38 = vector.load %arg7[%c0_19, %c0_20] : memref<1x384xf32, #tpu.memory_space<vmem>>, vector<1x384xf32>
    %39 = vector.broadcast %38 : vector<1x384xf32> to vector<8x384xf32>
    %40 = arith.addf %37, %39 : vector<8x384xf32>
    %c0_21 = arith.constant 0 : index
    %c0_22 = arith.constant 0 : index
    %41 = vector.load %arg8[%c0_21, %c0_22] : memref<1x384xf32, #tpu.memory_space<vmem>>, vector<1x384xf32>
    %c0_23 = arith.constant 0 : index
    %c0_24 = arith.constant 0 : index
    %42 = vector.load %arg9[%c0_23, %c0_24] : memref<1x384xf32, #tpu.memory_space<vmem>>, vector<1x384xf32>
    %cst_25 = arith.constant dense<0.000000e+00> : vector<8xf32>
    %43 = vector.multi_reduction <add>, %40, %cst_25 [1] : vector<8x384xf32> to vector<8xf32>
    %44 = vector.shape_cast %43 : vector<8xf32> to vector<8x1xf32>
    %cst_26 = arith.constant 0.00333333341 : f32
    %45 = vector.broadcast %cst_26 : f32 to vector<8x1xf32>
    %46 = arith.mulf %44, %45 : vector<8x1xf32>
    %47 = arith.mulf %40, %40 : vector<8x384xf32>
    %cst_27 = arith.constant dense<0.000000e+00> : vector<8xf32>
    %48 = vector.multi_reduction <add>, %47, %cst_27 [1] : vector<8x384xf32> to vector<8xf32>
    %49 = vector.shape_cast %48 : vector<8xf32> to vector<8x1xf32>
    %cst_28 = arith.constant 0.00333333341 : f32
    %50 = vector.broadcast %cst_28 : f32 to vector<8x1xf32>
    %51 = arith.mulf %49, %50 : vector<8x1xf32>
    %52 = arith.mulf %46, %46 : vector<8x1xf32>
    %53 = arith.subf %51, %52 : vector<8x1xf32>
    %cst_29 = arith.constant 0.000000e+00 : f32
    %54 = vector.broadcast %cst_29 : f32 to vector<8x1xf32>
    %55 = arith.maximumf %53, %54 : vector<8x1xf32>
    %cst_30 = arith.constant 9.99999974E-6 : f32
    %56 = vector.broadcast %cst_30 : f32 to vector<8x1xf32>
    %57 = arith.addf %55, %56 : vector<8x1xf32>
    %58 = math.rsqrt %57 : vector<8x1xf32>
    %59 = vector.broadcast %46 : vector<8x1xf32> to vector<8x384xf32>
    %60 = arith.subf %40, %59 : vector<8x384xf32>
    %61 = vector.broadcast %58 : vector<8x1xf32> to vector<8x384xf32>
    %62 = arith.mulf %60, %61 : vector<8x384xf32>
    %63 = vector.broadcast %41 : vector<1x384xf32> to vector<8x384xf32>
    %64 = arith.mulf %62, %63 : vector<8x384xf32>
    %65 = vector.broadcast %42 : vector<1x384xf32> to vector<8x384xf32>
    %66 = arith.addf %64, %65 : vector<8x384xf32>
    %cst_31 = arith.constant 0.000000e+00 : f32
    %67 = vector.broadcast %cst_31 : f32 to vector<8x384xf32>
    %68 = arith.maximumf %66, %67 : vector<8x384xf32>
    %69 = arith.truncf %68 : vector<8x384xf32> to vector<8x384xbf16>
    %c0_32 = arith.constant 0 : index
    %c0_33 = arith.constant 0 : index
    %70 = vector.load %arg10[%c0_32, %c0_33] : memref<384x128xbf16, #tpu.memory_space<vmem>>, vector<384x128xbf16>
    %cst_34 = arith.constant dense<0.000000e+00> : vector<8x128xf32>
    %71 = tpu.matmul %69, %70, %cst_34 {dimension_numbers = #tpu.dot_dimension_numbers<[1], [0], [0], [1], [0, 0, 1, 1], [], []>} : vector<8x384xbf16>, vector<384x128xbf16>, vector<8x128xf32> -> vector<8x128xf32>
    %c0_35 = arith.constant 0 : index
    %c0_36 = arith.constant 0 : index
    %72 = vector.load %arg11[%c0_35, %c0_36] : memref<1x128xf32, #tpu.memory_space<vmem>>, vector<1x128xf32>
    %73 = vector.broadcast %72 : vector<1x128xf32> to vector<8x128xf32>
    %74 = arith.addf %71, %73 : vector<8x128xf32>
    %c0_37 = arith.constant 0 : index
    %c0_38 = arith.constant 0 : index
    %75 = vector.load %arg12[%c0_37, %c0_38] : memref<1x128xf32, #tpu.memory_space<vmem>>, vector<1x128xf32>
    %c0_39 = arith.constant 0 : index
    %c0_40 = arith.constant 0 : index
    %76 = vector.load %arg13[%c0_39, %c0_40] : memref<1x128xf32, #tpu.memory_space<vmem>>, vector<1x128xf32>
    %cst_41 = arith.constant dense<0.000000e+00> : vector<8xf32>
    %77 = vector.multi_reduction <add>, %74, %cst_41 [1] : vector<8x128xf32> to vector<8xf32>
    %78 = vector.shape_cast %77 : vector<8xf32> to vector<8x1xf32>
    %cst_42 = arith.constant 2.000000e-01 : f32
    %79 = vector.broadcast %cst_42 : f32 to vector<8x1xf32>
    %80 = arith.mulf %78, %79 : vector<8x1xf32>
    %81 = arith.mulf %74, %74 : vector<8x128xf32>
    %cst_43 = arith.constant dense<0.000000e+00> : vector<8xf32>
    %82 = vector.multi_reduction <add>, %81, %cst_43 [1] : vector<8x128xf32> to vector<8xf32>
    %83 = vector.shape_cast %82 : vector<8xf32> to vector<8x1xf32>
    %cst_44 = arith.constant 2.000000e-01 : f32
    %84 = vector.broadcast %cst_44 : f32 to vector<8x1xf32>
    %85 = arith.mulf %83, %84 : vector<8x1xf32>
    %86 = arith.mulf %80, %80 : vector<8x1xf32>
    %87 = arith.subf %85, %86 : vector<8x1xf32>
    %cst_45 = arith.constant 0.000000e+00 : f32
    %88 = vector.broadcast %cst_45 : f32 to vector<8x1xf32>
    %89 = arith.maximumf %87, %88 : vector<8x1xf32>
    %cst_46 = arith.constant 9.99999974E-6 : f32
    %90 = vector.broadcast %cst_46 : f32 to vector<8x1xf32>
    %91 = arith.addf %89, %90 : vector<8x1xf32>
    %92 = math.rsqrt %91 : vector<8x1xf32>
    %93 = vector.broadcast %80 : vector<8x1xf32> to vector<8x128xf32>
    %94 = arith.subf %74, %93 : vector<8x128xf32>
    %95 = vector.broadcast %92 : vector<8x1xf32> to vector<8x128xf32>
    %96 = arith.mulf %94, %95 : vector<8x128xf32>
    %97 = vector.broadcast %75 : vector<1x128xf32> to vector<8x128xf32>
    %98 = arith.mulf %96, %97 : vector<8x128xf32>
    %99 = vector.broadcast %76 : vector<1x128xf32> to vector<8x128xf32>
    %100 = arith.addf %98, %99 : vector<8x128xf32>
    %c0_47 = arith.constant 0 : index
    %c0_48 = arith.constant 0 : index
    %101 = vector.load %arg14[%c0_47, %c0_48] : memref<8x128xf32, #tpu.memory_space<vmem>>, vector<8x128xf32>
    tpu.vector_store %arg14[%c0_47, %c0_48], %100 {strides = array<i32>} : memref<8x128xf32, #tpu.memory_space<vmem>>, vector<8x128xf32>,
    return
  }
  func.func @transform_0(%arg0: i32) -> (i32, i32) {
    %c0_i32 = arith.constant 0 : i32
    %c0_i32_0 = arith.constant 0 : i32
    return %arg0, %c0_i32 : i32, i32
  }
  func.func @transform_1(%arg0: i32) -> (i32, i32) {
    %c0_i32 = arith.constant 0 : i32
    %c0_i32_0 = arith.constant 0 : i32
    %c0_i32_1 = arith.constant 0 : i32
    return %c0_i32, %c0_i32_0 : i32, i32
  }
  func.func @transform_2(%arg0: i32) -> (i32, i32) {
    %c0_i32 = arith.constant 0 : i32
    %c0_i32_0 = arith.constant 0 : i32
    %c0_i32_1 = arith.constant 0 : i32
    return %c0_i32, %c0_i32_0 : i32, i32
  }
  func.func @transform_3(%arg0: i32) -> (i32, i32) {
    %c0_i32 = arith.constant 0 : i32
    %c0_i32_0 = arith.constant 0 : i32
    %c0_i32_1 = arith.constant 0 : i32
    return %c0_i32, %c0_i32_0 : i32, i32
  }
  func.func @transform_4(%arg0: i32) -> (i32, i32) {
    %c0_i32 = arith.constant 0 : i32
    %c0_i32_0 = arith.constant 0 : i32
    %c0_i32_1 = arith.constant 0 : i32
    return %c0_i32, %c0_i32_0 : i32, i32
  }
  func.func @transform_5(%arg0: i32) -> (i32, i32) {
    %c0_i32 = arith.constant 0 : i32
    %c0_i32_0 = arith.constant 0 : i32
    %c0_i32_1 = arith.constant 0 : i32
    return %c0_i32, %c0_i32_0 : i32, i32
  }
  func.func @transform_6(%arg0: i32) -> (i32, i32) {
    %c0_i32 = arith.constant 0 : i32
    %c0_i32_0 = arith.constant 0 : i32
    %c0_i32_1 = arith.constant 0 : i32
    return %c0_i32, %c0_i32_0 : i32, i32
  }
  func.func @transform_7(%arg0: i32) -> (i32, i32) {
    %c0_i32 = arith.constant 0 : i32
    %c0_i32_0 = arith.constant 0 : i32
    %c0_i32_1 = arith.constant 0 : i32
    return %c0_i32, %c0_i32_0 : i32, i32
  }
  func.func @transform_8(%arg0: i32) -> (i32, i32) {
    %c0_i32 = arith.constant 0 : i32
    %c0_i32_0 = arith.constant 0 : i32
    %c0_i32_1 = arith.constant 0 : i32
    return %c0_i32, %c0_i32_0 : i32, i32
  }
  func.func @transform_9(%arg0: i32) -> (i32, i32) {
    %c0_i32 = arith.constant 0 : i32
    %c0_i32_0 = arith.constant 0 : i32
    %c0_i32_1 = arith.constant 0 : i32
    return %c0_i32, %c0_i32_0 : i32, i32
  }
  func.func @transform_10(%arg0: i32) -> (i32, i32) {
    %c0_i32 = arith.constant 0 : i32
    %c0_i32_0 = arith.constant 0 : i32
    %c0_i32_1 = arith.constant 0 : i32
    return %c0_i32, %c0_i32_0 : i32, i32
  }
  func.func @transform_11(%arg0: i32) -> (i32, i32) {
    %c0_i32 = arith.constant 0 : i32
    %c0_i32_0 = arith.constant 0 : i32
    %c0_i32_1 = arith.constant 0 : i32
    return %c0_i32, %c0_i32_0 : i32, i32
  }
  func.func @transform_12(%arg0: i32) -> (i32, i32) {
    %c0_i32 = arith.constant 0 : i32
    %c0_i32_0 = arith.constant 0 : i32
    %c0_i32_1 = arith.constant 0 : i32
    return %c0_i32, %c0_i32_0 : i32, i32
  }
  func.func @transform_13(%arg0: i32) -> (i32, i32) {
    %c0_i32 = arith.constant 0 : i32
    %c0_i32_0 = arith.constant 0 : i32
    return %arg0, %c0_i32 : i32, i32
  }
}

</mosaic_0001>

<llo_original>
// kernel: tpu_custom_call.1
$region0: #{tpu_custom_call.1}
  #allocation0 [shape = 'u32[]', space=smem, size = 0x4, offset = 0x4, fixed_abs, tag = 'smem constant byte address 0x4 - core index']
  #allocation1 [shape = 'u32[144,128]{1,0:T(1,128)}', space=vmem, size = 0x12000, scoped, tag = 'internal scratch']
  %s0 = inlined_call_operand.hbm [shape: f32[8,32], index: 0, kind: input, shape index: {}]
  %s1 = inlined_call_operand.hbm [shape: bf16[32,512], index: 1, kind: input, shape index: {}]
  %s2 = inlined_call_operand.vmem [shape: f32[1,512], index: 2, kind: input, shape index: {}]
  %s3 = inlined_call_operand.vmem [shape: f32[1,512], index: 3, kind: input, shape index: {}]
  %s4 = inlined_call_operand.vmem [shape: f32[1,512], index: 4, kind: input, shape index: {}]
  %s5 = inlined_call_operand.hbm [shape: bf16[512,384], index: 5, kind: input, shape index: {}]
  %s6 = inlined_call_operand.vmem [shape: f32[1,384], index: 6, kind: input, shape index: {}]
  %s7 = inlined_call_operand.vmem [shape: f32[1,384], index: 7, kind: input, shape index: {}]
  %s8 = inlined_call_operand.vmem [shape: f32[1,384], index: 8, kind: input, shape index: {}]
  %s9 = inlined_call_operand.hbm [shape: bf16[384,128], index: 9, kind: input, shape index: {}]
  %s10 = inlined_call_operand.vmem [shape: f32[1,128], index: 10, kind: input, shape index: {}]
  %s11 = inlined_call_operand.vmem [shape: f32[1,128], index: 11, kind: input, shape index: {}]
  %s12 = inlined_call_operand.vmem [shape: f32[1,128], index: 12, kind: input, shape index: {}]
  %s13 = inlined_call_operand.hbm [shape: f32[8,128], index: 13, kind: output, shape index: {}]
  %s14 = sld [smem:[#allocation0]]
  $region78: #{tpu_custom_call.1} parent=0
    _
  %s16 = ssub.s32 1, %s14
  %s17 = scalar_select 0, %s16, %s14
  $region1: #{tpu_custom_call.1} parent=0
    #allocation2 [shape = 'u8[4096]{0}', space=vmem, size = 0x1000, scoped, tag = 'input window, operand 0, single buffered']
    #allocation3 [shape = 's32[1]{0}', space=sflag, size = 0x4, scoped, tag = 'scoped memory for tpu_custom_call.1']
    #allocation4 [shape = 's32[1]{0}', space=sflag, size = 0x4, scoped, tag = 'scoped memory for tpu_custom_call.1']
    #allocation5 [shape = 'u8[32768]{0}', space=vmem, size = 0x8000, scoped, tag = 'input window, operand 1, single buffered']
    #allocation6 [shape = 's32[1]{0}', space=sflag, size = 0x4, scoped, tag = 'scoped memory for tpu_custom_call.1']
    #allocation7 [shape = 'u8[393216]{0}', space=vmem, size = 0x60000, scoped, tag = 'input window, operand 5, single buffered']
    #allocation8 [shape = 'u8[98304]{0}', space=vmem, size = 0x18000, scoped, tag = 'input window, operand 9, single buffered']
    #allocation9 [shape = 's32[1]{0}', space=sflag, size = 0x4, scoped, tag = 'scoped memory for tpu_custom_call.1']
    #allocation10 [shape = 'u8[4096]{0}', space=vmem, size = 0x1000, scoped, tag = 'output window, operand 0, single buffered']
    %18 = vsyncpa [#allocation3], 0
    %19 = vsyncpa [#allocation6], 0
    %20 = vsyncpa [#allocation9], 0
    %21 = vsyncpa [#allocation4], 0
    // Predicated region
    $region2: #{tpu_custom_call.1} parent=1 // pred_check
      _
    $region3: #{tpu_custom_call.1} parent=1 // pred_check_branch
      %23 = sbr.rel (0) target = $region5
    $region4: #{tpu_custom_call.1} parent=1 // pred_region
      %s25 = ssub.s32 128, 128
      %26 = vsyncadd [#allocation3], %s25
      %s28 = sshll.u32 [#allocation2], 4
      %s29 = int_to_ptr.vmem [resolvable:$true] %s28
      %31 = dma.hbm_to_vmem [thread:$0]  %s0, 128, %s29, [#allocation3]
    $region5: #{tpu_custom_call.1} parent=1 // pred_fallthru
      _
    // Predicated region
    $region6: #{tpu_custom_call.1} parent=1 // pred_check
      _
    $region7: #{tpu_custom_call.1} parent=1 // pred_check_branch
      %33 = sbr.rel (0) target = $region9
    $region8: #{tpu_custom_call.1} parent=1 // pred_region
      %s35 = ssub.s32 1024, 1024
      %36 = vsyncadd [#allocation6], %s35
      %s37 = sshll.u32 [#allocation5], 4
      %s38 = int_to_ptr.vmem [resolvable:$true] %s37
      %43 = dma.hbm_to_vmem [thread:$0]  %s1, 1024, %s38, [#allocation6], 256, 256, 16
    $region9: #{tpu_custom_call.1} parent=1 // pred_fallthru
      _
    // Predicated region
    $region10: #{tpu_custom_call.1} parent=1 // pred_check
      _
    $region11: #{tpu_custom_call.1} parent=1 // pred_check_branch
      %45 = sbr.rel (0) target = $region13
    $region12: #{tpu_custom_call.1} parent=1 // pred_region
      _
    $region13: #{tpu_custom_call.1} parent=1 // pred_fallthru
      _
    // Predicated region
    $region14: #{tpu_custom_call.1} parent=1 // pred_check
      _
    $region15: #{tpu_custom_call.1} parent=1 // pred_check_branch
      %47 = sbr.rel (0) target = $region17
    $region16: #{tpu_custom_call.1} parent=1 // pred_region
      _
    $region17: #{tpu_custom_call.1} parent=1 // pred_fallthru
      _
    // Predicated region
    $region18: #{tpu_custom_call.1} parent=1 // pred_check
      _
    $region19: #{tpu_custom_call.1} parent=1 // pred_check_branch
      %49 = sbr.rel (0) target = $region21
    $region20: #{tpu_custom_call.1} parent=1 // pred_region
      _
    $region21: #{tpu_custom_call.1} parent=1 // pred_fallthru
      _
    // Predicated region
    $region22: #{tpu_custom_call.1} parent=1 // pred_check
      _
    $region23: #{tpu_custom_call.1} parent=1 // pred_check_branch
      %51 = sbr.rel (0) target = $region25
    $region24: #{tpu_custom_call.1} parent=1 // pred_region
      %s53 = ssub.s32 12288, 12288
      %54 = vsyncadd [#allocation6], %s53
      %s55 = sshll.u32 [#allocation7], 4
      %s56 = int_to_ptr.vmem [resolvable:$true] %s55
      %61 = dma.hbm_to_vmem [thread:$0]  %s5, 12288, %s56, [#allocation6], 192, 192, 12
    $region25: #{tpu_custom_call.1} parent=1 // pred_fallthru
      _
    // Predicated region
    $region26: #{tpu_custom_call.1} parent=1 // pred_check
      _
    $region27: #{tpu_custom_call.1} parent=1 // pred_check_branch
      %63 = sbr.rel (0) target = $region29
    $region28: #{tpu_custom_call.1} parent=1 // pred_region
      _
    $region29: #{tpu_custom_call.1} parent=1 // pred_fallthru
      _
    // Predicated region
    $region30: #{tpu_custom_call.1} parent=1 // pred_check
      _
    $region31: #{tpu_custom_call.1} parent=1 // pred_check_branch
      %65 = sbr.rel (0) target = $region33
    $region32: #{tpu_custom_call.1} parent=1 // pred_region
      _
    $region33: #{tpu_custom_call.1} parent=1 // pred_fallthru
      _
    // Predicated region
    $region34: #{tpu_custom_call.1} parent=1 // pred_check
      _
    $region35: #{tpu_custom_call.1} parent=1 // pred_check_branch
      %67 = sbr.rel (0) target = $region37
    $region36: #{tpu_custom_call.1} parent=1 // pred_region
      _
    $region37: #{tpu_custom_call.1} parent=1 // pred_fallthru
      _
    // Predicated region
    $region38: #{tpu_custom_call.1} parent=1 // pred_check
      _
    $region39: #{tpu_custom_call.1} parent=1 // pred_check_branch
      %69 = sbr.rel (0) target = $region41
    $region40: #{tpu_custom_call.1} parent=1 // pred_region
      %s71 = ssub.s32 3072, 3072
      %72 = vsyncadd [#allocation9], %s71
      %s73 = sshll.u32 [#allocation8], 4
      %s74 = int_to_ptr.vmem [resolvable:$true] %s73
      %79 = dma.hbm_to_vmem [thread:$0]  %s9, 3072, %s74, [#allocation9], 64, 64, 4
    $region41: #{tpu_custom_call.1} parent=1 // pred_fallthru
      _
    // Predicated region
    $region42: #{tpu_custom_call.1} parent=1 // pred_check
      _
    $region43: #{tpu_custom_call.1} parent=1 // pred_check_branch
      %81 = sbr.rel (0) target = $region45
    $region44: #{tpu_custom_call.1} parent=1 // pred_region
      _
    $region45: #{tpu_custom_call.1} parent=1 // pred_fallthru
      _
    // Predicated region
    $region46: #{tpu_custom_call.1} parent=1 // pred_check
      _
    $region47: #{tpu_custom_call.1} parent=1 // pred_check_branch
      %83 = sbr.rel (0) target = $region49
    $region48: #{tpu_custom_call.1} parent=1 // pred_region
      _
    $region49: #{tpu_custom_call.1} parent=1 // pred_fallthru
      _
    // Predicated region
    $region50: #{tpu_custom_call.1} parent=1 // pred_check
      _
    $region51: #{tpu_custom_call.1} parent=1 // pred_check_branch
      %85 = sbr.rel (0) target = $region53
    $region52: #{tpu_custom_call.1} parent=1 // pred_region
      _
    $region53: #{tpu_custom_call.1} parent=1 // pred_fallthru
      _
    // Predicated region
    $region54: #{tpu_custom_call.1} parent=1 // pred_check
      _
    $region55: #{tpu_custom_call.1} parent=1 // pred_check_branch
      %87 = sbr.rel (0) target = $region57
    $region56: #{tpu_custom_call.1} parent=1 // pred_region
      %88 = dma.done [#allocation3], 128
    $region57: #{tpu_custom_call.1} parent=1 // pred_fallthru
      _
    // Predicated region
    $region58: #{tpu_custom_call.1} parent=1 // pred_check
      _
    $region59: #{tpu_custom_call.1} parent=1 // pred_check_branch
      %90 = sbr.rel (0) target = $region61
    $region60: #{tpu_custom_call.1} parent=1 // pred_region
      %91 = dma.done [#allocation6], 1024
    $region61: #{tpu_custom_call.1} parent=1 // pred_fallthru
      _
    // Predicated region
    $region62: #{tpu_custom_call.1} parent=1 // pred_check
      _
    $region63: #{tpu_custom_call.1} parent=1 // pred_check_branch
      %93 = sbr.rel (0) target = $region65
    $region64: #{tpu_custom_call.1} parent=1 // pred_region
      %94 = dma.done [#allocation6], 12288
    $region65: #{tpu_custom_call.1} parent=1 // pred_fallthru
      _
    // Predicated region
    $region66: #{tpu_custom_call.1} parent=1 // pred_check
      _
    $region67: #{tpu_custom_call.1} parent=1 // pred_check_branch
      %96 = sbr.rel (0) target = $region69
    $region68: #{tpu_custom_call.1} parent=1 // pred_region
      %97 = dma.done [#allocation9], 3072
    $region69: #{tpu_custom_call.1} parent=1 // pred_fallthru
      _
    %v99 = vld [vmem:[#allocation2] sm:$0xff]
    %v100 = vpack.c.bf16 %v99, %v99
    %v101 = vld [vmem:[#allocation5] sm:$0xff]
    %v102 = vld [vmem:[#allocation5 + $0x8] sm:$0xff]
    %v103 = vld [vmem:[#allocation5 + $0x10] sm:$0xff]
    %v104 = vld [vmem:[#allocation5 + $0x18] sm:$0xff]
    %v105 = vld [vmem:[#allocation5 + $0x20] sm:$0xff]
    %v106 = vld [vmem:[#allocation5 + $0x28] sm:$0xff]
    %v107 = vld [vmem:[#allocation5 + $0x30] sm:$0xff]
    %v108 = vld [vmem:[#allocation5 + $0x38] sm:$0xff]
    %v109 = vld [vmem:[%s2] sm:$0xf]
    %v111 = vlaneseq
    %v112 = vshrl.u32 %v111, 7
    %v113 = vsub.s32 0, %v112
    %v114 = vrot.slane %v109, %v113
    %v115 = vlaneseq
    %v116 = vshrl.u32 %v115, 7
    %v117 = vsub.s32 1, %v116
    %v118 = vrot.slane %v109, %v117
    %v119 = vlaneseq
    %v120 = vshrl.u32 %v119, 7
    %v121 = vsub.s32 2, %v120
    %v122 = vrot.slane %v109, %v121
    %v123 = vlaneseq
    %v124 = vshrl.u32 %v123, 7
    %v125 = vsub.s32 3, %v124
    %v126 = vrot.slane %v109, %v125
    %v139 = vunpack.c.l.b16 %v101
    %v140 = vunpack.c.h.b16 %v101
    %v141 = vunpack.c.l.b16 %v102
    %v142 = vunpack.c.h.b16 %v102
    %v143 = vunpack.c.l.b16 %v103
    %v144 = vunpack.c.h.b16 %v103
    %v145 = vunpack.c.l.b16 %v104
    %v146 = vunpack.c.h.b16 %v104
    %v147 = vunpack.c.l.b16 %v105
    %v148 = vunpack.c.h.b16 %v105
    %v149 = vunpack.c.l.b16 %v106
    %v150 = vunpack.c.h.b16 %v106
    %v151 = vunpack.c.l.b16 %v107
    %v152 = vunpack.c.h.b16 %v107
    %v153 = vunpack.c.l.b16 %v108
    %v154 = vunpack.c.h.b16 %v108
    %v155 = vpack.c.b16 %v143, %v139
    %v156 = vpack.c.b16 %v144, %v140
    %v157 = vpack.c.b16 %v145, %v141
    %v158 = vpack.c.b16 %v146, %v142
    %v159 = vpack.c.b16 %v151, %v147
    %v160 = vpack.c.b16 %v152, %v148
    %v161 = vpack.c.b16 %v153, %v149
    %v162 = vpack.c.b16 %v154, %v150
    %vm171 = vcmask 261120
    %v173 = vsel %vm171, %v100, 0
    %175 = vmatprep.subr.bf16.mxu0 %v156
    %176 = vmatpush1.bf16.msra.mxu0 %v155
    %177 = vmatprep.subr.bf16.mxu0 %v160
    %178 = vmatpush1.bf16.msra.mxu0 %v159
    %179 = vmatprep.subr.bf16.mxu0 0
    %180 = vmatpush1.bf16.msra.mxu0 0
    %181 = vmatprep.subr.bf16.mxu0 0
    %182 = vmatpush1.bf16.msra.mxu0 0
    %183 = vmatprep.subr.bf16.mxu0 0
    %184 = vmatpush1.bf16.msra.mxu0 0
    %185 = vmatprep.subr.bf16.mxu0 0
    %186 = vmatpush1.bf16.msra.mxu0 0
    %187 = vmatprep.subr.bf16.mxu0 0
    %188 = vmatpush1.bf16.msra.mxu0 0
    %189 = vmatprep.subr.bf16.mxu0 0
    %190 = vmatpush1.bf16.msra.mxu0 0
    %191 = vmatprep.subr.bf16.mxu0 0
    %192 = vmatpush1.bf16.msra.mxu0 0
    %193 = vmatprep.subr.bf16.mxu0 0
    %194 = vmatpush1.bf16.msra.mxu0 0
    %195 = vmatprep.subr.bf16.mxu0 0
    %196 = vmatpush1.bf16.msra.mxu0 0
    %197 = vmatprep.subr.bf16.mxu0 0
    %198 = vmatpush1.bf16.msra.mxu0 0
    %199 = vmatprep.subr.bf16.mxu0 0
    %200 = vmatpush1.bf16.msra.mxu0 0
    %201 = vmatprep.subr.bf16.mxu0 0
    %202 = vmatpush1.bf16.msra.mxu0 0
    %203 = vmatprep.subr.bf16.mxu0 0
    %204 = vmatpush1.bf16.msra.mxu0 0
    %205 = vmatprep.subr.bf16.mxu0 0
    %206 = vmatpush1.bf16.msra.mxu0 0
    %207 = vmatprep.mubr.bf16.mxu0 0
    %208 = vmatmul.mubr.bf16.gmra.mrb[0].mxu0 %v173
    %v209 = vpop.f32.mrb[0].mxu0
    %v210 = vadd.f32 %v114, %v209
    %v211 = vpop.f32.mrb[0].mxu0
    %v212 = vadd.f32 %v118, %v211
    %v213 = vpop.f32.mrb[0].mxu0
    %v214 = vpop.f32.mrb[0].mxu0
    %215 = vdwg.mxu0
    %216 = vmatprep.subr.bf16.mxu0 %v158
    %217 = vmatpush1.bf16.msra.mxu0 %v157
    %218 = vmatprep.subr.bf16.mxu0 %v162
    %219 = vmatpush1.bf16.msra.mxu0 %v161
    %220 = vmatprep.subr.bf16.mxu0 0
    %221 = vmatpush1.bf16.msra.mxu0 0
    %222 = vmatprep.subr.bf16.mxu0 0
    %223 = vmatpush1.bf16.msra.mxu0 0
    %224 = vmatprep.subr.bf16.mxu0 0
    %225 = vmatpush1.bf16.msra.mxu0 0
    %226 = vmatprep.subr.bf16.mxu0 0
    %227 = vmatpush1.bf16.msra.mxu0 0
    %228 = vmatprep.subr.bf16.mxu0 0
    %229 = vmatpush1.bf16.msra.mxu0 0
    %230 = vmatprep.subr.bf16.mxu0 0
    %231 = vmatpush1.bf16.msra.mxu0 0
    %232 = vmatprep.subr.bf16.mxu0 0
    %233 = vmatpush1.bf16.msra.mxu0 0
    %234 = vmatprep.subr.bf16.mxu0 0
    %235 = vmatpush1.bf16.msra.mxu0 0
    %236 = vmatprep.subr.bf16.mxu0 0
    %237 = vmatpush1.bf16.msra.mxu0 0
    %238 = vmatprep.subr.bf16.mxu0 0
    %239 = vmatpush1.bf16.msra.mxu0 0
    %240 = vmatprep.subr.bf16.mxu0 0
    %241 = vmatpush1.bf16.msra.mxu0 0
    %242 = vmatprep.subr.bf16.mxu0 0
    %243 = vmatpush1.bf16.msra.mxu0 0
    %244 = vmatprep.subr.bf16.mxu0 0
    %245 = vmatpush1.bf16.msra.mxu0 0
    %246 = vmatprep.subr.bf16.mxu0 0
    %247 = vmatpush1.bf16.msra.mxu0 0
    %248 = vmatprep.mubr.bf16.mxu0 0
    %249 = vmatmul.mubr.bf16.gmra.mrb[0].mxu0 %v173
    %v250 = vpop.f32.mrb[0].mxu0
    %v251 = vadd.f32 %v122, %v250
    %v252 = vpop.f32.mrb[0].mxu0
    %v253 = vadd.f32 %v126, %v252
    %v254 = vpop.f32.mrb[0].mxu0
    %v255 = vpop.f32.mrb[0].mxu0
    %256 = vdwg.mxu0
    %v257 = vld [vmem:[%s3] sm:$0xf]
    %v258 = vld [vmem:[%s4] sm:$0xf]
    %v259 = vadd.f32 %v210, %v212
    %v260 = vadd.f32 %v259, %v251
    %v261 = vadd.f32 %v260, %v253
    %262 = vadd.xlane.f32.xlu0 %v261
    %v263 = vpop.xlane.xlu0 %262
    %v264 = vmul.f32 %v263, 0.0025
    %v265 = vmul.f32 %v210, %v210
    %v266 = vmul.f32 %v212, %v212
    %v267 = vmul.f32 %v251, %v251
    %v268 = vmul.f32 %v253, %v253
    %v269 = vadd.f32 %v265, %v266
    %v270 = vadd.f32 %v269, %v267
    %v271 = vadd.f32 %v270, %v268
    %272 = vadd.xlane.f32.xlu0 %v271
    %v273 = vpop.xlane.xlu0 %272
    %v274 = vmul.f32 %v273, 0.0025
    %v275 = vmul.f32 %v264, %v264
    %v276 = vsub.f32 %v274, %v275
    %v277 = vmax.f32 %v276, 0.0
    %v278 = vadd.f32 %v277, 1e-05
    %v279 = vrsqrt.pop %v278
    %v280 = vsub.f32 %v210, %v264
    %v281 = vsub.f32 %v212, %v264
    %v282 = vsub.f32 %v251, %v264
    %v283 = vsub.f32 %v253, %v264
    %v284 = vmul.f32 %v280, %v279
    %v285 = vmul.f32 %v281, %v279
    %v286 = vmul.f32 %v282, %v279
    %v287 = vmul.f32 %v283, %v279
    %v289 = vlaneseq
    %v290 = vshrl.u32 %v289, 7
    %v291 = vsub.s32 0, %v290
    %v292 = vrot.slane %v257, %v291
    %v293 = vlaneseq
    %v294 = vshrl.u32 %v293, 7
    %v295 = vsub.s32 1, %v294
    %v296 = vrot.slane %v257, %v295
    %v297 = vlaneseq
    %v298 = vshrl.u32 %v297, 7
    %v299 = vsub.s32 2, %v298
    %v300 = vrot.slane %v257, %v299
    %v301 = vlaneseq
    %v302 = vshrl.u32 %v301, 7
    %v303 = vsub.s32 3, %v302
    %v304 = vrot.slane %v257, %v303
    %v309 = vmul.f32 %v284, %v292
    %v310 = vmul.f32 %v285, %v296
    %v311 = vmul.f32 %v286, %v300
    %v312 = vmul.f32 %v287, %v304
    %v314 = vlaneseq
    %v315 = vshrl.u32 %v314, 7
    %v316 = vsub.s32 0, %v315
    %v317 = vrot.slane %v258, %v316
    %v318 = vlaneseq
    %v319 = vshrl.u32 %v318, 7
    %v320 = vsub.s32 1, %v319
    %v321 = vrot.slane %v258, %v320
    %v322 = vlaneseq
    %v323 = vshrl.u32 %v322, 7
    %v324 = vsub.s32 2, %v323
    %v325 = vrot.slane %v258, %v324
    %v326 = vlaneseq
    %v327 = vshrl.u32 %v326, 7
    %v328 = vsub.s32 3, %v327
    %v329 = vrot.slane %v258, %v328
    %v334 = vadd.f32 %v309, %v317
    %v335 = vadd.f32 %v310, %v321
    %v336 = vadd.f32 %v311, %v325
    %v337 = vadd.f32 %v312, %v329
    %v338 = vmax.f32 %v334, 0.0
    %v339 = vmax.f32 %v335, 0.0
    %v340 = vmax.f32 %v336, 0.0
    %v341 = vmax.f32 %v337, 0.0
    %v342 = vpack.c.bf16 %v338, %v338
    %v343 = vpack.c.bf16 %v339, %v339
    %v344 = vpack.c.bf16 %v340, %v340
    %v345 = vpack.c.bf16 %v341, %v341
    %v346 = vld [vmem:[#allocation7] sm:$0xff]
    %v347 = vld [vmem:[#allocation7 + $0x8] sm:$0xf]
    %v348 = vld [vmem:[#allocation7 + $0xc] sm:$0xff]
    %v349 = vld [vmem:[#allocation7 + $0x14] sm:$0xf]
    %v350 = vld [vmem:[#allocation7 + $0x18] sm:$0xff]
    %v351 = vld [vmem:[#allocation7 + $0x20] sm:$0xf]
    %v352 = vld [vmem:[#allocation7 + $0x24] sm:$0xff]
    %v353 = vld [vmem:[#allocation7 + $0x2c] sm:$0xf]
    %v354 = vld [vmem:[#allocation7 + $0x30] sm:$0xff]
    %v355 = vld [vmem:[#allocation7 + $0x38] sm:$0xf]
    %v356 = vld [vmem:[#allocation7 + $0x3c] sm:$0xff]
    %v357 = vld [vmem:[#allocation7 + $0x44] sm:$0xf]
    %v358 = vld [vmem:[#allocation7 + $0x48] sm:$0xff]
    %v359 = vld [vmem:[#allocation7 + $0x50] sm:$0xf]
    %v360 = vld [vmem:[#allocation7 + $0x54] sm:$0xff]
    %v361 = vld [vmem:[#allocation7 + $0x5c] sm:$0xf]
    %v362 = vld [vmem:[#allocation7 + $0x60] sm:$0xff]
    %v363 = vld [vmem:[#allocation7 + $0x68] sm:$0xf]
    %v364 = vld [vmem:[#allocation7 + $0x6c] sm:$0xff]
    %v365 = vld [vmem:[#allocation7 + $0x74] sm:$0xf]
    %v366 = vld [vmem:[#allocation7 + $0x78] sm:$0xff]
    %v367 = vld [vmem:[#allocation7 + $0x80] sm:$0xf]
    %v368 = vld [vmem:[#allocation7 + $0x84] sm:$0xff]
    %v369 = vld [vmem:[#allocation7 + $0x8c] sm:$0xf]
    %v370 = vld [vmem:[#allocation7 + $0x90] sm:$0xff]
    %v371 = vld [vmem:[#allocation7 + $0x98] sm:$0xf]
    %v372 = vld [vmem:[#allocation7 + $0x9c] sm:$0xff]
    %v373 = vld [vmem:[#allocation7 + $0xa4] sm:$0xf]
    %v374 = vld [vmem:[#allocation7 + $0xa8] sm:$0xff]
    %v375 = vld [vmem:[#allocation7 + $0xb0] sm:$0xf]
    %v376 = vld [vmem:[#allocation7 + $0xb4] sm:$0xff]
    %v377 = vld [vmem:[#allocation7 + $0xbc] sm:$0xf]
    %v378 = vld [vmem:[#allocation7 + $0xc0] sm:$0xff]
    %v379 = vld [vmem:[#allocation7 + $0xc8] sm:$0xf]
    %v380 = vld [vmem:[#allocation7 + $0xcc] sm:$0xff]
    %v381 = vld [vmem:[#allocation7 + $0xd4] sm:$0xf]
    %v382 = vld [vmem:[#allocation7 + $0xd8] sm:$0xff]
    %v383 = vld [vmem:[#allocation7 + $0xe0] sm:$0xf]
    %v384 = vld [vmem:[#allocation7 + $0xe4] sm:$0xff]
    %v385 = vld [vmem:[#allocation7 + $0xec] sm:$0xf]
    %v386 = vld [vmem:[#allocation7 + $0xf0] sm:$0xff]
    %v387 = vld [vmem:[#allocation7 + $0xf8] sm:$0xf]
    %v388 = vld [vmem:[#allocation7 + $0xfc] sm:$0xff]
    %v389 = vld [vmem:[#allocation7 + $0x104] sm:$0xf]
    %v390 = vld [vmem:[#allocation7 + $0x108] sm:$0xff]
    %v391 = vld [vmem:[#allocation7 + $0x110] sm:$0xf]
    %v392 = vld [vmem:[#allocation7 + $0x114] sm:$0xff]
    %v393 = vld [vmem:[#allocation7 + $0x11c] sm:$0xf]
    %v394 = vld [vmem:[#allocation7 + $0x120] sm:$0xff]
    %v395 = vld [vmem:[#allocation7 + $0x128] sm:$0xf]
    %v396 = vld [vmem:[#allocation7 + $0x12c] sm:$0xff]
    %v397 = vld [vmem:[#allocation7 + $0x134] sm:$0xf]
    %v398 = vld [vmem:[#allocation7 + $0x138] sm:$0xff]
    %v399 = vld [vmem:[#allocation7 + $0x140] sm:$0xf]
    %v400 = vld [vmem:[#allocation7 + $0x144] sm:$0xff]
    %v401 = vld [vmem:[#allocation7 + $0x14c] sm:$0xf]
    %v402 = vld [vmem:[#allocation7 + $0x150] sm:$0xff]
    %v403 = vld [vmem:[#allocation7 + $0x158] sm:$0xf]
    %v404 = vld [vmem:[#allocation7 + $0x15c] sm:$0xff]
    %v405 = vld [vmem:[#allocation7 + $0x164] sm:$0xf]
    %v406 = vld [vmem:[#allocation7 + $0x168] sm:$0xff]
    %v407 = vld [vmem:[#allocation7 + $0x170] sm:$0xf]
    %v408 = vld [vmem:[#allocation7 + $0x174] sm:$0xff]
    %v409 = vld [vmem:[#allocation7 + $0x17c] sm:$0xf]
    %v410 = vld [vmem:[#allocation7 + $0x180] sm:$0xff]
    %v411 = vld [vmem:[#allocation7 + $0x188] sm:$0xf]
    %v412 = vld [vmem:[#allocation7 + $0x18c] sm:$0xff]
    %v413 = vld [vmem:[#allocation7 + $0x194] sm:$0xf]
    %v414 = vld [vmem:[#allocation7 + $0x198] sm:$0xff]
    %v415 = vld [vmem:[#allocation7 + $0x1a0] sm:$0xf]
    %v416 = vld [vmem:[#allocation7 + $0x1a4] sm:$0xff]
    %v417 = vld [vmem:[#allocation7 + $0x1ac] sm:$0xf]
    %v418 = vld [vmem:[#allocation7 + $0x1b0] sm:$0xff]
    %v419 = vld [vmem:[#allocation7 + $0x1b8] sm:$0xf]
    %v420 = vld [vmem:[#allocation7 + $0x1bc] sm:$0xff]
    %v421 = vld [vmem:[#allocation7 + $0x1c4] sm:$0xf]
    %v422 = vld [vmem:[#allocation7 + $0x1c8] sm:$0xff]
    %v423 = vld [vmem:[#allocation7 + $0x1d0] sm:$0xf]
    %v424 = vld [vmem:[#allocation7 + $0x1d4] sm:$0xff]
    %v425 = vld [vmem:[#allocation7 + $0x1dc] sm:$0xf]
    %v426 = vld [vmem:[#allocation7 + $0x1e0] sm:$0xff]
    %v427 = vld [vmem:[#allocation7 + $0x1e8] sm:$0xf]
    %v428 = vld [vmem:[#allocation7 + $0x1ec] sm:$0xff]
    %v429 = vld [vmem:[#allocation7 + $0x1f4] sm:$0xf]
    %v430 = vld [vmem:[#allocation7 + $0x1f8] sm:$0xff]
    %v431 = vld [vmem:[#allocation7 + $0x200] sm:$0xf]
    %v432 = vld [vmem:[#allocation7 + $0x204] sm:$0xff]
    %v433 = vld [vmem:[#allocation7 + $0x20c] sm:$0xf]
    %v434 = vld [vmem:[#allocation7 + $0x210] sm:$0xff]
    %v435 = vld [vmem:[#allocation7 + $0x218] sm:$0xf]
    %v436 = vld [vmem:[#allocation7 + $0x21c] sm:$0xff]
    %v437 = vld [vmem:[#allocation7 + $0x224] sm:$0xf]
    %v438 = vld [vmem:[#allocation7 + $0x228] sm:$0xff]
    %v439 = vld [vmem:[#allocation7 + $0x230] sm:$0xf]
    %v440 = vld [vmem:[#allocation7 + $0x234] sm:$0xff]
    %v441 = vld [vmem:[#allocation7 + $0x23c] sm:$0xf]
    %v442 = vld [vmem:[#allocation7 + $0x240] sm:$0xff]
    %v443 = vld [vmem:[#allocation7 + $0x248] sm:$0xf]
    %v444 = vld [vmem:[#allocation7 + $0x24c] sm:$0xff]
    %v445 = vld [vmem:[#allocation7 + $0x254] sm:$0xf]
    %v446 = vld [vmem:[#allocation7 + $0x258] sm:$0xff]
    %v447 = vld [vmem:[#allocation7 + $0x260] sm:$0xf]
    %v448 = vld [vmem:[#allocation7 + $0x264] sm:$0xff]
    %v449 = vld [vmem:[#allocation7 + $0x26c] sm:$0xf]
    %v450 = vld [vmem:[#allocation7 + $0x270] sm:$0xff]
    %v451 = vld [vmem:[#allocation7 + $0x278] sm:$0xf]
    %v452 = vld [vmem:[#allocation7 + $0x27c] sm:$0xff]
    %v453 = vld [vmem:[#allocation7 + $0x284] sm:$0xf]
    %v454 = vld [vmem:[#allocation7 + $0x288] sm:$0xff]
    %v455 = vld [vmem:[#allocation7 + $0x290] sm:$0xf]
    %v456 = vld [vmem:[#allocation7 + $0x294] sm:$0xff]
    %v457 = vld [vmem:[#allocation7 + $0x29c] sm:$0xf]
    %v458 = vld [vmem:[#allocation7 + $0x2a0] sm:$0xff]
    %v459 = vld [vmem:[#allocation7 + $0x2a8] sm:$0xf]
    %v460 = vld [vmem:[#allocation7 + $0x2ac] sm:$0xff]
    %v461 = vld [vmem:[#allocation7 + $0x2b4] sm:$0xf]
    %v462 = vld [vmem:[#allocation7 + $0x2b8] sm:$0xff]
    %v463 = vld [vmem:[#allocation7 + $0x2c0] sm:$0xf]
    %v464 = vld [vmem:[#allocation7 + $0x2c4] sm:$0xff]
    %v465 = vld [vmem:[#allocation7 + $0x2cc] sm:$0xf]
    %v466 = vld [vmem:[#allocation7 + $0x2d0] sm:$0xff]
    %v467 = vld [vmem:[#allocation7 + $0x2d8] sm:$0xf]
    %v468 = vld [vmem:[#allocation7 + $0x2dc] sm:$0xff]
    %v469 = vld [vmem:[#allocation7 + $0x2e4] sm:$0xf]
    %v470 = vld [vmem:[#allocation7 + $0x2e8] sm:$0xff]
    %v471 = vld [vmem:[#allocation7 + $0x2f0] sm:$0xf]
    %v472 = vld [vmem:[#allocation7 + $0x2f4] sm:$0xff]
    %v473 = vld [vmem:[#allocation7 + $0x2fc] sm:$0xf]
    %v474 = vld [vmem:[%s6] sm:$0x7]
    %v476 = vlaneseq
    %v477 = vshrl.u32 %v476, 7
    %v478 = vsub.s32 0, %v477
    %v479 = vrot.slane %v474, %v478
    %v480 = vlaneseq
    %v481 = vshrl.u32 %v480, 7
    %v482 = vsub.s32 1, %v481
    %v483 = vrot.slane %v474, %v482
    %v484 = vlaneseq
    %v485 = vshrl.u32 %v484, 7
    %v486 = vsub.s32 2, %v485
    %v487 = vrot.slane %v474, %v486
    %v619 = vunpack.c.l.b16 %v346
    %v620 = vunpack.c.h.b16 %v346
    %v621 = vunpack.c.l.b16 %v347
    %v622 = vunpack.c.l.b16 %v348
    %v623 = vunpack.c.h.b16 %v348
    %v624 = vunpack.c.l.b16 %v349
    %v625 = vunpack.c.l.b16 %v350
    %v626 = vunpack.c.h.b16 %v350
    %v627 = vunpack.c.l.b16 %v351
    %v628 = vunpack.c.l.b16 %v352
    %v629 = vunpack.c.h.b16 %v352
    %v630 = vunpack.c.l.b16 %v353
    %v631 = vunpack.c.l.b16 %v354
    %v632 = vunpack.c.h.b16 %v354
    %v633 = vunpack.c.l.b16 %v355
    %v634 = vunpack.c.l.b16 %v356
    %v635 = vunpack.c.h.b16 %v356
    %v636 = vunpack.c.l.b16 %v357
    %v637 = vunpack.c.l.b16 %v358
    %v638 = vunpack.c.h.b16 %v358
    %v639 = vunpack.c.l.b16 %v359
    %v640 = vunpack.c.l.b16 %v360
    %v641 = vunpack.c.h.b16 %v360
    %v642 = vunpack.c.l.b16 %v361
    %v643 = vunpack.c.l.b16 %v362
    %v644 = vunpack.c.h.b16 %v362
    %v645 = vunpack.c.l.b16 %v363
    %v646 = vunpack.c.l.b16 %v364
    %v647 = vunpack.c.h.b16 %v364
    %v648 = vunpack.c.l.b16 %v365
    %v649 = vunpack.c.l.b16 %v366
    %v650 = vunpack.c.h.b16 %v366
    %v651 = vunpack.c.l.b16 %v367
    %v652 = vunpack.c.l.b16 %v368
    %v653 = vunpack.c.h.b16 %v368
    %v654 = vunpack.c.l.b16 %v369
    %v655 = vunpack.c.l.b16 %v370
    %v656 = vunpack.c.h.b16 %v370
    %v657 = vunpack.c.l.b16 %v371
    %v658 = vunpack.c.l.b16 %v372
    %v659 = vunpack.c.h.b16 %v372
    %v660 = vunpack.c.l.b16 %v373
    %v661 = vunpack.c.l.b16 %v374
    %v662 = vunpack.c.h.b16 %v374
    %v663 = vunpack.c.l.b16 %v375
    %v664 = vunpack.c.l.b16 %v376
    %v665 = vunpack.c.h.b16 %v376
    %v666 = vunpack.c.l.b16 %v377
    %v667 = vunpack.c.l.b16 %v378
    %v668 = vunpack.c.h.b16 %v378
    %v669 = vunpack.c.l.b16 %v379
    %v670 = vunpack.c.l.b16 %v380
    %v671 = vunpack.c.h.b16 %v380
    %v672 = vunpack.c.l.b16 %v381
    %v673 = vunpack.c.l.b16 %v382
    %v674 = vunpack.c.h.b16 %v382
    %v675 = vunpack.c.l.b16 %v383
    %v676 = vunpack.c.l.b16 %v384
    %v677 = vunpack.c.h.b16 %v384
    %v678 = vunpack.c.l.b16 %v385
    %v679 = vunpack.c.l.b16 %v386
    %v680 = vunpack.c.h.b16 %v386
    %v681 = vunpack.c.l.b16 %v387
    %v682 = vunpack.c.l.b16 %v388
    %v683 = vunpack.c.h.b16 %v388
    %v684 = vunpack.c.l.b16 %v389
    %v685 = vunpack.c.l.b16 %v390
    %v686 = vunpack.c.h.b16 %v390
    %v687 = vunpack.c.l.b16 %v391
    %v688 = vunpack.c.l.b16 %v392
    %v689 = vunpack.c.h.b16 %v392
    %v690 = vunpack.c.l.b16 %v393
    %v691 = vunpack.c.l.b16 %v394
    %v692 = vunpack.c.h.b16 %v394
    %v693 = vunpack.c.l.b16 %v395
    %v694 = vunpack.c.l.b16 %v396
    %v695 = vunpack.c.h.b16 %v396
    %v696 = vunpack.c.l.b16 %v397
    %v697 = vunpack.c.l.b16 %v398
    %v698 = vunpack.c.h.b16 %v398
    %v699 = vunpack.c.l.b16 %v399
    %v700 = vunpack.c.l.b16 %v400
    %v701 = vunpack.c.h.b16 %v400
    %v702 = vunpack.c.l.b16 %v401
    %v703 = vunpack.c.l.b16 %v402
    %v704 = vunpack.c.h.b16 %v402
    %v705 = vunpack.c.l.b16 %v403
    %v706 = vunpack.c.l.b16 %v404
    %v707 = vunpack.c.h.b16 %v404
    %v708 = vunpack.c.l.b16 %v405
    %v709 = vunpack.c.l.b16 %v406
    %v710 = vunpack.c.h.b16 %v406
    %v711 = vunpack.c.l.b16 %v407
    %v712 = vunpack.c.l.b16 %v408
    %v713 = vunpack.c.h.b16 %v408
    %v714 = vunpack.c.l.b16 %v409
    %v715 = vunpack.c.l.b16 %v410
    %v716 = vunpack.c.h.b16 %v410
    %v717 = vunpack.c.l.b16 %v411
    %v718 = vunpack.c.l.b16 %v412
    %v719 = vunpack.c.h.b16 %v412
    %v720 = vunpack.c.l.b16 %v413
    %v721 = vunpack.c.l.b16 %v414
    %v722 = vunpack.c.h.b16 %v414
    %v723 = vunpack.c.l.b16 %v415
    %v724 = vunpack.c.l.b16 %v416
    %v725 = vunpack.c.h.b16 %v416
    %v726 = vunpack.c.l.b16 %v417
    %v727 = vunpack.c.l.b16 %v418
    %v728 = vunpack.c.h.b16 %v418
    %v729 = vunpack.c.l.b16 %v419
    %v730 = vunpack.c.l.b16 %v420
    %v731 = vunpack.c.h.b16 %v420
    %v732 = vunpack.c.l.b16 %v421
    %v733 = vunpack.c.l.b16 %v422
    %v734 = vunpack.c.h.b16 %v422
    %v735 = vunpack.c.l.b16 %v423
    %v736 = vunpack.c.l.b16 %v424
    %v737 = vunpack.c.h.b16 %v424
    %v738 = vunpack.c.l.b16 %v425
    %v739 = vunpack.c.l.b16 %v426
    %v740 = vunpack.c.h.b16 %v426
    %v741 = vunpack.c.l.b16 %v427
    %v742 = vunpack.c.l.b16 %v428
    %v743 = vunpack.c.h.b16 %v428
    %v744 = vunpack.c.l.b16 %v429
    %v745 = vunpack.c.l.b16 %v430
    %v746 = vunpack.c.h.b16 %v430
    %v747 = vunpack.c.l.b16 %v431
    %v748 = vunpack.c.l.b16 %v432
    %v749 = vunpack.c.h.b16 %v432
    %v750 = vunpack.c.l.b16 %v433
    %v751 = vunpack.c.l.b16 %v434
    %v752 = vunpack.c.h.b16 %v434
    %v753 = vunpack.c.l.b16 %v435
    %v754 = vunpack.c.l.b16 %v436
    %v755 = vunpack.c.h.b16 %v436
    %v756 = vunpack.c.l.b16 %v437
    %v757 = vunpack.c.l.b16 %v438
    %v758 = vunpack.c.h.b16 %v438
    %v759 = vunpack.c.l.b16 %v439
    %v760 = vunpack.c.l.b16 %v440
    %v761 = vunpack.c.h.b16 %v440
    %v762 = vunpack.c.l.b16 %v441
    %v763 = vunpack.c.l.b16 %v442
    %v764 = vunpack.c.h.b16 %v442
    %v765 = vunpack.c.l.b16 %v443
    %v766 = vunpack.c.l.b16 %v444
    %v767 = vunpack.c.h.b16 %v444
    %v768 = vunpack.c.l.b16 %v445
    %v769 = vunpack.c.l.b16 %v446
    %v770 = vunpack.c.h.b16 %v446
    %v771 = vunpack.c.l.b16 %v447
    %v772 = vunpack.c.l.b16 %v448
    %v773 = vunpack.c.h.b16 %v448
    %v774 = vunpack.c.l.b16 %v449
    %v775 = vunpack.c.l.b16 %v450
    %v776 = vunpack.c.h.b16 %v450
    %v777 = vunpack.c.l.b16 %v451
    %v778 = vunpack.c.l.b16 %v452
    %v779 = vunpack.c.h.b16 %v452
    %v780 = vunpack.c.l.b16 %v453
    %v781 = vunpack.c.l.b16 %v454
    %v782 = vunpack.c.h.b16 %v454
    %v783 = vunpack.c.l.b16 %v455
    %v784 = vunpack.c.l.b16 %v456
    %v785 = vunpack.c.h.b16 %v456
    %v786 = vunpack.c.l.b16 %v457
    %v787 = vunpack.c.l.b16 %v458
    %v788 = vunpack.c.h.b16 %v458
    %v789 = vunpack.c.l.b16 %v459
    %v790 = vunpack.c.l.b16 %v460
    %v791 = vunpack.c.h.b16 %v460
    %v792 = vunpack.c.l.b16 %v461
    %v793 = vunpack.c.l.b16 %v462
    %v794 = vunpack.c.h.b16 %v462
    %v795 = vunpack.c.l.b16 %v463
    %v796 = vunpack.c.l.b16 %v464
    %v797 = vunpack.c.h.b16 %v464
    %v798 = vunpack.c.l.b16 %v465
    %v799 = vunpack.c.l.b16 %v466
    %v800 = vunpack.c.h.b16 %v466
    %v801 = vunpack.c.l.b16 %v467
    %v802 = vunpack.c.l.b16 %v468
    %v803 = vunpack.c.h.b16 %v468
    %v804 = vunpack.c.l.b16 %v469
    %v805 = vunpack.c.l.b16 %v470
    %v806 = vunpack.c.h.b16 %v470
    %v807 = vunpack.c.l.b16 %v471
    %v808 = vunpack.c.l.b16 %v472
    %v809 = vunpack.c.h.b16 %v472
    %v810 = vunpack.c.l.b16 %v473
    %v811 = vpack.c.b16 %v622, %v619
    %v812 = vpack.c.b16 %v623, %v620
    %v813 = vpack.c.b16 %v624, %v621
    %v814 = vpack.c.b16 %v628, %v625
    %v815 = vpack.c.b16 %v629, %v626
    %v816 = vpack.c.b16 %v630, %v627
    %v817 = vpack.c.b16 %v634, %v631
    %v818 = vpack.c.b16 %v635, %v632
    %v819 = vpack.c.b16 %v636, %v633
    %v820 = vpack.c.b16 %v640, %v637
    %v821 = vpack.c.b16 %v641, %v638
    %v822 = vpack.c.b16 %v642, %v639
    %v823 = vpack.c.b16 %v646, %v643
    %v824 = vpack.c.b16 %v647, %v644
    %v825 = vpack.c.b16 %v648, %v645
    %v826 = vpack.c.b16 %v652, %v649
    %v827 = vpack.c.b16 %v653, %v650
    %v828 = vpack.c.b16 %v654, %v651
    %v829 = vpack.c.b16 %v658, %v655
    %v830 = vpack.c.b16 %v659, %v656
    %v831 = vpack.c.b16 %v660, %v657
    %v832 = vpack.c.b16 %v664, %v661
    %v833 = vpack.c.b16 %v665, %v662
    %v834 = vpack.c.b16 %v666, %v663
    %v835 = vpack.c.b16 %v670, %v667
    %v836 = vpack.c.b16 %v671, %v668
    %v837 = vpack.c.b16 %v672, %v669
    %v838 = vpack.c.b16 %v676, %v673
    %v839 = vpack.c.b16 %v677, %v674
    %v840 = vpack.c.b16 %v678, %v675
    %v841 = vpack.c.b16 %v682, %v679
    %v842 = vpack.c.b16 %v683, %v680
    %v843 = vpack.c.b16 %v684, %v681
    %v844 = vpack.c.b16 %v688, %v685
    %v845 = vpack.c.b16 %v689, %v686
    %v846 = vpack.c.b16 %v690, %v687
    %v847 = vpack.c.b16 %v694, %v691
    %v848 = vpack.c.b16 %v695, %v692
    %v849 = vpack.c.b16 %v696, %v693
    %v850 = vpack.c.b16 %v700, %v697
    %v851 = vpack.c.b16 %v701, %v698
    %v852 = vpack.c.b16 %v702, %v699
    %v853 = vpack.c.b16 %v706, %v703
    %v854 = vpack.c.b16 %v707, %v704
    %v855 = vpack.c.b16 %v708, %v705
    %v856 = vpack.c.b16 %v712, %v709
    %v857 = vpack.c.b16 %v713, %v710
    %v858 = vpack.c.b16 %v714, %v711
    %v859 = vpack.c.b16 %v718, %v715
    %v860 = vpack.c.b16 %v719, %v716
    %v861 = vpack.c.b16 %v720, %v717
    %v862 = vpack.c.b16 %v724, %v721
    %v863 = vpack.c.b16 %v725, %v722
    %v864 = vpack.c.b16 %v726, %v723
    %v865 = vpack.c.b16 %v730, %v727
    %v866 = vpack.c.b16 %v731, %v728
    %v867 = vpack.c.b16 %v732, %v729
    %v868 = vpack.c.b16 %v736, %v733
    %v869 = vpack.c.b16 %v737, %v734
    %v870 = vpack.c.b16 %v738, %v735
    %v871 = vpack.c.b16 %v742, %v739
    %v872 = vpack.c.b16 %v743, %v740
    %v873 = vpack.c.b16 %v744, %v741
    %v874 = vpack.c.b16 %v748, %v745
    %v875 = vpack.c.b16 %v749, %v746
    %v876 = vpack.c.b16 %v750, %v747
    %v877 = vpack.c.b16 %v754, %v751
    %v878 = vpack.c.b16 %v755, %v752
    %v879 = vpack.c.b16 %v756, %v753
    %v880 = vpack.c.b16 %v760, %v757
    %v881 = vpack.c.b16 %v761, %v758
    %v882 = vpack.c.b16 %v762, %v759
    %v883 = vpack.c.b16 %v766, %v763
    %v884 = vpack.c.b16 %v767, %v764
    %v885 = vpack.c.b16 %v768, %v765
    %v886 = vpack.c.b16 %v772, %v769
    %v887 = vpack.c.b16 %v773, %v770
    %v888 = vpack.c.b16 %v774, %v771
    %v889 = vpack.c.b16 %v778, %v775
    %v890 = vpack.c.b16 %v779, %v776
    %v891 = vpack.c.b16 %v780, %v777
    %v892 = vpack.c.b16 %v784, %v781
    %v893 = vpack.c.b16 %v785, %v782
    %v894 = vpack.c.b16 %v786, %v783
    %v895 = vpack.c.b16 %v790, %v787
    %v896 = vpack.c.b16 %v791, %v788
    %v897 = vpack.c.b16 %v792, %v789
    %v898 = vpack.c.b16 %v796, %v793
    %v899 = vpack.c.b16 %v797, %v794
    %v900 = vpack.c.b16 %v798, %v795
    %v901 = vpack.c.b16 %v802, %v799
    %v902 = vpack.c.b16 %v803, %v800
    %v903 = vpack.c.b16 %v804, %v801
    %v904 = vpack.c.b16 %v808, %v805
    %v905 = vpack.c.b16 %v809, %v806
    %v906 = vpack.c.b16 %v810, %v807
    %1003 = vmatprep.subr.bf16.mxu0 %v812
    %1004 = vmatpush1.bf16.msra.mxu0 %v811
    %1005 = vmatprep.subr.bf16.mxu0 %v815
    %1006 = vmatpush1.bf16.msra.mxu0 %v814
    %1007 = vmatprep.subr.bf16.mxu0 %v818
    %1008 = vmatpush1.bf16.msra.mxu0 %v817
    %1009 = vmatprep.subr.bf16.mxu0 %v821
    %1010 = vmatpush1.bf16.msra.mxu0 %v820
    %1011 = vmatprep.subr.bf16.mxu0 %v824
    %1012 = vmatpush1.bf16.msra.mxu0 %v823
    %1013 = vmatprep.subr.bf16.mxu0 %v827
    %1014 = vmatpush1.bf16.msra.mxu0 %v826
    %1015 = vmatprep.subr.bf16.mxu0 %v830
    %1016 = vmatpush1.bf16.msra.mxu0 %v829
    %1017 = vmatprep.subr.bf16.mxu0 %v833
    %1018 = vmatpush1.bf16.msra.mxu0 %v832
    %1019 = vmatprep.subr.bf16.mxu0 %v836
    %1020 = vmatpush1.bf16.msra.mxu0 %v835
    %1021 = vmatprep.subr.bf16.mxu0 %v839
    %1022 = vmatpush1.bf16.msra.mxu0 %v838
    %1023 = vmatprep.subr.bf16.mxu0 %v842
    %1024 = vmatpush1.bf16.msra.mxu0 %v841
    %1025 = vmatprep.subr.bf16.mxu0 %v845
    %1026 = vmatpush1.bf16.msra.mxu0 %v844
    %1027 = vmatprep.subr.bf16.mxu0 %v848
    %1028 = vmatpush1.bf16.msra.mxu0 %v847
    %1029 = vmatprep.subr.bf16.mxu0 %v851
    %1030 = vmatpush1.bf16.msra.mxu0 %v850
    %1031 = vmatprep.subr.bf16.mxu0 %v854
    %1032 = vmatpush1.bf16.msra.mxu0 %v853
    %1033 = vmatprep.subr.bf16.mxu0 %v857
    %1034 = vmatpush1.bf16.msra.mxu0 %v856
    %1035 = vmatprep.mubr.bf16.mxu0 %v343
    %1036 = vmatmul.mubr.bf16.gmra.mrb[0].mxu0 %v342
    %v1037 = vpop.f32.mrb[0].mxu0
    %v1038 = vadd.f32 %v479, %v1037
    %v1039 = vpop.f32.mrb[0].mxu0
    %v1040 = vadd.f32 %v483, %v1039
    %v1041 = vpop.f32.mrb[0].mxu0
    %v1042 = vpop.f32.mrb[0].mxu0
    %1043 = vdwg.mxu0
    %1044 = vmatprep.subr.bf16.mxu0 %v860
    %1045 = vmatpush1.bf16.msra.mxu0 %v859
    %1046 = vmatprep.subr.bf16.mxu0 %v863
    %1047 = vmatpush1.bf16.msra.mxu0 %v862
    %1048 = vmatprep.subr.bf16.mxu0 %v866
    %1049 = vmatpush1.bf16.msra.mxu0 %v865
    %1050 = vmatprep.subr.bf16.mxu0 %v869
    %1051 = vmatpush1.bf16.msra.mxu0 %v868
    %1052 = vmatprep.subr.bf16.mxu0 %v872
    %1053 = vmatpush1.bf16.msra.mxu0 %v871
    %1054 = vmatprep.subr.bf16.mxu0 %v875
    %1055 = vmatpush1.bf16.msra.mxu0 %v874
    %1056 = vmatprep.subr.bf16.mxu0 %v878
    %1057 = vmatpush1.bf16.msra.mxu0 %v877
    %1058 = vmatprep.subr.bf16.mxu0 %v881
    %1059 = vmatpush1.bf16.msra.mxu0 %v880
    %1060 = vmatprep.subr.bf16.mxu0 %v884
    %1061 = vmatpush1.bf16.msra.mxu0 %v883
    %1062 = vmatprep.subr.bf16.mxu0 %v887
    %1063 = vmatpush1.bf16.msra.mxu0 %v886
    %1064 = vmatprep.subr.bf16.mxu0 %v890
    %1065 = vmatpush1.bf16.msra.mxu0 %v889
    %1066 = vmatprep.subr.bf16.mxu0 %v893
    %1067 = vmatpush1.bf16.msra.mxu0 %v892
    %1068 = vmatprep.subr.bf16.mxu0 %v896
    %1069 = vmatpush1.bf16.msra.mxu0 %v895
    %1070 = vmatprep.subr.bf16.mxu0 %v899
    %1071 = vmatpush1.bf16.msra.mxu0 %v898
    %1072 = vmatprep.subr.bf16.mxu0 %v902
    %1073 = vmatpush1.bf16.msra.mxu0 %v901
    %1074 = vmatprep.subr.bf16.mxu0 %v905
    %1075 = vmatpush1.bf16.msra.mxu0 %v904
    %1076 = vmatprep.mubr.bf16.mxu0 %v345
    %1077 = vmatmul.mubr.bf16.gmra.mrb[0].mxu0 %v344
    %v1078 = vpop.f32.mrb[0].mxu0
    %v1079 = vadd.f32 %v1038, %v1078
    %v1080 = vpop.f32.mrb[0].mxu0
    %v1081 = vadd.f32 %v1040, %v1080
    %v1082 = vpop.f32.mrb[0].mxu0
    %v1083 = vpop.f32.mrb[0].mxu0
    %1084 = vdwg.mxu0
    %1085 = vmatprep.subr.bf16.mxu0 0
    %1086 = vmatpush1.bf16.msra.mxu0 %v813
    %1087 = vmatprep.subr.bf16.mxu0 0
    %1088 = vmatpush1.bf16.msra.mxu0 %v816
    %1089 = vmatprep.subr.bf16.mxu0 0
    %1090 = vmatpush1.bf16.msra.mxu0 %v819
    %1091 = vmatprep.subr.bf16.mxu0 0
    %1092 = vmatpush1.bf16.msra.mxu0 %v822
    %1093 = vmatprep.subr.bf16.mxu0 0
    %1094 = vmatpush1.bf16.msra.mxu0 %v825
    %1095 = vmatprep.subr.bf16.mxu0 0
    %1096 = vmatpush1.bf16.msra.mxu0 %v828
    %1097 = vmatprep.subr.bf16.mxu0 0
    %1098 = vmatpush1.bf16.msra.mxu0 %v831
    %1099 = vmatprep.subr.bf16.mxu0 0
    %1100 = vmatpush1.bf16.msra.mxu0 %v834
    %1101 = vmatprep.subr.bf16.mxu0 0
    %1102 = vmatpush1.bf16.msra.mxu0 %v837
    %1103 = vmatprep.subr.bf16.mxu0 0
    %1104 = vmatpush1.bf16.msra.mxu0 %v840
    %1105 = vmatprep.subr.bf16.mxu0 0
    %1106 = vmatpush1.bf16.msra.mxu0 %v843
    %1107 = vmatprep.subr.bf16.mxu0 0
    %1108 = vmatpush1.bf16.msra.mxu0 %v846
    %1109 = vmatprep.subr.bf16.mxu0 0
    %1110 = vmatpush1.bf16.msra.mxu0 %v849
    %1111 = vmatprep.subr.bf16.mxu0 0
    %1112 = vmatpush1.bf16.msra.mxu0 %v852
    %1113 = vmatprep.subr.bf16.mxu0 0
    %1114 = vmatpush1.bf16.msra.mxu0 %v855
    %1115 = vmatprep.subr.bf16.mxu0 0
    %1116 = vmatpush1.bf16.msra.mxu0 %v858
    %1117 = vmatprep.mubr.bf16.mxu0 %v343
    %1118 = vmatmul.mubr.bf16.gmra.mrb[0].mxu0 %v342
    %v1119 = vpop.f32.mrb[0].mxu0
    %v1120 = vadd.f32 %v487, %v1119
    %v1121 = vpop.f32.mrb[0].mxu0
    %v1122 = vpop.f32.mrb[0].mxu0
    %v1123 = vpop.f32.mrb[0].mxu0
    %1124 = vdwg.mxu0
    %1125 = vmatprep.subr.bf16.mxu0 0
    %1126 = vmatpush1.bf16.msra.mxu0 %v861
    %1127 = vmatprep.subr.bf16.mxu0 0
    %1128 = vmatpush1.bf16.msra.mxu0 %v864
    %1129 = vmatprep.subr.bf16.mxu0 0
    %1130 = vmatpush1.bf16.msra.mxu0 %v867
    %1131 = vmatprep.subr.bf16.mxu0 0
    %1132 = vmatpush1.bf16.msra.mxu0 %v870
    %1133 = vmatprep.subr.bf16.mxu0 0
    %1134 = vmatpush1.bf16.msra.mxu0 %v873
    %1135 = vmatprep.subr.bf16.mxu0 0
    %1136 = vmatpush1.bf16.msra.mxu0 %v876
    %1137 = vmatprep.subr.bf16.mxu0 0
    %1138 = vmatpush1.bf16.msra.mxu0 %v879
    %1139 = vmatprep.subr.bf16.mxu0 0
    %1140 = vmatpush1.bf16.msra.mxu0 %v882
    %1141 = vmatprep.subr.bf16.mxu0 0
    %1142 = vmatpush1.bf16.msra.mxu0 %v885
    %1143 = vmatprep.subr.bf16.mxu0 0
    %1144 = vmatpush1.bf16.msra.mxu0 %v888
    %1145 = vmatprep.subr.bf16.mxu0 0
    %1146 = vmatpush1.bf16.msra.mxu0 %v891
    %1147 = vmatprep.subr.bf16.mxu0 0
    %1148 = vmatpush1.bf16.msra.mxu0 %v894
    %1149 = vmatprep.subr.bf16.mxu0 0
    %1150 = vmatpush1.bf16.msra.mxu0 %v897
    %1151 = vmatprep.subr.bf16.mxu0 0
    %1152 = vmatpush1.bf16.msra.mxu0 %v900
    %1153 = vmatprep.subr.bf16.mxu0 0
    %1154 = vmatpush1.bf16.msra.mxu0 %v903
    %1155 = vmatprep.subr.bf16.mxu0 0
    %1156 = vmatpush1.bf16.msra.mxu0 %v906
    %1157 = vmatprep.mubr.bf16.mxu0 %v345
    %1158 = vmatmul.mubr.bf16.gmra.mrb[0].mxu0 %v344
    %v1159 = vpop.f32.mrb[0].mxu0
    %v1160 = vadd.f32 %v1120, %v1159
    %v1161 = vpop.f32.mrb[0].mxu0
    %v1162 = vpop.f32.mrb[0].mxu0
    %v1163 = vpop.f32.mrb[0].mxu0
    %1164 = vdwg.mxu0
    %v1165 = vld [vmem:[%s7] sm:$0x7]
    %v1166 = vld [vmem:[%s8] sm:$0x7]
    %v1167 = vadd.f32 %v1079, %v1081
    %v1168 = vadd.f32 %v1167, %v1160
    %1169 = vadd.xlane.f32.xlu0 %v1168
    %v1170 = vpop.xlane.xlu0 %1169
    %v1171 = vmul.f32 %v1170, 0.0033333334
    %v1172 = vmul.f32 %v1079, %v1079
    %v1173 = vmul.f32 %v1081, %v1081
    %v1174 = vmul.f32 %v1160, %v1160
    %v1175 = vadd.f32 %v1172, %v1173
    %v1176 = vadd.f32 %v1175, %v1174
    %1177 = vadd.xlane.f32.xlu0 %v1176
    %v1178 = vpop.xlane.xlu0 %1177
    %v1179 = vmul.f32 %v1178, 0.0033333334
    %v1180 = vmul.f32 %v1171, %v1171
    %v1181 = vsub.f32 %v1179, %v1180
    %v1182 = vmax.f32 %v1181, 0.0
    %v1183 = vadd.f32 %v1182, 1e-05
    %v1184 = vrsqrt.pop %v1183
    %v1185 = vsub.f32 %v1079, %v1171
    %v1186 = vsub.f32 %v1081, %v1171
    %v1187 = vsub.f32 %v1160, %v1171
    %v1188 = vmul.f32 %v1185, %v1184
    %v1189 = vmul.f32 %v1186, %v1184
    %v1190 = vmul.f32 %v1187, %v1184
    %v1192 = vlaneseq
    %v1193 = vshrl.u32 %v1192, 7
    %v1194 = vsub.s32 0, %v1193
    %v1195 = vrot.slane %v1165, %v1194
    %v1196 = vlaneseq
    %v1197 = vshrl.u32 %v1196, 7
    %v1198 = vsub.s32 1, %v1197
    %v1199 = vrot.slane %v1165, %v1198
    %v1200 = vlaneseq
    %v1201 = vshrl.u32 %v1200, 7
    %v1202 = vsub.s32 2, %v1201
    %v1203 = vrot.slane %v1165, %v1202
    %v1207 = vmul.f32 %v1188, %v1195
    %v1208 = vmul.f32 %v1189, %v1199
    %v1209 = vmul.f32 %v1190, %v1203
    %v1211 = vlaneseq
    %v1212 = vshrl.u32 %v1211, 7
    %v1213 = vsub.s32 0, %v1212
    %v1214 = vrot.slane %v1166, %v1213
    %v1215 = vlaneseq
    %v1216 = vshrl.u32 %v1215, 7
    %v1217 = vsub.s32 1, %v1216
    %v1218 = vrot.slane %v1166, %v1217
    %v1219 = vlaneseq
    %v1220 = vshrl.u32 %v1219, 7
    %v1221 = vsub.s32 2, %v1220
    %v1222 = vrot.slane %v1166, %v1221
    %v1226 = vadd.f32 %v1207, %v1214
    %v1227 = vadd.f32 %v1208, %v1218
    %v1228 = vadd.f32 %v1209, %v1222
    %v1229 = vmax.f32 %v1226, 0.0
    %v1230 = vmax.f32 %v1227, 0.0
    %v1231 = vmax.f32 %v1228, 0.0
    %v1232 = vpack.c.bf16 %v1229, %v1229
    %v1233 = vpack.c.bf16 %v1230, %v1230
    %v1234 = vpack.c.bf16 %v1231, %v1231
    %v1235 = vld [vmem:[#allocation8] sm:$0xf]
    %v1236 = vld [vmem:[#allocation8 + $0x4] sm:$0xf]
    %v1237 = vld [vmem:[#allocation8 + $0x8] sm:$0xf]
    %v1238 = vld [vmem:[#allocation8 + $0xc] sm:$0xf]
    %v1239 = vld [vmem:[#allocation8 + $0x10] sm:$0xf]
    %v1240 = vld [vmem:[#allocation8 + $0x14] sm:$0xf]
    %v1241 = vld [vmem:[#allocation8 + $0x18] sm:$0xf]
    %v1242 = vld [vmem:[#allocation8 + $0x1c] sm:$0xf]
    %v1243 = vld [vmem:[#allocation8 + $0x20] sm:$0xf]
    %v1244 = vld [vmem:[#allocation8 + $0x24] sm:$0xf]
    %v1245 = vld [vmem:[#allocation8 + $0x28] sm:$0xf]
    %v1246 = vld [vmem:[#allocation8 + $0x2c] sm:$0xf]
    %v1247 = vld [vmem:[#allocation8 + $0x30] sm:$0xf]
    %v1248 = vld [vmem:[#allocation8 + $0x34] sm:$0xf]
    %v1249 = vld [vmem:[#allocation8 + $0x38] sm:$0xf]
    %v1250 = vld [vmem:[#allocation8 + $0x3c] sm:$0xf]
    %v1251 = vld [vmem:[#allocation8 + $0x40] sm:$0xf]
    %v1252 = vld [vmem:[#allocation8 + $0x44] sm:$0xf]
    %v1253 = vld [vmem:[#allocation8 + $0x48] sm:$0xf]
    %v1254 = vld [vmem:[#allocation8 + $0x4c] sm:$0xf]
    %v1255 = vld [vmem:[#allocation8 + $0x50] sm:$0xf]
    %v1256 = vld [vmem:[#allocation8 + $0x54] sm:$0xf]
    %v1257 = vld [vmem:[#allocation8 + $0x58] sm:$0xf]
    %v1258 = vld [vmem:[#allocation8 + $0x5c] sm:$0xf]
    %v1259 = vld [vmem:[#allocation8 + $0x60] sm:$0xf]
    %v1260 = vld [vmem:[#allocation8 + $0x64] sm:$0xf]
    %v1261 = vld [vmem:[#allocation8 + $0x68] sm:$0xf]
    %v1262 = vld [vmem:[#allocation8 + $0x6c] sm:$0xf]
    %v1263 = vld [vmem:[#allocation8 + $0x70] sm:$0xf]
    %v1264 = vld [vmem:[#allocation8 + $0x74] sm:$0xf]
    %v1265 = vld [vmem:[#allocation8 + $0x78] sm:$0xf]
    %v1266 = vld [vmem:[#allocation8 + $0x7c] sm:$0xf]
    %v1267 = vld [vmem:[#allocation8 + $0x80] sm:$0xf]
    %v1268 = vld [vmem:[#allocation8 + $0x84] sm:$0xf]
    %v1269 = vld [vmem:[#allocation8 + $0x88] sm:$0xf]
    %v1270 = vld [vmem:[#allocation8 + $0x8c] sm:$0xf]
    %v1271 = vld [vmem:[#allocation8 + $0x90] sm:$0xf]
    %v1272 = vld [vmem:[#allocation8 + $0x94] sm:$0xf]
    %v1273 = vld [vmem:[#allocation8 + $0x98] sm:$0xf]
    %v1274 = vld [vmem:[#allocation8 + $0x9c] sm:$0xf]
    %v1275 = vld [vmem:[#allocation8 + $0xa0] sm:$0xf]
    %v1276 = vld [vmem:[#allocation8 + $0xa4] sm:$0xf]
    %v1277 = vld [vmem:[#allocation8 + $0xa8] sm:$0xf]
    %v1278 = vld [vmem:[#allocation8 + $0xac] sm:$0xf]
    %v1279 = vld [vmem:[#allocation8 + $0xb0] sm:$0xf]
    %v1280 = vld [vmem:[#allocation8 + $0xb4] sm:$0xf]
    %v1281 = vld [vmem:[#allocation8 + $0xb8] sm:$0xf]
    %v1282 = vld [vmem:[#allocation8 + $0xbc] sm:$0xf]
    %v1283 = vld [vmem:[%s10] sm:$0x1]
    %v1285 = vlaneseq
    %v1286 = vshrl.u32 %v1285, 7
    %v1287 = vsub.s32 0, %v1286
    %v1288 = vrot.slane %v1283, %v1287
    %v1338 = vunpack.c.l.b16 %v1235
    %v1339 = vunpack.c.l.b16 %v1236
    %v1340 = vunpack.c.l.b16 %v1237
    %v1341 = vunpack.c.l.b16 %v1238
    %v1342 = vunpack.c.l.b16 %v1239
    %v1343 = vunpack.c.l.b16 %v1240
    %v1344 = vunpack.c.l.b16 %v1241
    %v1345 = vunpack.c.l.b16 %v1242
    %v1346 = vunpack.c.l.b16 %v1243
    %v1347 = vunpack.c.l.b16 %v1244
    %v1348 = vunpack.c.l.b16 %v1245
    %v1349 = vunpack.c.l.b16 %v1246
    %v1350 = vunpack.c.l.b16 %v1247
    %v1351 = vunpack.c.l.b16 %v1248
    %v1352 = vunpack.c.l.b16 %v1249
    %v1353 = vunpack.c.l.b16 %v1250
    %v1354 = vunpack.c.l.b16 %v1251
    %v1355 = vunpack.c.l.b16 %v1252
    %v1356 = vunpack.c.l.b16 %v1253
    %v1357 = vunpack.c.l.b16 %v1254
    %v1358 = vunpack.c.l.b16 %v1255
    %v1359 = vunpack.c.l.b16 %v1256
    %v1360 = vunpack.c.l.b16 %v1257
    %v1361 = vunpack.c.l.b16 %v1258
    %v1362 = vunpack.c.l.b16 %v1259
    %v1363 = vunpack.c.l.b16 %v1260
    %v1364 = vunpack.c.l.b16 %v1261
    %v1365 = vunpack.c.l.b16 %v1262
    %v1366 = vunpack.c.l.b16 %v1263
    %v1367 = vunpack.c.l.b16 %v1264
    %v1368 = vunpack.c.l.b16 %v1265
    %v1369 = vunpack.c.l.b16 %v1266
    %v1370 = vunpack.c.l.b16 %v1267
    %v1371 = vunpack.c.l.b16 %v1268
    %v1372 = vunpack.c.l.b16 %v1269
    %v1373 = vunpack.c.l.b16 %v1270
    %v1374 = vunpack.c.l.b16 %v1271
    %v1375 = vunpack.c.l.b16 %v1272
    %v1376 = vunpack.c.l.b16 %v1273
    %v1377 = vunpack.c.l.b16 %v1274
    %v1378 = vunpack.c.l.b16 %v1275
    %v1379 = vunpack.c.l.b16 %v1276
    %v1380 = vunpack.c.l.b16 %v1277
    %v1381 = vunpack.c.l.b16 %v1278
    %v1382 = vunpack.c.l.b16 %v1279
    %v1383 = vunpack.c.l.b16 %v1280
    %v1384 = vunpack.c.l.b16 %v1281
    %v1385 = vunpack.c.l.b16 %v1282
    %v1386 = vpack.c.b16 %v1339, %v1338
    %v1387 = vpack.c.b16 %v1341, %v1340
    %v1388 = vpack.c.b16 %v1343, %v1342
    %v1389 = vpack.c.b16 %v1345, %v1344
    %v1390 = vpack.c.b16 %v1347, %v1346
    %v1391 = vpack.c.b16 %v1349, %v1348
    %v1392 = vpack.c.b16 %v1351, %v1350
    %v1393 = vpack.c.b16 %v1353, %v1352
    %v1394 = vpack.c.b16 %v1355, %v1354
    %v1395 = vpack.c.b16 %v1357, %v1356
    %v1396 = vpack.c.b16 %v1359, %v1358
    %v1397 = vpack.c.b16 %v1361, %v1360
    %v1398 = vpack.c.b16 %v1363, %v1362
    %v1399 = vpack.c.b16 %v1365, %v1364
    %v1400 = vpack.c.b16 %v1367, %v1366
    %v1401 = vpack.c.b16 %v1369, %v1368
    %v1402 = vpack.c.b16 %v1371, %v1370
    %v1403 = vpack.c.b16 %v1373, %v1372
    %v1404 = vpack.c.b16 %v1375, %v1374
    %v1405 = vpack.c.b16 %v1377, %v1376
    %v1406 = vpack.c.b16 %v1379, %v1378
    %v1407 = vpack.c.b16 %v1381, %v1380
    %v1408 = vpack.c.b16 %v1383, %v1382
    %v1409 = vpack.c.b16 %v1385, %v1384
    %1434 = vmatprep.subr.bf16.mxu0 0
    %1435 = vmatpush1.bf16.msra.mxu0 %v1386
    %1436 = vmatprep.subr.bf16.mxu0 0
    %1437 = vmatpush1.bf16.msra.mxu0 %v1387
    %1438 = vmatprep.subr.bf16.mxu0 0
    %1439 = vmatpush1.bf16.msra.mxu0 %v1388
    %1440 = vmatprep.subr.bf16.mxu0 0
    %1441 = vmatpush1.bf16.msra.mxu0 %v1389
    %1442 = vmatprep.subr.bf16.mxu0 0
    %1443 = vmatpush1.bf16.msra.mxu0 %v1390
    %1444 = vmatprep.subr.bf16.mxu0 0
    %1445 = vmatpush1.bf16.msra.mxu0 %v1391
    %1446 = vmatprep.subr.bf16.mxu0 0
    %1447 = vmatpush1.bf16.msra.mxu0 %v1392
    %1448 = vmatprep.subr.bf16.mxu0 0
    %1449 = vmatpush1.bf16.msra.mxu0 %v1393
    %1450 = vmatprep.subr.bf16.mxu0 0
    %1451 = vmatpush1.bf16.msra.mxu0 %v1394
    %1452 = vmatprep.subr.bf16.mxu0 0
    %1453 = vmatpush1.bf16.msra.mxu0 %v1395
    %1454 = vmatprep.subr.bf16.mxu0 0
    %1455 = vmatpush1.bf16.msra.mxu0 %v1396
    %1456 = vmatprep.subr.bf16.mxu0 0
    %1457 = vmatpush1.bf16.msra.mxu0 %v1397
    %1458 = vmatprep.subr.bf16.mxu0 0
    %1459 = vmatpush1.bf16.msra.mxu0 %v1398
    %1460 = vmatprep.subr.bf16.mxu0 0
    %1461 = vmatpush1.bf16.msra.mxu0 %v1399
    %1462 = vmatprep.subr.bf16.mxu0 0
    %1463 = vmatpush1.bf16.msra.mxu0 %v1400
    %1464 = vmatprep.subr.bf16.mxu0 0
    %1465 = vmatpush1.bf16.msra.mxu0 %v1401
    %1466 = vmatprep.mubr.bf16.mxu0 %v1233
    %1467 = vmatmul.mubr.bf16.gmra.mrb[0].mxu0 %v1232
    %v1468 = vpop.f32.mrb[0].mxu0
    %v1469 = vadd.f32 %v1288, %v1468
    %v1470 = vpop.f32.mrb[0].mxu0
    %v1471 = vpop.f32.mrb[0].mxu0
    %v1472 = vpop.f32.mrb[0].mxu0
    %1473 = vdwg.mxu0
    %1474 = vmatprep.subr.bf16.mxu0 0
    %1475 = vmatpush1.bf16.msra.mxu0 %v1402
    %1476 = vmatprep.subr.bf16.mxu0 0
    %1477 = vmatpush1.bf16.msra.mxu0 %v1403
    %1478 = vmatprep.subr.bf16.mxu0 0
    %1479 = vmatpush1.bf16.msra.mxu0 %v1404
    %1480 = vmatprep.subr.bf16.mxu0 0
    %1481 = vmatpush1.bf16.msra.mxu0 %v1405
    %1482 = vmatprep.subr.bf16.mxu0 0
    %1483 = vmatpush1.bf16.msra.mxu0 %v1406
    %1484 = vmatprep.subr.bf16.mxu0 0
    %1485 = vmatpush1.bf16.msra.mxu0 %v1407
    %1486 = vmatprep.subr.bf16.mxu0 0
    %1487 = vmatpush1.bf16.msra.mxu0 %v1408
    %1488 = vmatprep.subr.bf16.mxu0 0
    %1489 = vmatpush1.bf16.msra.mxu0 %v1409
    %1490 = vmatprep.subr.bf16.mxu0 0
    %1491 = vmatpush1.bf16.msra.mxu0 0
    %1492 = vmatprep.subr.bf16.mxu0 0
    %1493 = vmatpush1.bf16.msra.mxu0 0
    %1494 = vmatprep.subr.bf16.mxu0 0
    %1495 = vmatpush1.bf16.msra.mxu0 0
    %1496 = vmatprep.subr.bf16.mxu0 0
    %1497 = vmatpush1.bf16.msra.mxu0 0
    %1498 = vmatprep.subr.bf16.mxu0 0
    %1499 = vmatpush1.bf16.msra.mxu0 0
    %1500 = vmatprep.subr.bf16.mxu0 0
    %1501 = vmatpush1.bf16.msra.mxu0 0
    %1502 = vmatprep.subr.bf16.mxu0 0
    %1503 = vmatpush1.bf16.msra.mxu0 0
    %1504 = vmatprep.subr.bf16.mxu0 0
    %1505 = vmatpush1.bf16.msra.mxu0 0
    %1506 = vmatprep.mubr.bf16.mxu0 0
    %1507 = vmatmul.mubr.bf16.gmra.mrb[0].mxu0 %v1234
    %v1508 = vpop.f32.mrb[0].mxu0
    %v1509 = vadd.f32 %v1469, %v1508
    %v1510 = vpop.f32.mrb[0].mxu0
    %v1511 = vpop.f32.mrb[0].mxu0
    %v1512 = vpop.f32.mrb[0].mxu0
    %1513 = vdwg.mxu0
    %v1514 = vld [vmem:[%s11] sm:$0x1]
    %v1515 = vld [vmem:[%s12] sm:$0x1]
    %1516 = vadd.xlane.f32.xlu0 %v1509
    %v1517 = vpop.xlane.xlu0 %1516
    %v1518 = vmul.f32 %v1517, 0.2
    %v1519 = vmul.f32 %v1509, %v1509
    %1520 = vadd.xlane.f32.xlu0 %v1519
    %v1521 = vpop.xlane.xlu0 %1520
    %v1522 = vmul.f32 %v1521, 0.2
    %v1523 = vmul.f32 %v1518, %v1518
    %v1524 = vsub.f32 %v1522, %v1523
    %v1525 = vmax.f32 %v1524, 0.0
    %v1526 = vadd.f32 %v1525, 1e-05
    %v1527 = vrsqrt.pop %v1526
    %v1528 = vsub.f32 %v1509, %v1518
    %v1529 = vmul.f32 %v1528, %v1527
    %v1531 = vlaneseq
    %v1532 = vshrl.u32 %v1531, 7
    %v1533 = vsub.s32 0, %v1532
    %v1534 = vrot.slane %v1514, %v1533
    %v1536 = vmul.f32 %v1529, %v1534
    %v1538 = vlaneseq
    %v1539 = vshrl.u32 %v1538, 7
    %v1540 = vsub.s32 0, %v1539
    %v1541 = vrot.slane %v1515, %v1540
    %v1543 = vadd.f32 %v1536, %v1541
    %1544 = vst [vmem:[#allocation10] sm:$0xff] %v1543
    // Predicated region
    $region70: #{tpu_custom_call.1} parent=1 // pred_check
      _
    $region71: #{tpu_custom_call.1} parent=1 // pred_check_branch
      %1546 = sbr.rel (0) target = $region73
    $region72: #{tpu_custom_call.1} parent=1 // pred_region
      %s1548 = ssub.s32 128, 128
      %1549 = vsyncadd [#allocation4], %s1548
      %s1551 = sshll.u32 [#allocation10], 4
      %s1552 = int_to_ptr.vmem [resolvable:$true] %s1551
      %1554 = dma.vmem_to_hbm [thread:$0]  %s1552, 128, %s13, [#allocation4]
    $region73: #{tpu_custom_call.1} parent=1 // pred_fallthru
      _
    // Predicated region
    $region74: #{tpu_custom_call.1} parent=1 // pred_check
      _
    $region75: #{tpu_custom_call.1} parent=1 // pred_check_branch
      %1556 = sbr.rel (0) target = $region77
    $region76: #{tpu_custom_call.1} parent=1 // pred_region
      %1557 = dma.done [#allocation4], 128
    $region77: #{tpu_custom_call.1} parent=1 // pred_fallthru
      _
    %1558 = vsyncpa [#allocation3], 1
    %1559 = vsyncpa [#allocation6], 1
    %1560 = vsyncpa [#allocation9], 1
    %1561 = vsyncpa [#allocation4], 1

// kernel: tpu_custom_call.1
$region0: #{tpu_custom_call.1}
  #allocation0 [shape = 'u32[]', space=smem, size = 0x4, offset = 0x4, fixed_abs, tag = 'smem constant byte address 0x4 - core index']
  #allocation1 [shape = 'u32[144,128]{1,0:T(1,128)}', space=vmem, size = 0x12000, scoped, tag = 'internal scratch']
  %s0 = inlined_call_operand.hbm [shape: f32[8,32], index: 0, kind: input, shape index: {}]
  %s1 = inlined_call_operand.hbm [shape: bf16[32,512], index: 1, kind: input, shape index: {}]
  %s2 = inlined_call_operand.vmem [shape: f32[1,512], index: 2, kind: input, shape index: {}]
  %s3 = inlined_call_operand.vmem [shape: f32[1,512], index: 3, kind: input, shape index: {}]
  %s4 = inlined_call_operand.vmem [shape: f32[1,512], index: 4, kind: input, shape index: {}]
  %s5 = inlined_call_operand.hbm [shape: bf16[512,384], index: 5, kind: input, shape index: {}]
  %s6 = inlined_call_operand.vmem [shape: f32[1,384], index: 6, kind: input, shape index: {}]
  %s7 = inlined_call_operand.vmem [shape: f32[1,384], index: 7, kind: input, shape index: {}]
  %s8 = inlined_call_operand.vmem [shape: f32[1,384], index: 8, kind: input, shape index: {}]
  %s9 = inlined_call_operand.hbm [shape: bf16[384,128], index: 9, kind: input, shape index: {}]
  %s10 = inlined_call_operand.vmem [shape: f32[1,128], index: 10, kind: input, shape index: {}]
  %s11 = inlined_call_operand.vmem [shape: f32[1,128], index: 11, kind: input, shape index: {}]
  %s12 = inlined_call_operand.vmem [shape: f32[1,128], index: 12, kind: input, shape index: {}]
  %s13 = inlined_call_operand.hbm [shape: f32[8,128], index: 13, kind: output, shape index: {}]
  %s14 = sld [smem:[#allocation0]]
  $region78: #{tpu_custom_call.1} parent=0
    _
  %s16 = ssub.s32 1, %s14
  %s17 = scalar_select 0, %s16, %s14
  $region1: #{tpu_custom_call.1} parent=0
    #allocation2 [shape = 'u8[4096]{0}', space=vmem, size = 0x1000, scoped, tag = 'input window, operand 0, single buffered']
    #allocation3 [shape = 's32[1]{0}', space=sflag, size = 0x4, scoped, tag = 'scoped memory for tpu_custom_call.1']
    #allocation4 [shape = 's32[1]{0}', space=sflag, size = 0x4, scoped, tag = 'scoped memory for tpu_custom_call.1']
    #allocation5 [shape = 'u8[32768]{0}', space=vmem, size = 0x8000, scoped, tag = 'input window, operand 1, single buffered']
    #allocation6 [shape = 's32[1]{0}', space=sflag, size = 0x4, scoped, tag = 'scoped memory for tpu_custom_call.1']
    #allocation7 [shape = 'u8[393216]{0}', space=vmem, size = 0x60000, scoped, tag = 'input window, operand 5, single buffered']
    #allocation8 [shape = 'u8[98304]{0}', space=vmem, size = 0x18000, scoped, tag = 'input window, operand 9, single buffered']
    #allocation9 [shape = 's32[1]{0}', space=sflag, size = 0x4, scoped, tag = 'scoped memory for tpu_custom_call.1']
    #allocation10 [shape = 'u8[4096]{0}', space=vmem, size = 0x1000, scoped, tag = 'output window, operand 0, single buffered']
    %18 = vsyncpa [#allocation3], 0
    %19 = vsyncpa [#allocation6], 0
    %20 = vsyncpa [#allocation9], 0
    %21 = vsyncpa [#allocation4], 0
    // Predicated region
    $region2: #{tpu_custom_call.1} parent=1 // pred_check
      _
    $region3: #{tpu_custom_call.1} parent=1 // pred_check_branch
      %23 = sbr.rel (0) target = $region5
    $region4: #{tpu_custom_call.1} parent=1 // pred_region
      %s25 = ssub.s32 128, 128
      %26 = vsyncadd [#allocation3], %s25
      %s28 = sshll.u32 [#allocation2], 4
      %s29 = int_to_ptr.vmem [resolvable:$true] %s28
      %31 = dma.hbm_to_vmem [thread:$0]  %s0, 128, %s29, [#allocation3]
    $region5: #{tpu_custom_call.1} parent=1 // pred_fallthru
      _
    // Predicated region
    $region6: #{tpu_custom_call.1} parent=1 // pred_check
      _
    $region7: #{tpu_custom_call.1} parent=1 // pred_check_branch
      %33 = sbr.rel (0) target = $region9
    $region8: #{tpu_custom_call.1} parent=1 // pred_region
      %s35 = ssub.s32 1024, 1024
      %36 = vsyncadd [#allocation6], %s35
      %s37 = sshll.u32 [#allocation5], 4
      %s38 = int_to_ptr.vmem [resolvable:$true] %s37
      %43 = dma.hbm_to_vmem [thread:$0]  %s1, 1024, %s38, [#allocation6], 256, 256, 16
    $region9: #{tpu_custom_call.1} parent=1 // pred_fallthru
      _
    // Predicated region
    $region10: #{tpu_custom_call.1} parent=1 // pred_check
      _
    $region11: #{tpu_custom_call.1} parent=1 // pred_check_branch
      %45 = sbr.rel (0) target = $region13
    $region12: #{tpu_custom_call.1} parent=1 // pred_region
      _
    $region13: #{tpu_custom_call.1} parent=1 // pred_fallthru
      _
    // Predicated region
    $region14: #{tpu_custom_call.1} parent=1 // pred_check
      _
    $region15: #{tpu_custom_call.1} parent=1 // pred_check_branch
      %47 = sbr.rel (0) target = $region17
    $region16: #{tpu_custom_call.1} parent=1 // pred_region
      _
    $region17: #{tpu_custom_call.1} parent=1 // pred_fallthru
      _
    // Predicated region
    $region18: #{tpu_custom_call.1} parent=1 // pred_check
      _
    $region19: #{tpu_custom_call.1} parent=1 // pred_check_branch
      %49 = sbr.rel (0) target = $region21
    $region20: #{tpu_custom_call.1} parent=1 // pred_region
      _
    $region21: #{tpu_custom_call.1} parent=1 // pred_fallthru
      _
    // Predicated region
    $region22: #{tpu_custom_call.1} parent=1 // pred_check
      _
    $region23: #{tpu_custom_call.1} parent=1 // pred_check_branch
      %51 = sbr.rel (0) target = $region25
    $region24: #{tpu_custom_call.1} parent=1 // pred_region
      %s53 = ssub.s32 12288, 12288
      %54 = vsyncadd [#allocation6], %s53
      %s55 = sshll.u32 [#allocation7], 4
      %s56 = int_to_ptr.vmem [resolvable:$true] %s55
      %61 = dma.hbm_to_vmem [thread:$0]  %s5, 12288, %s56, [#allocation6], 192, 192, 12
    $region25: #{tpu_custom_call.1} parent=1 // pred_fallthru
      _
    // Predicated region
    $region26: #{tpu_custom_call.1} parent=1 // pred_check
      _
    $region27: #{tpu_custom_call.1} parent=1 // pred_check_branch
      %63 = sbr.rel (0) target = $region29
    $region28: #{tpu_custom_call.1} parent=1 // pred_region
      _
    $region29: #{tpu_custom_call.1} parent=1 // pred_fallthru
      _
    // Predicated region
    $region30: #{tpu_custom_call.1} parent=1 // pred_check
      _
    $region31: #{tpu_custom_call.1} parent=1 // pred_check_branch
      %65 = sbr.rel (0) target = $region33
    $region32: #{tpu_custom_call.1} parent=1 // pred_region
      _
    $region33: #{tpu_custom_call.1} parent=1 // pred_fallthru
      _
    // Predicated region
    $region34: #{tpu_custom_call.1} parent=1 // pred_check
      _
    $region35: #{tpu_custom_call.1} parent=1 // pred_check_branch
      %67 = sbr.rel (0) target = $region37
    $region36: #{tpu_custom_call.1} parent=1 // pred_region
      _
    $region37: #{tpu_custom_call.1} parent=1 // pred_fallthru
      _
    // Predicated region
    $region38: #{tpu_custom_call.1} parent=1 // pred_check
      _
    $region39: #{tpu_custom_call.1} parent=1 // pred_check_branch
      %69 = sbr.rel (0) target = $region41
    $region40: #{tpu_custom_call.1} parent=1 // pred_region
      %s71 = ssub.s32 3072, 3072
      %72 = vsyncadd [#allocation9], %s71
      %s73 = sshll.u32 [#allocation8], 4
      %s74 = int_to_ptr.vmem [resolvable:$true] %s73
      %79 = dma.hbm_to_vmem [thread:$0]  %s9, 3072, %s74, [#allocation9], 64, 64, 4
    $region41: #{tpu_custom_call.1} parent=1 // pred_fallthru
      _
    // Predicated region
    $region42: #{tpu_custom_call.1} parent=1 // pred_check
      _
    $region43: #{tpu_custom_call.1} parent=1 // pred_check_branch
      %81 = sbr.rel (0) target = $region45
    $region44: #{tpu_custom_call.1} parent=1 // pred_region
      _
    $region45: #{tpu_custom_call.1} parent=1 // pred_fallthru
      _
    // Predicated region
    $region46: #{tpu_custom_call.1} parent=1 // pred_check
      _
    $region47: #{tpu_custom_call.1} parent=1 // pred_check_branch
      %83 = sbr.rel (0) target = $region49
    $region48: #{tpu_custom_call.1} parent=1 // pred_region
      _
    $region49: #{tpu_custom_call.1} parent=1 // pred_fallthru
      _
    // Predicated region
    $region50: #{tpu_custom_call.1} parent=1 // pred_check
      _
    $region51: #{tpu_custom_call.1} parent=1 // pred_check_branch
      %85 = sbr.rel (0) target = $region53
    $region52: #{tpu_custom_call.1} parent=1 // pred_region
      _
    $region53: #{tpu_custom_call.1} parent=1 // pred_fallthru
      _
    // Predicated region
    $region54: #{tpu_custom_call.1} parent=1 // pred_check
      _
    $region55: #{tpu_custom_call.1} parent=1 // pred_check_branch
      %87 = sbr.rel (0) target = $region57
    $region56: #{tpu_custom_call.1} parent=1 // pred_region
      %88 = dma.done [#allocation3], 128
    $region57: #{tpu_custom_call.1} parent=1 // pred_fallthru
      _
    // Predicated region
    $region58: #{tpu_custom_call.1} parent=1 // pred_check
      _
    $region59: #{tpu_custom_call.1} parent=1 // pred_check_branch
      %90 = sbr.rel (0) target = $region61
    $region60: #{tpu_custom_call.1} parent=1 // pred_region
      %91 = dma.done [#allocation6], 1024
    $region61: #{tpu_custom_call.1} parent=1 // pred_fallthru
      _
    // Predicated region
    $region62: #{tpu_custom_call.1} parent=1 // pred_check
      _
    $region63: #{tpu_custom_call.1} parent=1 // pred_check_branch
      %93 = sbr.rel (0) target = $region65
    $region64: #{tpu_custom_call.1} parent=1 // pred_region
      %94 = dma.done [#allocation6], 12288
    $region65: #{tpu_custom_call.1} parent=1 // pred_fallthru
      _
    // Predicated region
    $region66: #{tpu_custom_call.1} parent=1 // pred_check
      _
    $region67: #{tpu_custom_call.1} parent=1 // pred_check_branch
      %96 = sbr.rel (0) target = $region69
    $region68: #{tpu_custom_call.1} parent=1 // pred_region
      %97 = dma.done [#allocation9], 3072
    $region69: #{tpu_custom_call.1} parent=1 // pred_fallthru
      _
    %v99 = vld [vmem:[#allocation2] sm:$0xff]
    %v100 = vpack.c.bf16 %v99, %v99
    %v101 = vld [vmem:[#allocation5] sm:$0xff]
    %v102 = vld [vmem:[#allocation5 + $0x8] sm:$0xff]
    %v103 = vld [vmem:[#allocation5 + $0x10] sm:$0xff]
    %v104 = vld [vmem:[#allocation5 + $0x18] sm:$0xff]
    %v105 = vld [vmem:[#allocation5 + $0x20] sm:$0xff]
    %v106 = vld [vmem:[#allocation5 + $0x28] sm:$0xff]
    %v107 = vld [vmem:[#allocation5 + $0x30] sm:$0xff]
    %v108 = vld [vmem:[#allocation5 + $0x38] sm:$0xff]
    %v109 = vld [vmem:[%s2] sm:$0xf]
    %v111 = vlaneseq
    %v112 = vshrl.u32 %v111, 7
    %v113 = vsub.s32 0, %v112
    %v114 = vrot.slane %v109, %v113
    %v115 = vlaneseq
    %v116 = vshrl.u32 %v115, 7
    %v117 = vsub.s32 1, %v116
    %v118 = vrot.slane %v109, %v117
    %v119 = vlaneseq
    %v120 = vshrl.u32 %v119, 7
    %v121 = vsub.s32 2, %v120
    %v122 = vrot.slane %v109, %v121
    %v123 = vlaneseq
    %v124 = vshrl.u32 %v123, 7
    %v125 = vsub.s32 3, %v124
    %v126 = vrot.slane %v109, %v125
    %v139 = vunpack.c.l.b16 %v101
    %v140 = vunpack.c.h.b16 %v101
    %v141 = vunpack.c.l.b16 %v102
    %v142 = vunpack.c.h.b16 %v102
    %v143 = vunpack.c.l.b16 %v103
    %v144 = vunpack.c.h.b16 %v103
    %v145 = vunpack.c.l.b16 %v104
    %v146 = vunpack.c.h.b16 %v104
    %v147 = vunpack.c.l.b16 %v105
    %v148 = vunpack.c.h.b16 %v105
    %v149 = vunpack.c.l.b16 %v106
    %v150 = vunpack.c.h.b16 %v106
    %v151 = vunpack.c.l.b16 %v107
    %v152 = vunpack.c.h.b16 %v107
    %v153 = vunpack.c.l.b16 %v108
    %v154 = vunpack.c.h.b16 %v108
    %v155 = vpack.c.b16 %v143, %v139
    %v156 = vpack.c.b16 %v144, %v140
    %v157 = vpack.c.b16 %v145, %v141
    %v158 = vpack.c.b16 %v146, %v142
    %v159 = vpack.c.b16 %v151, %v147
    %v160 = vpack.c.b16 %v152, %v148
    %v161 = vpack.c.b16 %v153, %v149
    %v162 = vpack.c.b16 %v154, %v150
    %vm171 = vcmask 261120
    %v173 = vsel %vm171, %v100, 0
    %175 = vmatprep.subr.bf16.mxu0 %v156
    %176 = vmatpush1.bf16.msra.mxu0 %v155
    %177 = vmatprep.subr.bf16.mxu0 %v160
    %178 = vmatpush1.bf16.msra.mxu0 %v159
    %179 = vmatprep.subr.bf16.mxu0 0
    %180 = vmatpush1.bf16.msra.mxu0 0
    %181 = vmatprep.subr.bf16.mxu0 0
    %182 = vmatpush1.bf16.msra.mxu0 0
    %183 = vmatprep.subr.bf16.mxu0 0
    %184 = vmatpush1.bf16.msra.mxu0 0
    %185 = vmatprep.subr.bf16.mxu0 0
    %186 = vmatpush1.bf16.msra.mxu0 0
    %187 = vmatprep.subr.bf16.mxu0 0
    %188 = vmatpush1.bf16.msra.mxu0 0
    %189 = vmatprep.subr.bf16.mxu0 0
    %190 = vmatpush1.bf16.msra.mxu0 0
    %191 = vmatprep.subr.bf16.mxu0 0
    %192 = vmatpush1.bf16.msra.mxu0 0
    %193 = vmatprep.subr.bf16.mxu0 0
    %194 = vmatpush1.bf16.msra.mxu0 0
    %195 = vmatprep.subr.bf16.mxu0 0
    %196 = vmatpush1.bf16.msra.mxu0 0
    %197 = vmatprep.subr.bf16.mxu0 0
    %198 = vmatpush1.bf16.msra.mxu0 0
    %199 = vmatprep.subr.bf16.mxu0 0
    %200 = vmatpush1.bf16.msra.mxu0 0
    %201 = vmatprep.subr.bf16.mxu0 0
    %202 = vmatpush1.bf16.msra.mxu0 0
    %203 = vmatprep.subr.bf16.mxu0 0
    %204 = vmatpush1.bf16.msra.mxu0 0
    %205 = vmatprep.subr.bf16.mxu0 0
    %206 = vmatpush1.bf16.msra.mxu0 0
    %207 = vmatprep.mubr.bf16.mxu0 0
    %208 = vmatmul.mubr.bf16.gmra.mrb[0].mxu0 %v173
    %v209 = vpop.f32.mrb[0].mxu0
    %v210 = vadd.f32 %v114, %v209
    %v211 = vpop.f32.mrb[0].mxu0
    %v212 = vadd.f32 %v118, %v211
    %v213 = vpop.f32.mrb[0].mxu0
    %v214 = vpop.f32.mrb[0].mxu0
    %215 = vdwg.mxu0
    %216 = vmatprep.subr.bf16.mxu0 %v158
    %217 = vmatpush1.bf16.msra.mxu0 %v157
    %218 = vmatprep.subr.bf16.mxu0 %v162
    %219 = vmatpush1.bf16.msra.mxu0 %v161
    %220 = vmatprep.subr.bf16.mxu0 0
    %221 = vmatpush1.bf16.msra.mxu0 0
    %222 = vmatprep.subr.bf16.mxu0 0
    %223 = vmatpush1.bf16.msra.mxu0 0
    %224 = vmatprep.subr.bf16.mxu0 0
    %225 = vmatpush1.bf16.msra.mxu0 0
    %226 = vmatprep.subr.bf16.mxu0 0
    %227 = vmatpush1.bf16.msra.mxu0 0
    %228 = vmatprep.subr.bf16.mxu0 0
    %229 = vmatpush1.bf16.msra.mxu0 0
    %230 = vmatprep.subr.bf16.mxu0 0
    %231 = vmatpush1.bf16.msra.mxu0 0
    %232 = vmatprep.subr.bf16.mxu0 0
    %233 = vmatpush1.bf16.msra.mxu0 0
    %234 = vmatprep.subr.bf16.mxu0 0
    %235 = vmatpush1.bf16.msra.mxu0 0
    %236 = vmatprep.subr.bf16.mxu0 0
    %237 = vmatpush1.bf16.msra.mxu0 0
    %238 = vmatprep.subr.bf16.mxu0 0
    %239 = vmatpush1.bf16.msra.mxu0 0
    %240 = vmatprep.subr.bf16.mxu0 0
    %241 = vmatpush1.bf16.msra.mxu0 0
    %242 = vmatprep.subr.bf16.mxu0 0
    %243 = vmatpush1.bf16.msra.mxu0 0
    %244 = vmatprep.subr.bf16.mxu0 0
    %245 = vmatpush1.bf16.msra.mxu0 0
    %246 = vmatprep.subr.bf16.mxu0 0
    %247 = vmatpush1.bf16.msra.mxu0 0
    %248 = vmatprep.mubr.bf16.mxu0 0
    %249 = vmatmul.mubr.bf16.gmra.mrb[0].mxu0 %v173
    %v250 = vpop.f32.mrb[0].mxu0
    %v251 = vadd.f32 %v122, %v250
    %v252 = vpop.f32.mrb[0].mxu0
    %v253 = vadd.f32 %v126, %v252
    %v254 = vpop.f32.mrb[0].mxu0
    %v255 = vpop.f32.mrb[0].mxu0
    %256 = vdwg.mxu0
    %v257 = vld [vmem:[%s3] sm:$0xf]
    %v258 = vld [vmem:[%s4] sm:$0xf]
    %v259 = vadd.f32 %v210, %v212
    %v260 = vadd.f32 %v259, %v251
    %v261 = vadd.f32 %v260, %v253
    %262 = vadd.xlane.f32.xlu0 %v261
    %v263 = vpop.xlane.xlu0 %262
    %v264 = vmul.f32 %v263, 0.0025
    %v265 = vmul.f32 %v210, %v210
    %v266 = vmul.f32 %v212, %v212
    %v267 = vmul.f32 %v251, %v251
    %v268 = vmul.f32 %v253, %v253
    %v269 = vadd.f32 %v265, %v266
    %v270 = vadd.f32 %v269, %v267
    %v271 = vadd.f32 %v270, %v268
    %272 = vadd.xlane.f32.xlu0 %v271
    %v273 = vpop.xlane.xlu0 %272
    %v274 = vmul.f32 %v273, 0.0025
    %v275 = vmul.f32 %v264, %v264
    %v276 = vsub.f32 %v274, %v275
    %v277 = vmax.f32 %v276, 0.0
    %v278 = vadd.f32 %v277, 1e-05
    %v279 = vrsqrt.pop %v278
    %v280 = vsub.f32 %v210, %v264
    %v281 = vsub.f32 %v212, %v264
    %v282 = vsub.f32 %v251, %v264
    %v283 = vsub.f32 %v253, %v264
    %v284 = vmul.f32 %v280, %v279
    %v285 = vmul.f32 %v281, %v279
    %v286 = vmul.f32 %v282, %v279
    %v287 = vmul.f32 %v283, %v279
    %v289 = vlaneseq
    %v290 = vshrl.u32 %v289, 7
    %v291 = vsub.s32 0, %v290
    %v292 = vrot.slane %v257, %v291
    %v293 = vlaneseq
    %v294 = vshrl.u32 %v293, 7
    %v295 = vsub.s32 1, %v294
    %v296 = vrot.slane %v257, %v295
    %v297 = vlaneseq
    %v298 = vshrl.u32 %v297, 7
    %v299 = vsub.s32 2, %v298
    %v300 = vrot.slane %v257, %v299
    %v301 = vlaneseq
    %v302 = vshrl.u32 %v301, 7
    %v303 = vsub.s32 3, %v302
    %v304 = vrot.slane %v257, %v303
    %v309 = vmul.f32 %v284, %v292
    %v310 = vmul.f32 %v285, %v296
    %v311 = vmul.f32 %v286, %v300
    %v312 = vmul.f32 %v287, %v304
    %v314 = vlaneseq
    %v315 = vshrl.u32 %v314, 7
    %v316 = vsub.s32 0, %v315
    %v317 = vrot.slane %v258, %v316
    %v318 = vlaneseq
    %v319 = vshrl.u32 %v318, 7
    %v320 = vsub.s32 1, %v319
    %v321 = vrot.slane %v258, %v320
    %v322 = vlaneseq
    %v323 = vshrl.u32 %v322, 7
    %v324 = vsub.s32 2, %v323
    %v325 = vrot.slane %v258, %v324
    %v326 = vlaneseq
    %v327 = vshrl.u32 %v326, 7
    %v328 = vsub.s32 3, %v327
    %v329 = vrot.slane %v258, %v328
    %v334 = vadd.f32 %v309, %v317
    %v335 = vadd.f32 %v310, %v321
    %v336 = vadd.f32 %v311, %v325
    %v337 = vadd.f32 %v312, %v329
    %v338 = vmax.f32 %v334, 0.0
    %v339 = vmax.f32 %v335, 0.0
    %v340 = vmax.f32 %v336, 0.0
    %v341 = vmax.f32 %v337, 0.0
    %v342 = vpack.c.bf16 %v338, %v338
    %v343 = vpack.c.bf16 %v339, %v339
    %v344 = vpack.c.bf16 %v340, %v340
    %v345 = vpack.c.bf16 %v341, %v341
    %v346 = vld [vmem:[#allocation7] sm:$0xff]
    %v347 = vld [vmem:[#allocation7 + $0x8] sm:$0xf]
    %v348 = vld [vmem:[#allocation7 + $0xc] sm:$0xff]
    %v349 = vld [vmem:[#allocation7 + $0x14] sm:$0xf]
    %v350 = vld [vmem:[#allocation7 + $0x18] sm:$0xff]
    %v351 = vld [vmem:[#allocation7 + $0x20] sm:$0xf]
    %v352 = vld [vmem:[#allocation7 + $0x24] sm:$0xff]
    %v353 = vld [vmem:[#allocation7 + $0x2c] sm:$0xf]
    %v354 = vld [vmem:[#allocation7 + $0x30] sm:$0xff]
    %v355 = vld [vmem:[#allocation7 + $0x38] sm:$0xf]
    %v356 = vld [vmem:[#allocation7 + $0x3c] sm:$0xff]
    %v357 = vld [vmem:[#allocation7 + $0x44] sm:$0xf]
    %v358 = vld [vmem:[#allocation7 + $0x48] sm:$0xff]
    %v359 = vld [vmem:[#allocation7 + $0x50] sm:$0xf]
    %v360 = vld [vmem:[#allocation7 + $0x54] sm:$0xff]
    %v361 = vld [vmem:[#allocation7 + $0x5c] sm:$0xf]
    %v362 = vld [vmem:[#allocation7 + $0x60] sm:$0xff]
    %v363 = vld [vmem:[#allocation7 + $0x68] sm:$0xf]
    %v364 = vld [vmem:[#allocation7 + $0x6c] sm:$0xff]
    %v365 = vld [vmem:[#allocation7 + $0x74] sm:$0xf]
    %v366 = vld [vmem:[#allocation7 + $0x78] sm:$0xff]
    %v367 = vld [vmem:[#allocation7 + $0x80] sm:$0xf]
    %v368 = vld [vmem:[#allocation7 + $0x84] sm:$0xff]
    %v369 = vld [vmem:[#allocation7 + $0x8c] sm:$0xf]
    %v370 = vld [vmem:[#allocation7 + $0x90] sm:$0xff]
    %v371 = vld [vmem:[#allocation7 + $0x98] sm:$0xf]
    %v372 = vld [vmem:[#allocation7 + $0x9c] sm:$0xff]
    %v373 = vld [vmem:[#allocation7 + $0xa4] sm:$0xf]
    %v374 = vld [vmem:[#allocation7 + $0xa8] sm:$0xff]
    %v375 = vld [vmem:[#allocation7 + $0xb0] sm:$0xf]
    %v376 = vld [vmem:[#allocation7 + $0xb4] sm:$0xff]
    %v377 = vld [vmem:[#allocation7 + $0xbc] sm:$0xf]
    %v378 = vld [vmem:[#allocation7 + $0xc0] sm:$0xff]
    %v379 = vld [vmem:[#allocation7 + $0xc8] sm:$0xf]
    %v380 = vld [vmem:[#allocation7 + $0xcc] sm:$0xff]
    %v381 = vld [vmem:[#allocation7 + $0xd4] sm:$0xf]
    %v382 = vld [vmem:[#allocation7 + $0xd8] sm:$0xff]
    %v383 = vld [vmem:[#allocation7 + $0xe0] sm:$0xf]
    %v384 = vld [vmem:[#allocation7 + $0xe4] sm:$0xff]
    %v385 = vld [vmem:[#allocation7 + $0xec] sm:$0xf]
    %v386 = vld [vmem:[#allocation7 + $0xf0] sm:$0xff]
    %v387 = vld [vmem:[#allocation7 + $0xf8] sm:$0xf]
    %v388 = vld [vmem:[#allocation7 + $0xfc] sm:$0xff]
    %v389 = vld [vmem:[#allocation7 + $0x104] sm:$0xf]
    %v390 = vld [vmem:[#allocation7 + $0x108] sm:$0xff]
    %v391 = vld [vmem:[#allocation7 + $0x110] sm:$0xf]
    %v392 = vld [vmem:[#allocation7 + $0x114] sm:$0xff]
    %v393 = vld [vmem:[#allocation7 + $0x11c] sm:$0xf]
    %v394 = vld [vmem:[#allocation7 + $0x120] sm:$0xff]
    %v395 = vld [vmem:[#allocation7 + $0x128] sm:$0xf]
    %v396 = vld [vmem:[#allocation7 + $0x12c] sm:$0xff]
    %v397 = vld [vmem:[#allocation7 + $0x134] sm:$0xf]
    %v398 = vld [vmem:[#allocation7 + $0x138] sm:$0xff]
    %v399 = vld [vmem:[#allocation7 + $0x140] sm:$0xf]
    %v400 = vld [vmem:[#allocation7 + $0x144] sm:$0xff]
    %v401 = vld [vmem:[#allocation7 + $0x14c] sm:$0xf]
    %v402 = vld [vmem:[#allocation7 + $0x150] sm:$0xff]
    %v403 = vld [vmem:[#allocation7 + $0x158] sm:$0xf]
    %v404 = vld [vmem:[#allocation7 + $0x15c] sm:$0xff]
    %v405 = vld [vmem:[#allocation7 + $0x164] sm:$0xf]
    %v406 = vld [vmem:[#allocation7 + $0x168] sm:$0xff]
    %v407 = vld [vmem:[#allocation7 + $0x170] sm:$0xf]
    %v408 = vld [vmem:[#allocation7 + $0x174] sm:$0xff]
    %v409 = vld [vmem:[#allocation7 + $0x17c] sm:$0xf]
    %v410 = vld [vmem:[#allocation7 + $0x180] sm:$0xff]
    %v411 = vld [vmem:[#allocation7 + $0x188] sm:$0xf]
    %v412 = vld [vmem:[#allocation7 + $0x18c] sm:$0xff]
    %v413 = vld [vmem:[#allocation7 + $0x194] sm:$0xf]
    %v414 = vld [vmem:[#allocation7 + $0x198] sm:$0xff]
    %v415 = vld [vmem:[#allocation7 + $0x1a0] sm:$0xf]
    %v416 = vld [vmem:[#allocation7 + $0x1a4] sm:$0xff]
    %v417 = vld [vmem:[#allocation7 + $0x1ac] sm:$0xf]
    %v418 = vld [vmem:[#allocation7 + $0x1b0] sm:$0xff]
    %v419 = vld [vmem:[#allocation7 + $0x1b8] sm:$0xf]
    %v420 = vld [vmem:[#allocation7 + $0x1bc] sm:$0xff]
    %v421 = vld [vmem:[#allocation7 + $0x1c4] sm:$0xf]
    %v422 = vld [vmem:[#allocation7 + $0x1c8] sm:$0xff]
    %v423 = vld [vmem:[#allocation7 + $0x1d0] sm:$0xf]
    %v424 = vld [vmem:[#allocation7 + $0x1d4] sm:$0xff]
    %v425 = vld [vmem:[#allocation7 + $0x1dc] sm:$0xf]
    %v426 = vld [vmem:[#allocation7 + $0x1e0] sm:$0xff]
    %v427 = vld [vmem:[#allocation7 + $0x1e8] sm:$0xf]
    %v428 = vld [vmem:[#allocation7 + $0x1ec] sm:$0xff]
    %v429 = vld [vmem:[#allocation7 + $0x1f4] sm:$0xf]
    %v430 = vld [vmem:[#allocation7 + $0x1f8] sm:$0xff]
    %v431 = vld [vmem:[#allocation7 + $0x200] sm:$0xf]
    %v432 = vld [vmem:[#allocation7 + $0x204] sm:$0xff]
    %v433 = vld [vmem:[#allocation7 + $0x20c] sm:$0xf]
    %v434 = vld [vmem:[#allocation7 + $0x210] sm:$0xff]
    %v435 = vld [vmem:[#allocation7 + $0x218] sm:$0xf]
    %v436 = vld [vmem:[#allocation7 + $0x21c] sm:$0xff]
    %v437 = vld [vmem:[#allocation7 + $0x224] sm:$0xf]
    %v438 = vld [vmem:[#allocation7 + $0x228] sm:$0xff]
    %v439 = vld [vmem:[#allocation7 + $0x230] sm:$0xf]
    %v440 = vld [vmem:[#allocation7 + $0x234] sm:$0xff]
    %v441 = vld [vmem:[#allocation7 + $0x23c] sm:$0xf]
    %v442 = vld [vmem:[#allocation7 + $0x240] sm:$0xff]
    %v443 = vld [vmem:[#allocation7 + $0x248] sm:$0xf]
    %v444 = vld [vmem:[#allocation7 + $0x24c] sm:$0xff]
    %v445 = vld [vmem:[#allocation7 + $0x254] sm:$0xf]
    %v446 = vld [vmem:[#allocation7 + $0x258] sm:$0xff]
    %v447 = vld [vmem:[#allocation7 + $0x260] sm:$0xf]
    %v448 = vld [vmem:[#allocation7 + $0x264] sm:$0xff]
    %v449 = vld [vmem:[#allocation7 + $0x26c] sm:$0xf]
    %v450 = vld [vmem:[#allocation7 + $0x270] sm:$0xff]
    %v451 = vld [vmem:[#allocation7 + $0x278] sm:$0xf]
    %v452 = vld [vmem:[#allocation7 + $0x27c] sm:$0xff]
    %v453 = vld [vmem:[#allocation7 + $0x284] sm:$0xf]
    %v454 = vld [vmem:[#allocation7 + $0x288] sm:$0xff]
    %v455 = vld [vmem:[#allocation7 + $0x290] sm:$0xf]
    %v456 = vld [vmem:[#allocation7 + $0x294] sm:$0xff]
    %v457 = vld [vmem:[#allocation7 + $0x29c] sm:$0xf]
    %v458 = vld [vmem:[#allocation7 + $0x2a0] sm:$0xff]
    %v459 = vld [vmem:[#allocation7 + $0x2a8] sm:$0xf]
    %v460 = vld [vmem:[#allocation7 + $0x2ac] sm:$0xff]
    %v461 = vld [vmem:[#allocation7 + $0x2b4] sm:$0xf]
    %v462 = vld [vmem:[#allocation7 + $0x2b8] sm:$0xff]
    %v463 = vld [vmem:[#allocation7 + $0x2c0] sm:$0xf]
    %v464 = vld [vmem:[#allocation7 + $0x2c4] sm:$0xff]
    %v465 = vld [vmem:[#allocation7 + $0x2cc] sm:$0xf]
    %v466 = vld [vmem:[#allocation7 + $0x2d0] sm:$0xff]
    %v467 = vld [vmem:[#allocation7 + $0x2d8] sm:$0xf]
    %v468 = vld [vmem:[#allocation7 + $0x2dc] sm:$0xff]
    %v469 = vld [vmem:[#allocation7 + $0x2e4] sm:$0xf]
    %v470 = vld [vmem:[#allocation7 + $0x2e8] sm:$0xff]
    %v471 = vld [vmem:[#allocation7 + $0x2f0] sm:$0xf]
    %v472 = vld [vmem:[#allocation7 + $0x2f4] sm:$0xff]
    %v473 = vld [vmem:[#allocation7 + $0x2fc] sm:$0xf]
    %v474 = vld [vmem:[%s6] sm:$0x7]
    %v476 = vlaneseq
    %v477 = vshrl.u32 %v476, 7
    %v478 = vsub.s32 0, %v477
    %v479 = vrot.slane %v474, %v478
    %v480 = vlaneseq
    %v481 = vshrl.u32 %v480, 7
    %v482 = vsub.s32 1, %v481
    %v483 = vrot.slane %v474, %v482
    %v484 = vlaneseq
    %v485 = vshrl.u32 %v484, 7
    %v486 = vsub.s32 2, %v485
    %v487 = vrot.slane %v474, %v486
    %v619 = vunpack.c.l.b16 %v346
    %v620 = vunpack.c.h.b16 %v346
    %v621 = vunpack.c.l.b16 %v347
    %v622 = vunpack.c.l.b16 %v348
    %v623 = vunpack.c.h.b16 %v348
    %v624 = vunpack.c.l.b16 %v349
    %v625 = vunpack.c.l.b16 %v350
    %v626 = vunpack.c.h.b16 %v350
    %v627 = vunpack.c.l.b16 %v351
    %v628 = vunpack.c.l.b16 %v352
    %v629 = vunpack.c.h.b16 %v352
    %v630 = vunpack.c.l.b16 %v353
    %v631 = vunpack.c.l.b16 %v354
    %v632 = vunpack.c.h.b16 %v354
    %v633 = vunpack.c.l.b16 %v355
    %v634 = vunpack.c.l.b16 %v356
    %v635 = vunpack.c.h.b16 %v356
    %v636 = vunpack.c.l.b16 %v357
    %v637 = vunpack.c.l.b16 %v358
    %v638 = vunpack.c.h.b16 %v358
    %v639 = vunpack.c.l.b16 %v359
    %v640 = vunpack.c.l.b16 %v360
    %v641 = vunpack.c.h.b16 %v360
    %v642 = vunpack.c.l.b16 %v361
    %v643 = vunpack.c.l.b16 %v362
    %v644 = vunpack.c.h.b16 %v362
    %v645 = vunpack.c.l.b16 %v363
    %v646 = vunpack.c.l.b16 %v364
    %v647 = vunpack.c.h.b16 %v364
    %v648 = vunpack.c.l.b16 %v365
    %v649 = vunpack.c.l.b16 %v366
    %v650 = vunpack.c.h.b16 %v366
    %v651 = vunpack.c.l.b16 %v367
    %v652 = vunpack.c.l.b16 %v368
    %v653 = vunpack.c.h.b16 %v368
    %v654 = vunpack.c.l.b16 %v369
    %v655 = vunpack.c.l.b16 %v370
    %v656 = vunpack.c.h.b16 %v370
    %v657 = vunpack.c.l.b16 %v371
    %v658 = vunpack.c.l.b16 %v372
    %v659 = vunpack.c.h.b16 %v372
    %v660 = vunpack.c.l.b16 %v373
    %v661 = vunpack.c.l.b16 %v374
    %v662 = vunpack.c.h.b16 %v374
    %v663 = vunpack.c.l.b16 %v375
    %v664 = vunpack.c.l.b16 %v376
    %v665 = vunpack.c.h.b16 %v376
    %v666 = vunpack.c.l.b16 %v377
    %v667 = vunpack.c.l.b16 %v378
    %v668 = vunpack.c.h.b16 %v378
    %v669 = vunpack.c.l.b16 %v379
    %v670 = vunpack.c.l.b16 %v380
    %v671 = vunpack.c.h.b16 %v380
    %v672 = vunpack.c.l.b16 %v381
    %v673 = vunpack.c.l.b16 %v382
    %v674 = vunpack.c.h.b16 %v382
    %v675 = vunpack.c.l.b16 %v383
    %v676 = vunpack.c.l.b16 %v384
    %v677 = vunpack.c.h.b16 %v384
    %v678 = vunpack.c.l.b16 %v385
    %v679 = vunpack.c.l.b16 %v386
    %v680 = vunpack.c.h.b16 %v386
    %v681 = vunpack.c.l.b16 %v387
    %v682 = vunpack.c.l.b16 %v388
    %v683 = vunpack.c.h.b16 %v388
    %v684 = vunpack.c.l.b16 %v389
    %v685 = vunpack.c.l.b16 %v390
    %v686 = vunpack.c.h.b16 %v390
    %v687 = vunpack.c.l.b16 %v391
    %v688 = vunpack.c.l.b16 %v392
    %v689 = vunpack.c.h.b16 %v392
    %v690 = vunpack.c.l.b16 %v393
    %v691 = vunpack.c.l.b16 %v394
    %v692 = vunpack.c.h.b16 %v394
    %v693 = vunpack.c.l.b16 %v395
    %v694 = vunpack.c.l.b16 %v396
    %v695 = vunpack.c.h.b16 %v396
    %v696 = vunpack.c.l.b16 %v397
    %v697 = vunpack.c.l.b16 %v398
    %v698 = vunpack.c.h.b16 %v398
    %v699 = vunpack.c.l.b16 %v399
    %v700 = vunpack.c.l.b16 %v400
    %v701 = vunpack.c.h.b16 %v400
    %v702 = vunpack.c.l.b16 %v401
    %v703 = vunpack.c.l.b16 %v402
    %v704 = vunpack.c.h.b16 %v402
    %v705 = vunpack.c.l.b16 %v403
    %v706 = vunpack.c.l.b16 %v404
    %v707 = vunpack.c.h.b16 %v404
    %v708 = vunpack.c.l.b16 %v405
    %v709 = vunpack.c.l.b16 %v406
    %v710 = vunpack.c.h.b16 %v406
    %v711 = vunpack.c.l.b16 %v407
    %v712 = vunpack.c.l.b16 %v408
    %v713 = vunpack.c.h.b16 %v408
    %v714 = vunpack.c.l.b16 %v409
    %v715 = vunpack.c.l.b16 %v410
    %v716 = vunpack.c.h.b16 %v410
    %v717 = vunpack.c.l.b16 %v411
    %v718 = vunpack.c.l.b16 %v412
    %v719 = vunpack.c.h.b16 %v412
    %v720 = vunpack.c.l.b16 %v413
    %v721 = vunpack.c.l.b16 %v414
    %v722 = vunpack.c.h.b16 %v414
    %v723 = vunpack.c.l.b16 %v415
    %v724 = vunpack.c.l.b16 %v416
    %v725 = vunpack.c.h.b16 %v416
    %v726 = vunpack.c.l.b16 %v417
    %v727 = vunpack.c.l.b16 %v418
    %v728 = vunpack.c.h.b16 %v418
    %v729 = vunpack.c.l.b16 %v419
    %v730 = vunpack.c.l.b16 %v420
    %v731 = vunpack.c.h.b16 %v420
    %v732 = vunpack.c.l.b16 %v421
    %v733 = vunpack.c.l.b16 %v422
    %v734 = vunpack.c.h.b16 %v422
    %v735 = vunpack.c.l.b16 %v423
    %v736 = vunpack.c.l.b16 %v424
    %v737 = vunpack.c.h.b16 %v424
    %v738 = vunpack.c.l.b16 %v425
    %v739 = vunpack.c.l.b16 %v426
    %v740 = vunpack.c.h.b16 %v426
    %v741 = vunpack.c.l.b16 %v427
    %v742 = vunpack.c.l.b16 %v428
    %v743 = vunpack.c.h.b16 %v428
    %v744 = vunpack.c.l.b16 %v429
    %v745 = vunpack.c.l.b16 %v430
    %v746 = vunpack.c.h.b16 %v430
    %v747 = vunpack.c.l.b16 %v431
    %v748 = vunpack.c.l.b16 %v432
    %v749 = vunpack.c.h.b16 %v432
    %v750 = vunpack.c.l.b16 %v433
    %v751 = vunpack.c.l.b16 %v434
    %v752 = vunpack.c.h.b16 %v434
    %v753 = vunpack.c.l.b16 %v435
    %v754 = vunpack.c.l.b16 %v436
    %v755 = vunpack.c.h.b16 %v436
    %v756 = vunpack.c.l.b16 %v437
    %v757 = vunpack.c.l.b16 %v438
    %v758 = vunpack.c.h.b16 %v438
    %v759 = vunpack.c.l.b16 %v439
    %v760 = vunpack.c.l.b16 %v440
    %v761 = vunpack.c.h.b16 %v440
    %v762 = vunpack.c.l.b16 %v441
    %v763 = vunpack.c.l.b16 %v442
    %v764 = vunpack.c.h.b16 %v442
    %v765 = vunpack.c.l.b16 %v443
    %v766 = vunpack.c.l.b16 %v444
    %v767 = vunpack.c.h.b16 %v444
    %v768 = vunpack.c.l.b16 %v445
    %v769 = vunpack.c.l.b16 %v446
    %v770 = vunpack.c.h.b16 %v446
    %v771 = vunpack.c.l.b16 %v447
    %v772 = vunpack.c.l.b16 %v448
    %v773 = vunpack.c.h.b16 %v448
    %v774 = vunpack.c.l.b16 %v449
    %v775 = vunpack.c.l.b16 %v450
    %v776 = vunpack.c.h.b16 %v450
    %v777 = vunpack.c.l.b16 %v451
    %v778 = vunpack.c.l.b16 %v452
    %v779 = vunpack.c.h.b16 %v452
    %v780 = vunpack.c.l.b16 %v453
    %v781 = vunpack.c.l.b16 %v454
    %v782 = vunpack.c.h.b16 %v454
    %v783 = vunpack.c.l.b16 %v455
    %v784 = vunpack.c.l.b16 %v456
    %v785 = vunpack.c.h.b16 %v456
    %v786 = vunpack.c.l.b16 %v457
    %v787 = vunpack.c.l.b16 %v458
    %v788 = vunpack.c.h.b16 %v458
    %v789 = vunpack.c.l.b16 %v459
    %v790 = vunpack.c.l.b16 %v460
    %v791 = vunpack.c.h.b16 %v460
    %v792 = vunpack.c.l.b16 %v461
    %v793 = vunpack.c.l.b16 %v462
    %v794 = vunpack.c.h.b16 %v462
    %v795 = vunpack.c.l.b16 %v463
    %v796 = vunpack.c.l.b16 %v464
    %v797 = vunpack.c.h.b16 %v464
    %v798 = vunpack.c.l.b16 %v465
    %v799 = vunpack.c.l.b16 %v466
    %v800 = vunpack.c.h.b16 %v466
    %v801 = vunpack.c.l.b16 %v467
    %v802 = vunpack.c.l.b16 %v468
    %v803 = vunpack.c.h.b16 %v468
    %v804 = vunpack.c.l.b16 %v469
    %v805 = vunpack.c.l.b16 %v470
    %v806 = vunpack.c.h.b16 %v470
    %v807 = vunpack.c.l.b16 %v471
    %v808 = vunpack.c.l.b16 %v472
    %v809 = vunpack.c.h.b16 %v472
    %v810 = vunpack.c.l.b16 %v473
    %v811 = vpack.c.b16 %v622, %v619
    %v812 = vpack.c.b16 %v623, %v620
    %v813 = vpack.c.b16 %v624, %v621
    %v814 = vpack.c.b16 %v628, %v625
    %v815 = vpack.c.b16 %v629, %v626
    %v816 = vpack.c.b16 %v630, %v627
    %v817 = vpack.c.b16 %v634, %v631
    %v818 = vpack.c.b16 %v635, %v632
    %v819 = vpack.c.b16 %v636, %v633
    %v820 = vpack.c.b16 %v640, %v637
    %v821 = vpack.c.b16 %v641, %v638
    %v822 = vpack.c.b16 %v642, %v639
    %v823 = vpack.c.b16 %v646, %v643
    %v824 = vpack.c.b16 %v647, %v644
    %v825 = vpack.c.b16 %v648, %v645
    %v826 = vpack.c.b16 %v652, %v649
    %v827 = vpack.c.b16 %v653, %v650
    %v828 = vpack.c.b16 %v654, %v651
    %v829 = vpack.c.b16 %v658, %v655
    %v830 = vpack.c.b16 %v659, %v656
    %v831 = vpack.c.b16 %v660, %v657
    %v832 = vpack.c.b16 %v664, %v661
    %v833 = vpack.c.b16 %v665, %v662
    %v834 = vpack.c.b16 %v666, %v663
    %v835 = vpack.c.b16 %v670, %v667
    %v836 = vpack.c.b16 %v671, %v668
    %v837 = vpack.c.b16 %v672, %v669
    %v838 = vpack.c.b16 %v676, %v673
    %v839 = vpack.c.b16 %v677, %v674
    %v840 = vpack.c.b16 %v678, %v675
    %v841 = vpack.c.b16 %v682, %v679
    %v842 = vpack.c.b16 %v683, %v680
    %v843 = vpack.c.b16 %v684, %v681
    %v844 = vpack.c.b16 %v688, %v685
    %v845 = vpack.c.b16 %v689, %v686
    %v846 = vpack.c.b16 %v690, %v687
    %v847 = vpack.c.b16 %v694, %v691
    %v848 = vpack.c.b16 %v695, %v692
    %v849 = vpack.c.b16 %v696, %v693
    %v850 = vpack.c.b16 %v700, %v697
    %v851 = vpack.c.b16 %v701, %v698
    %v852 = vpack.c.b16 %v702, %v699
    %v853 = vpack.c.b16 %v706, %v703
    %v854 = vpack.c.b16 %v707, %v704
    %v855 = vpack.c.b16 %v708, %v705
    %v856 = vpack.c.b16 %v712, %v709
    %v857 = vpack.c.b16 %v713, %v710
    %v858 = vpack.c.b16 %v714, %v711
    %v859 = vpack.c.b16 %v718, %v715
    %v860 = vpack.c.b16 %v719, %v716
    %v861 = vpack.c.b16 %v720, %v717
    %v862 = vpack.c.b16 %v724, %v721
    %v863 = vpack.c.b16 %v725, %v722
    %v864 = vpack.c.b16 %v726, %v723
    %v865 = vpack.c.b16 %v730, %v727
    %v866 = vpack.c.b16 %v731, %v728
    %v867 = vpack.c.b16 %v732, %v729
    %v868 = vpack.c.b16 %v736, %v733
    %v869 = vpack.c.b16 %v737, %v734
    %v870 = vpack.c.b16 %v738, %v735
    %v871 = vpack.c.b16 %v742, %v739
    %v872 = vpack.c.b16 %v743, %v740
    %v873 = vpack.c.b16 %v744, %v741
    %v874 = vpack.c.b16 %v748, %v745
    %v875 = vpack.c.b16 %v749, %v746
    %v876 = vpack.c.b16 %v750, %v747
    %v877 = vpack.c.b16 %v754, %v751
    %v878 = vpack.c.b16 %v755, %v752
    %v879 = vpack.c.b16 %v756, %v753
    %v880 = vpack.c.b16 %v760, %v757
    %v881 = vpack.c.b16 %v761, %v758
    %v882 = vpack.c.b16 %v762, %v759
    %v883 = vpack.c.b16 %v766, %v763
    %v884 = vpack.c.b16 %v767, %v764
    %v885 = vpack.c.b16 %v768, %v765
    %v886 = vpack.c.b16 %v772, %v769
    %v887 = vpack.c.b16 %v773, %v770
    %v888 = vpack.c.b16 %v774, %v771
    %v889 = vpack.c.b16 %v778, %v775
    %v890 = vpack.c.b16 %v779, %v776
    %v891 = vpack.c.b16 %v780, %v777
    %v892 = vpack.c.b16 %v784, %v781
    %v893 = vpack.c.b16 %v785, %v782
    %v894 = vpack.c.b16 %v786, %v783
    %v895 = vpack.c.b16 %v790, %v787
    %v896 = vpack.c.b16 %v791, %v788
    %v897 = vpack.c.b16 %v792, %v789
    %v898 = vpack.c.b16 %v796, %v793
    %v899 = vpack.c.b16 %v797, %v794
    %v900 = vpack.c.b16 %v798, %v795
    %v901 = vpack.c.b16 %v802, %v799
    %v902 = vpack.c.b16 %v803, %v800
    %v903 = vpack.c.b16 %v804, %v801
    %v904 = vpack.c.b16 %v808, %v805
    %v905 = vpack.c.b16 %v809, %v806
    %v906 = vpack.c.b16 %v810, %v807
    %1003 = vmatprep.subr.bf16.mxu0 %v812
    %1004 = vmatpush1.bf16.msra.mxu0 %v811
    %1005 = vmatprep.subr.bf16.mxu0 %v815
    %1006 = vmatpush1.bf16.msra.mxu0 %v814
    %1007 = vmatprep.subr.bf16.mxu0 %v818
    %1008 = vmatpush1.bf16.msra.mxu0 %v817
    %1009 = vmatprep.subr.bf16.mxu0 %v821
    %1010 = vmatpush1.bf16.msra.mxu0 %v820
    %1011 = vmatprep.subr.bf16.mxu0 %v824
    %1012 = vmatpush1.bf16.msra.mxu0 %v823
    %1013 = vmatprep.subr.bf16.mxu0 %v827
    %1014 = vmatpush1.bf16.msra.mxu0 %v826
    %1015 = vmatprep.subr.bf16.mxu0 %v830
    %1016 = vmatpush1.bf16.msra.mxu0 %v829
    %1017 = vmatprep.subr.bf16.mxu0 %v833
    %1018 = vmatpush1.bf16.msra.mxu0 %v832
    %1019 = vmatprep.subr.bf16.mxu0 %v836
    %1020 = vmatpush1.bf16.msra.mxu0 %v835
    %1021 = vmatprep.subr.bf16.mxu0 %v839
    %1022 = vmatpush1.bf16.msra.mxu0 %v838
    %1023 = vmatprep.subr.bf16.mxu0 %v842
    %1024 = vmatpush1.bf16.msra.mxu0 %v841
    %1025 = vmatprep.subr.bf16.mxu0 %v845
    %1026 = vmatpush1.bf16.msra.mxu0 %v844
    %1027 = vmatprep.subr.bf16.mxu0 %v848
    %1028 = vmatpush1.bf16.msra.mxu0 %v847
    %1029 = vmatprep.subr.bf16.mxu0 %v851
    %1030 = vmatpush1.bf16.msra.mxu0 %v850
    %1031 = vmatprep.subr.bf16.mxu0 %v854
    %1032 = vmatpush1.bf16.msra.mxu0 %v853
    %1033 = vmatprep.subr.bf16.mxu0 %v857
    %1034 = vmatpush1.bf16.msra.mxu0 %v856
    %1035 = vmatprep.mubr.bf16.mxu0 %v343
    %1036 = vmatmul.mubr.bf16.gmra.mrb[0].mxu0 %v342
    %v1037 = vpop.f32.mrb[0].mxu0
    %v1038 = vadd.f32 %v479, %v1037
    %v1039 = vpop.f32.mrb[0].mxu0
    %v1040 = vadd.f32 %v483, %v1039
    %v1041 = vpop.f32.mrb[0].mxu0
    %v1042 = vpop.f32.mrb[0].mxu0
    %1043 = vdwg.mxu0
    %1044 = vmatprep.subr.bf16.mxu0 %v860
    %1045 = vmatpush1.bf16.msra.mxu0 %v859
    %1046 = vmatprep.subr.bf16.mxu0 %v863
    %1047 = vmatpush1.bf16.msra.mxu0 %v862
    %1048 = vmatprep.subr.bf16.mxu0 %v866
    %1049 = vmatpush1.bf16.msra.mxu0 %v865
    %1050 = vmatprep.subr.bf16.mxu0 %v869
    %1051 = vmatpush1.bf16.msra.mxu0 %v868
    %1052 = vmatprep.subr.bf16.mxu0 %v872
    %1053 = vmatpush1.bf16.msra.mxu0 %v871
    %1054 = vmatprep.subr.bf16.mxu0 %v875
    %1055 = vmatpush1.bf16.msra.mxu0 %v874
    %1056 = vmatprep.subr.bf16.mxu0 %v878
    %1057 = vmatpush1.bf16.msra.mxu0 %v877
    %1058 = vmatprep.subr.bf16.mxu0 %v881
    %1059 = vmatpush1.bf16.msra.mxu0 %v880
    %1060 = vmatprep.subr.bf16.mxu0 %v884
    %1061 = vmatpush1.bf16.msra.mxu0 %v883
    %1062 = vmatprep.subr.bf16.mxu0 %v887
    %1063 = vmatpush1.bf16.msra.mxu0 %v886
    %1064 = vmatprep.subr.bf16.mxu0 %v890
    %1065 = vmatpush1.bf16.msra.mxu0 %v889
    %1066 = vmatprep.subr.bf16.mxu0 %v893
    %1067 = vmatpush1.bf16.msra.mxu0 %v892
    %1068 = vmatprep.subr.bf16.mxu0 %v896
    %1069 = vmatpush1.bf16.msra.mxu0 %v895
    %1070 = vmatprep.subr.bf16.mxu0 %v899
    %1071 = vmatpush1.bf16.msra.mxu0 %v898
    %1072 = vmatprep.subr.bf16.mxu0 %v902
    %1073 = vmatpush1.bf16.msra.mxu0 %v901
    %1074 = vmatprep.subr.bf16.mxu0 %v905
    %1075 = vmatpush1.bf16.msra.mxu0 %v904
    %1076 = vmatprep.mubr.bf16.mxu0 %v345
    %1077 = vmatmul.mubr.bf16.gmra.mrb[0].mxu0 %v344
    %v1078 = vpop.f32.mrb[0].mxu0
    %v1079 = vadd.f32 %v1038, %v1078
    %v1080 = vpop.f32.mrb[0].mxu0
    %v1081 = vadd.f32 %v1040, %v1080
    %v1082 = vpop.f32.mrb[0].mxu0
    %v1083 = vpop.f32.mrb[0].mxu0
    %1084 = vdwg.mxu0
    %1085 = vmatprep.subr.bf16.mxu0 0
    %1086 = vmatpush1.bf16.msra.mxu0 %v813
    %1087 = vmatprep.subr.bf16.mxu0 0
    %1088 = vmatpush1.bf16.msra.mxu0 %v816
    %1089 = vmatprep.subr.bf16.mxu0 0
    %1090 = vmatpush1.bf16.msra.mxu0 %v819
    %1091 = vmatprep.subr.bf16.mxu0 0
    %1092 = vmatpush1.bf16.msra.mxu0 %v822
    %1093 = vmatprep.subr.bf16.mxu0 0
    %1094 = vmatpush1.bf16.msra.mxu0 %v825
    %1095 = vmatprep.subr.bf16.mxu0 0
    %1096 = vmatpush1.bf16.msra.mxu0 %v828
    %1097 = vmatprep.subr.bf16.mxu0 0
    %1098 = vmatpush1.bf16.msra.mxu0 %v831
    %1099 = vmatprep.subr.bf16.mxu0 0
    %1100 = vmatpush1.bf16.msra.mxu0 %v834
    %1101 = vmatprep.subr.bf16.mxu0 0
    %1102 = vmatpush1.bf16.msra.mxu0 %v837
    %1103 = vmatprep.subr.bf16.mxu0 0
    %1104 = vmatpush1.bf16.msra.mxu0 %v840
    %1105 = vmatprep.subr.bf16.mxu0 0
    %1106 = vmatpush1.bf16.msra.mxu0 %v843
    %1107 = vmatprep.subr.bf16.mxu0 0
    %1108 = vmatpush1.bf16.msra.mxu0 %v846
    %1109 = vmatprep.subr.bf16.mxu0 0
    %1110 = vmatpush1.bf16.msra.mxu0 %v849
    %1111 = vmatprep.subr.bf16.mxu0 0
    %1112 = vmatpush1.bf16.msra.mxu0 %v852
    %1113 = vmatprep.subr.bf16.mxu0 0
    %1114 = vmatpush1.bf16.msra.mxu0 %v855
    %1115 = vmatprep.subr.bf16.mxu0 0
    %1116 = vmatpush1.bf16.msra.mxu0 %v858
    %1117 = vmatprep.mubr.bf16.mxu0 %v343
    %1118 = vmatmul.mubr.bf16.gmra.mrb[0].mxu0 %v342
    %v1119 = vpop.f32.mrb[0].mxu0
    %v1120 = vadd.f32 %v487, %v1119
    %v1121 = vpop.f32.mrb[0].mxu0
    %v1122 = vpop.f32.mrb[0].mxu0
    %v1123 = vpop.f32.mrb[0].mxu0
    %1124 = vdwg.mxu0
    %1125 = vmatprep.subr.bf16.mxu0 0
    %1126 = vmatpush1.bf16.msra.mxu0 %v861
    %1127 = vmatprep.subr.bf16.mxu0 0
    %1128 = vmatpush1.bf16.msra.mxu0 %v864
    %1129 = vmatprep.subr.bf16.mxu0 0
    %1130 = vmatpush1.bf16.msra.mxu0 %v867
    %1131 = vmatprep.subr.bf16.mxu0 0
    %1132 = vmatpush1.bf16.msra.mxu0 %v870
    %1133 = vmatprep.subr.bf16.mxu0 0
    %1134 = vmatpush1.bf16.msra.mxu0 %v873
    %1135 = vmatprep.subr.bf16.mxu0 0
    %1136 = vmatpush1.bf16.msra.mxu0 %v876
    %1137 = vmatprep.subr.bf16.mxu0 0
    %1138 = vmatpush1.bf16.msra.mxu0 %v879
    %1139 = vmatprep.subr.bf16.mxu0 0
    %1140 = vmatpush1.bf16.msra.mxu0 %v882
    %1141 = vmatprep.subr.bf16.mxu0 0
    %1142 = vmatpush1.bf16.msra.mxu0 %v885
    %1143 = vmatprep.subr.bf16.mxu0 0
    %1144 = vmatpush1.bf16.msra.mxu0 %v888
    %1145 = vmatprep.subr.bf16.mxu0 0
    %1146 = vmatpush1.bf16.msra.mxu0 %v891
    %1147 = vmatprep.subr.bf16.mxu0 0
    %1148 = vmatpush1.bf16.msra.mxu0 %v894
    %1149 = vmatprep.subr.bf16.mxu0 0
    %1150 = vmatpush1.bf16.msra.mxu0 %v897
    %1151 = vmatprep.subr.bf16.mxu0 0
    %1152 = vmatpush1.bf16.msra.mxu0 %v900
    %1153 = vmatprep.subr.bf16.mxu0 0
    %1154 = vmatpush1.bf16.msra.mxu0 %v903
    %1155 = vmatprep.subr.bf16.mxu0 0
    %1156 = vmatpush1.bf16.msra.mxu0 %v906
    %1157 = vmatprep.mubr.bf16.mxu0 %v345
    %1158 = vmatmul.mubr.bf16.gmra.mrb[0].mxu0 %v344
    %v1159 = vpop.f32.mrb[0].mxu0
    %v1160 = vadd.f32 %v1120, %v1159
    %v1161 = vpop.f32.mrb[0].mxu0
    %v1162 = vpop.f32.mrb[0].mxu0
    %v1163 = vpop.f32.mrb[0].mxu0
    %1164 = vdwg.mxu0
    %v1165 = vld [vmem:[%s7] sm:$0x7]
    %v1166 = vld [vmem:[%s8] sm:$0x7]
    %v1167 = vadd.f32 %v1079, %v1081
    %v1168 = vadd.f32 %v1167, %v1160
    %1169 = vadd.xlane.f32.xlu0 %v1168
    %v1170 = vpop.xlane.xlu0 %1169
    %v1171 = vmul.f32 %v1170, 0.0033333334
    %v1172 = vmul.f32 %v1079, %v1079
    %v1173 = vmul.f32 %v1081, %v1081
    %v1174 = vmul.f32 %v1160, %v1160
    %v1175 = vadd.f32 %v1172, %v1173
    %v1176 = vadd.f32 %v1175, %v1174
    %1177 = vadd.xlane.f32.xlu0 %v1176
    %v1178 = vpop.xlane.xlu0 %1177
    %v1179 = vmul.f32 %v1178, 0.0033333334
    %v1180 = vmul.f32 %v1171, %v1171
    %v1181 = vsub.f32 %v1179, %v1180
    %v1182 = vmax.f32 %v1181, 0.0
    %v1183 = vadd.f32 %v1182, 1e-05
    %v1184 = vrsqrt.pop %v1183
    %v1185 = vsub.f32 %v1079, %v1171
    %v1186 = vsub.f32 %v1081, %v1171
    %v1187 = vsub.f32 %v1160, %v1171
    %v1188 = vmul.f32 %v1185, %v1184
    %v1189 = vmul.f32 %v1186, %v1184
    %v1190 = vmul.f32 %v1187, %v1184
    %v1192 = vlaneseq
    %v1193 = vshrl.u32 %v1192, 7
    %v1194 = vsub.s32 0, %v1193
    %v1195 = vrot.slane %v1165, %v1194
    %v1196 = vlaneseq
    %v1197 = vshrl.u32 %v1196, 7
    %v1198 = vsub.s32 1, %v1197
    %v1199 = vrot.slane %v1165, %v1198
    %v1200 = vlaneseq
    %v1201 = vshrl.u32 %v1200, 7
    %v1202 = vsub.s32 2, %v1201
    %v1203 = vrot.slane %v1165, %v1202
    %v1207 = vmul.f32 %v1188, %v1195
    %v1208 = vmul.f32 %v1189, %v1199
    %v1209 = vmul.f32 %v1190, %v1203
    %v1211 = vlaneseq
    %v1212 = vshrl.u32 %v1211, 7
    %v1213 = vsub.s32 0, %v1212
    %v1214 = vrot.slane %v1166, %v1213
    %v1215 = vlaneseq
    %v1216 = vshrl.u32 %v1215, 7
    %v1217 = vsub.s32 1, %v1216
    %v1218 = vrot.slane %v1166, %v1217
    %v1219 = vlaneseq
    %v1220 = vshrl.u32 %v1219, 7
    %v1221 = vsub.s32 2, %v1220
    %v1222 = vrot.slane %v1166, %v1221
    %v1226 = vadd.f32 %v1207, %v1214
    %v1227 = vadd.f32 %v1208, %v1218
    %v1228 = vadd.f32 %v1209, %v1222
    %v1229 = vmax.f32 %v1226, 0.0
    %v1230 = vmax.f32 %v1227, 0.0
    %v1231 = vmax.f32 %v1228, 0.0
    %v1232 = vpack.c.bf16 %v1229, %v1229
    %v1233 = vpack.c.bf16 %v1230, %v1230
    %v1234 = vpack.c.bf16 %v1231, %v1231
    %v1235 = vld [vmem:[#allocation8] sm:$0xf]
    %v1236 = vld [vmem:[#allocation8 + $0x4] sm:$0xf]
    %v1237 = vld [vmem:[#allocation8 + $0x8] sm:$0xf]
    %v1238 = vld [vmem:[#allocation8 + $0xc] sm:$0xf]
    %v1239 = vld [vmem:[#allocation8 + $0x10] sm:$0xf]
    %v1240 = vld [vmem:[#allocation8 + $0x14] sm:$0xf]
    %v1241 = vld [vmem:[#allocation8 + $0x18] sm:$0xf]
    %v1242 = vld [vmem:[#allocation8 + $0x1c] sm:$0xf]
    %v1243 = vld [vmem:[#allocation8 + $0x20] sm:$0xf]
    %v1244 = vld [vmem:[#allocation8 + $0x24] sm:$0xf]
    %v1245 = vld [vmem:[#allocation8 + $0x28] sm:$0xf]
    %v1246 = vld [vmem:[#allocation8 + $0x2c] sm:$0xf]
    %v1247 = vld [vmem:[#allocation8 + $0x30] sm:$0xf]
    %v1248 = vld [vmem:[#allocation8 + $0x34] sm:$0xf]
    %v1249 = vld [vmem:[#allocation8 + $0x38] sm:$0xf]
    %v1250 = vld [vmem:[#allocation8 + $0x3c] sm:$0xf]
    %v1251 = vld [vmem:[#allocation8 + $0x40] sm:$0xf]
    %v1252 = vld [vmem:[#allocation8 + $0x44] sm:$0xf]
    %v1253 = vld [vmem:[#allocation8 + $0x48] sm:$0xf]
    %v1254 = vld [vmem:[#allocation8 + $0x4c] sm:$0xf]
    %v1255 = vld [vmem:[#allocation8 + $0x50] sm:$0xf]
    %v1256 = vld [vmem:[#allocation8 + $0x54] sm:$0xf]
    %v1257 = vld [vmem:[#allocation8 + $0x58] sm:$0xf]
    %v1258 = vld [vmem:[#allocation8 + $0x5c] sm:$0xf]
    %v1259 = vld [vmem:[#allocation8 + $0x60] sm:$0xf]
    %v1260 = vld [vmem:[#allocation8 + $0x64] sm:$0xf]
    %v1261 = vld [vmem:[#allocation8 + $0x68] sm:$0xf]
    %v1262 = vld [vmem:[#allocation8 + $0x6c] sm:$0xf]
    %v1263 = vld [vmem:[#allocation8 + $0x70] sm:$0xf]
    %v1264 = vld [vmem:[#allocation8 + $0x74] sm:$0xf]
    %v1265 = vld [vmem:[#allocation8 + $0x78] sm:$0xf]
    %v1266 = vld [vmem:[#allocation8 + $0x7c] sm:$0xf]
    %v1267 = vld [vmem:[#allocation8 + $0x80] sm:$0xf]
    %v1268 = vld [vmem:[#allocation8 + $0x84] sm:$0xf]
    %v1269 = vld [vmem:[#allocation8 + $0x88] sm:$0xf]
    %v1270 = vld [vmem:[#allocation8 + $0x8c] sm:$0xf]
    %v1271 = vld [vmem:[#allocation8 + $0x90] sm:$0xf]
    %v1272 = vld [vmem:[#allocation8 + $0x94] sm:$0xf]
    %v1273 = vld [vmem:[#allocation8 + $0x98] sm:$0xf]
    %v1274 = vld [vmem:[#allocation8 + $0x9c] sm:$0xf]
    %v1275 = vld [vmem:[#allocation8 + $0xa0] sm:$0xf]
    %v1276 = vld [vmem:[#allocation8 + $0xa4] sm:$0xf]
    %v1277 = vld [vmem:[#allocation8 + $0xa8] sm:$0xf]
    %v1278 = vld [vmem:[#allocation8 + $0xac] sm:$0xf]
    %v1279 = vld [vmem:[#allocation8 + $0xb0] sm:$0xf]
    %v1280 = vld [vmem:[#allocation8 + $0xb4] sm:$0xf]
    %v1281 = vld [vmem:[#allocation8 + $0xb8] sm:$0xf]
    %v1282 = vld [vmem:[#allocation8 + $0xbc] sm:$0xf]
    %v1283 = vld [vmem:[%s10] sm:$0x1]
    %v1285 = vlaneseq
    %v1286 = vshrl.u32 %v1285, 7
    %v1287 = vsub.s32 0, %v1286
    %v1288 = vrot.slane %v1283, %v1287
    %v1338 = vunpack.c.l.b16 %v1235
    %v1339 = vunpack.c.l.b16 %v1236
    %v1340 = vunpack.c.l.b16 %v1237
    %v1341 = vunpack.c.l.b16 %v1238
    %v1342 = vunpack.c.l.b16 %v1239
    %v1343 = vunpack.c.l.b16 %v1240
    %v1344 = vunpack.c.l.b16 %v1241
    %v1345 = vunpack.c.l.b16 %v1242
    %v1346 = vunpack.c.l.b16 %v1243
    %v1347 = vunpack.c.l.b16 %v1244
    %v1348 = vunpack.c.l.b16 %v1245
    %v1349 = vunpack.c.l.b16 %v1246
    %v1350 = vunpack.c.l.b16 %v1247
    %v1351 = vunpack.c.l.b16 %v1248
    %v1352 = vunpack.c.l.b16 %v1249
    %v1353 = vunpack.c.l.b16 %v1250
    %v1354 = vunpack.c.l.b16 %v1251
    %v1355 = vunpack.c.l.b16 %v1252
    %v1356 = vunpack.c.l.b16 %v1253
    %v1357 = vunpack.c.l.b16 %v1254
    %v1358 = vunpack.c.l.b16 %v1255
    %v1359 = vunpack.c.l.b16 %v1256
    %v1360 = vunpack.c.l.b16 %v1257
    %v1361 = vunpack.c.l.b16 %v1258
    %v1362 = vunpack.c.l.b16 %v1259
    %v1363 = vunpack.c.l.b16 %v1260
    %v1364 = vunpack.c.l.b16 %v1261
    %v1365 = vunpack.c.l.b16 %v1262
    %v1366 = vunpack.c.l.b16 %v1263
    %v1367 = vunpack.c.l.b16 %v1264
    %v1368 = vunpack.c.l.b16 %v1265
    %v1369 = vunpack.c.l.b16 %v1266
    %v1370 = vunpack.c.l.b16 %v1267
    %v1371 = vunpack.c.l.b16 %v1268
    %v1372 = vunpack.c.l.b16 %v1269
    %v1373 = vunpack.c.l.b16 %v1270
    %v1374 = vunpack.c.l.b16 %v1271
    %v1375 = vunpack.c.l.b16 %v1272
    %v1376 = vunpack.c.l.b16 %v1273
    %v1377 = vunpack.c.l.b16 %v1274
    %v1378 = vunpack.c.l.b16 %v1275
    %v1379 = vunpack.c.l.b16 %v1276
    %v1380 = vunpack.c.l.b16 %v1277
    %v1381 = vunpack.c.l.b16 %v1278
    %v1382 = vunpack.c.l.b16 %v1279
    %v1383 = vunpack.c.l.b16 %v1280
    %v1384 = vunpack.c.l.b16 %v1281
    %v1385 = vunpack.c.l.b16 %v1282
    %v1386 = vpack.c.b16 %v1339, %v1338
    %v1387 = vpack.c.b16 %v1341, %v1340
    %v1388 = vpack.c.b16 %v1343, %v1342
    %v1389 = vpack.c.b16 %v1345, %v1344
    %v1390 = vpack.c.b16 %v1347, %v1346
    %v1391 = vpack.c.b16 %v1349, %v1348
    %v1392 = vpack.c.b16 %v1351, %v1350
    %v1393 = vpack.c.b16 %v1353, %v1352
    %v1394 = vpack.c.b16 %v1355, %v1354
    %v1395 = vpack.c.b16 %v1357, %v1356
    %v1396 = vpack.c.b16 %v1359, %v1358
    %v1397 = vpack.c.b16 %v1361, %v1360
    %v1398 = vpack.c.b16 %v1363, %v1362
    %v1399 = vpack.c.b16 %v1365, %v1364
    %v1400 = vpack.c.b16 %v1367, %v1366
    %v1401 = vpack.c.b16 %v1369, %v1368
    %v1402 = vpack.c.b16 %v1371, %v1370
    %v1403 = vpack.c.b16 %v1373, %v1372
    %v1404 = vpack.c.b16 %v1375, %v1374
    %v1405 = vpack.c.b16 %v1377, %v1376
    %v1406 = vpack.c.b16 %v1379, %v1378
    %v1407 = vpack.c.b16 %v1381, %v1380
    %v1408 = vpack.c.b16 %v1383, %v1382
    %v1409 = vpack.c.b16 %v1385, %v1384
    %1434 = vmatprep.subr.bf16.mxu0 0
    %1435 = vmatpush1.bf16.msra.mxu0 %v1386
    %1436 = vmatprep.subr.bf16.mxu0 0
    %1437 = vmatpush1.bf16.msra.mxu0 %v1387
    %1438 = vmatprep.subr.bf16.mxu0 0
    %1439 = vmatpush1.bf16.msra.mxu0 %v1388
    %1440 = vmatprep.subr.bf16.mxu0 0
    %1441 = vmatpush1.bf16.msra.mxu0 %v1389
    %1442 = vmatprep.subr.bf16.mxu0 0
    %1443 = vmatpush1.bf16.msra.mxu0 %v1390
    %1444 = vmatprep.subr.bf16.mxu0 0
    %1445 = vmatpush1.bf16.msra.mxu0 %v1391
    %1446 = vmatprep.subr.bf16.mxu0 0
    %1447 = vmatpush1.bf16.msra.mxu0 %v1392
    %1448 = vmatprep.subr.bf16.mxu0 0
    %1449 = vmatpush1.bf16.msra.mxu0 %v1393
    %1450 = vmatprep.subr.bf16.mxu0 0
    %1451 = vmatpush1.bf16.msra.mxu0 %v1394
    %1452 = vmatprep.subr.bf16.mxu0 0
    %1453 = vmatpush1.bf16.msra.mxu0 %v1395
    %1454 = vmatprep.subr.bf16.mxu0 0
    %1455 = vmatpush1.bf16.msra.mxu0 %v1396
    %1456 = vmatprep.subr.bf16.mxu0 0
    %1457 = vmatpush1.bf16.msra.mxu0 %v1397
    %1458 = vmatprep.subr.bf16.mxu0 0
    %1459 = vmatpush1.bf16.msra.mxu0 %v1398
    %1460 = vmatprep.subr.bf16.mxu0 0
    %1461 = vmatpush1.bf16.msra.mxu0 %v1399
    %1462 = vmatprep.subr.bf16.mxu0 0
    %1463 = vmatpush1.bf16.msra.mxu0 %v1400
    %1464 = vmatprep.subr.bf16.mxu0 0
    %1465 = vmatpush1.bf16.msra.mxu0 %v1401
    %1466 = vmatprep.mubr.bf16.mxu0 %v1233
    %1467 = vmatmul.mubr.bf16.gmra.mrb[0].mxu0 %v1232
    %v1468 = vpop.f32.mrb[0].mxu0
    %v1469 = vadd.f32 %v1288, %v1468
    %v1470 = vpop.f32.mrb[0].mxu0
    %v1471 = vpop.f32.mrb[0].mxu0
    %v1472 = vpop.f32.mrb[0].mxu0
    %1473 = vdwg.mxu0
    %1474 = vmatprep.subr.bf16.mxu0 0
    %1475 = vmatpush1.bf16.msra.mxu0 %v1402
    %1476 = vmatprep.subr.bf16.mxu0 0
    %1477 = vmatpush1.bf16.msra.mxu0 %v1403
    %1478 = vmatprep.subr.bf16.mxu0 0
    %1479 = vmatpush1.bf16.msra.mxu0 %v1404
    %1480 = vmatprep.subr.bf16.mxu0 0
    %1481 = vmatpush1.bf16.msra.mxu0 %v1405
    %1482 = vmatprep.subr.bf16.mxu0 0
    %1483 = vmatpush1.bf16.msra.mxu0 %v1406
    %1484 = vmatprep.subr.bf16.mxu0 0
    %1485 = vmatpush1.bf16.msra.mxu0 %v1407
    %1486 = vmatprep.subr.bf16.mxu0 0
    %1487 = vmatpush1.bf16.msra.mxu0 %v1408
    %1488 = vmatprep.subr.bf16.mxu0 0
    %1489 = vmatpush1.bf16.msra.mxu0 %v1409
    %1490 = vmatprep.subr.bf16.mxu0 0
    %1491 = vmatpush1.bf16.msra.mxu0 0
    %1492 = vmatprep.subr.bf16.mxu0 0
    %1493 = vmatpush1.bf16.msra.mxu0 0
    %1494 = vmatprep.subr.bf16.mxu0 0
    %1495 = vmatpush1.bf16.msra.mxu0 0
    %1496 = vmatprep.subr.bf16.mxu0 0
    %1497 = vmatpush1.bf16.msra.mxu0 0
    %1498 = vmatprep.subr.bf16.mxu0 0
    %1499 = vmatpush1.bf16.msra.mxu0 0
    %1500 = vmatprep.subr.bf16.mxu0 0
    %1501 = vmatpush1.bf16.msra.mxu0 0
    %1502 = vmatprep.subr.bf16.mxu0 0
    %1503 = vmatpush1.bf16.msra.mxu0 0
    %1504 = vmatprep.subr.bf16.mxu0 0
    %1505 = vmatpush1.bf16.msra.mxu0 0
    %1506 = vmatprep.mubr.bf16.mxu0 0
    %1507 = vmatmul.mubr.bf16.gmra.mrb[0].mxu0 %v1234
    %v1508 = vpop.f32.mrb[0].mxu0
    %v1509 = vadd.f32 %v1469, %v1508
    %v1510 = vpop.f32.mrb[0].mxu0
    %v1511 = vpop.f32.mrb[0].mxu0
    %v1512 = vpop.f32.mrb[0].mxu0
    %1513 = vdwg.mxu0
    %v1514 = vld [vmem:[%s11] sm:$0x1]
    %v1515 = vld [vmem:[%s12] sm:$0x1]
    %1516 = vadd.xlane.f32.xlu0 %v1509
    %v1517 = vpop.xlane.xlu0 %1516
    %v1518 = vmul.f32 %v1517, 0.2
    %v1519 = vmul.f32 %v1509, %v1509
    %1520 = vadd.xlane.f32.xlu0 %v1519
    %v1521 = vpop.xlane.xlu0 %1520
    %v1522 = vmul.f32 %v1521, 0.2
    %v1523 = vmul.f32 %v1518, %v1518
    %v1524 = vsub.f32 %v1522, %v1523
    %v1525 = vmax.f32 %v1524, 0.0
    %v1526 = vadd.f32 %v1525, 1e-05
    %v1527 = vrsqrt.pop %v1526
    %v1528 = vsub.f32 %v1509, %v1518
    %v1529 = vmul.f32 %v1528, %v1527
    %v1531 = vlaneseq
    %v1532 = vshrl.u32 %v1531, 7
    %v1533 = vsub.s32 0, %v1532
    %v1534 = vrot.slane %v1514, %v1533
    %v1536 = vmul.f32 %v1529, %v1534
    %v1538 = vlaneseq
    %v1539 = vshrl.u32 %v1538, 7
    %v1540 = vsub.s32 0, %v1539
    %v1541 = vrot.slane %v1515, %v1540
    %v1543 = vadd.f32 %v1536, %v1541
    %1544 = vst [vmem:[#allocation10] sm:$0xff] %v1543
    // Predicated region
    $region70: #{tpu_custom_call.1} parent=1 // pred_check
      _
    $region71: #{tpu_custom_call.1} parent=1 // pred_check_branch
      %1546 = sbr.rel (0) target = $region73
    $region72: #{tpu_custom_call.1} parent=1 // pred_region
      %s1548 = ssub.s32 128, 128
      %1549 = vsyncadd [#allocation4], %s1548
      %s1551 = sshll.u32 [#allocation10], 4
      %s1552 = int_to_ptr.vmem [resolvable:$true] %s1551
      %1554 = dma.vmem_to_hbm [thread:$0]  %s1552, 128, %s13, [#allocation4]
    $region73: #{tpu_custom_call.1} parent=1 // pred_fallthru
      _
    // Predicated region
    $region74: #{tpu_custom_call.1} parent=1 // pred_check
      _
    $region75: #{tpu_custom_call.1} parent=1 // pred_check_branch
      %1556 = sbr.rel (0) target = $region77
    $region76: #{tpu_custom_call.1} parent=1 // pred_region
      %1557 = dma.done [#allocation4], 128
    $region77: #{tpu_custom_call.1} parent=1 // pred_fallthru
      _
    %1558 = vsyncpa [#allocation3], 1
    %1559 = vsyncpa [#allocation6], 1
    %1560 = vsyncpa [#allocation9], 1
    %1561 = vsyncpa [#allocation4], 1

</llo_original>
